<compile_context>
chip_gen: v7x
topology: tpu7x:2x2x1
jax: 0.10.0
libtpu: 0.0.40
codegen_flags: <defaults>
</compile_context>

<pallas_src>
import jax
import jax.numpy as jnp
from jax import lax
from jax.experimental import pallas as pl
from jax.experimental.pallas import tpu as pltpu

D_MODEL = 50
NHEAD = 10
HEAD_DIM = D_MODEL // NHEAD      # 5
DIM_FF = 2048
LN_EPS = 1e-5
EP = 128                         # d_model padded up to one full lane group


def _layernorm_masked(x, w, b, valid, eps=LN_EPS):
    # x's padded lanes (>= D_MODEL) are zero, so a full-width sum equals the sum
    # over the 50 valid lanes; variance uses the re-masked centered value.
    mu = jnp.sum(x, axis=-1, keepdims=True) * (1.0 / D_MODEL)
    xc = (x - mu) * valid
    var = jnp.sum(xc * xc, axis=-1, keepdims=True) * (1.0 / D_MODEL)
    # w / b padded lanes are zero, so the output stays zero in padded lanes.
    return xc * lax.rsqrt(var + eps) * w + b


def encoder_layer_kernel(x_ref, wqkv_ref, bqkv_ref, wo_ref, w1_ref, b1_ref,
                         w2_ref, vecs_ref, hmask_ref, o_ref):
    bb, L, _ = x_ref.shape
    m = bb * L
    x = x_ref[...].reshape(m, EP)                       # (M, 128), M = bb*L

    vecs = vecs_ref[...]                                # (8, 128) packed vectors
    bo, b2 = vecs[0:1], vecs[1:2]
    ln1w, ln1b = vecs[2:3], vecs[3:4]
    ln2w, ln2b = vecs[4:5], vecs[5:6]
    valid = (lax.broadcasted_iota(jnp.int32, (1, EP), 1) < D_MODEL
             ).astype(jnp.float32)

    # ---------------- fused QKV projection (one MXU matmul, N=384) ----------------
    qkv = jnp.dot(x, wqkv_ref[...], preferred_element_type=jnp.float32) + bqkv_ref[...]
    q = qkv[:, 0:EP] * (HEAD_DIM ** -0.5)               # PyTorch MHA scaling on q
    k = qkv[:, EP:2 * EP]
    v = qkv[:, 2 * EP:3 * EP]

    # ---------------- batched masked multi-head self-attention ----------------
    # Head h occupies contiguous lanes [h*HEAD_DIM, (h+1)*HEAD_DIM).  Masked
    # full-width contractions are equivalent to head-wise attention, and per-head
    # outputs live in disjoint lane ranges so the head-sum equals the concat.
    q3 = q.reshape(bb, L, EP)
    k3 = k.reshape(bb, L, EP)
    v3 = v.reshape(bb, L, EP)
    hmask = hmask_ref[...]                              # (NHEAD, 1, 1, 128)

    qh = (q3[None] * hmask).reshape(NHEAD * bb, L, EP)
    vh = (v3[None] * hmask).reshape(NHEAD * bb, L, EP)
    # k does not need masking: q is already masked, so only head-h lanes of k
    # contribute to the score contraction.
    kh = jnp.broadcast_to(k3[None], (NHEAD, bb, L, EP)).reshape(NHEAD * bb, L, EP)

    s = jnp.einsum('bqd,bkd->bqk', qh, kh, preferred_element_type=jnp.float32)
    s = s - jnp.max(s, axis=-1, keepdims=True)
    p = jnp.exp(s)
    p = p * pl.reciprocal(jnp.sum(p, axis=-1, keepdims=True), approx=True)
    oh = jnp.einsum('bqk,bkd->bqd', p, vh, preferred_element_type=jnp.float32)

    attn = jnp.sum(oh.reshape(NHEAD, bb, L, EP), axis=0).reshape(m, EP)
    attn = jnp.dot(attn, wo_ref[...], preferred_element_type=jnp.float32) + bo

    # TODO(synk): dropout layers are identity here (inference / eval semantics).
    y = _layernorm_masked(x + attn, ln1w, ln1b, valid)

    # ---------------- feed-forward (Linear -> ReLU -> Linear) ----------------
    h1 = jnp.dot(y, w1_ref[...], preferred_element_type=jnp.float32) + b1_ref[...]
    h1 = jnp.maximum(h1, 0.0)
    ff = jnp.dot(h1, w2_ref[...], preferred_element_type=jnp.float32) + b2

    z = _layernorm_masked(y + ff, ln2w, ln2b, valid)
    o_ref[...] = z.reshape(bb, L, EP).astype(o_ref.dtype)


def transformer_encoder_layer(src, p, block_batch=None):
    """src: (L, N, E) float32, PyTorch seq-first convention. Returns (L, N, E)."""
    L, N, E = src.shape
    assert E == D_MODEL
    x = jnp.transpose(src, (1, 0, 2)).astype(jnp.float32)       # (N, L, E)
    x = jnp.pad(x, ((0, 0), (0, 0), (0, EP - E)))               # lane-dense (.., 128)

    # Per-step batch block: flatten bb*L rows into the matmul M dim (target ~256
    # rows) while keeping >= 2 grid steps when possible (v7x has 2 TensorCores).
    if block_batch is None:
        bb = max(1, min(N, 256 // max(L, 1)))
        if N >= 2:
            bb = min(bb, (N + 1) // 2)
    else:
        bb = block_batch
    n_blocks = pl.cdiv(N, bb)
    n_pad = n_blocks * bb
    if n_pad > N:
        x = jnp.pad(x, ((0, n_pad - N), (0, 0), (0, 0)))

    # --- zero-padded, lane-aligned weight prep (done once, outside the kernel) ---
    f32 = jnp.float32
    w_qkv = jnp.zeros((EP, 3 * EP), f32)
    w_qkv = w_qkv.at[:E, 0:E].set(p["wq"].T)
    w_qkv = w_qkv.at[:E, EP:EP + E].set(p["wk"].T)
    w_qkv = w_qkv.at[:E, 2 * EP:2 * EP + E].set(p["wv"].T)
    b_qkv = jnp.zeros((1, 3 * EP), f32)
    b_qkv = b_qkv.at[0, 0:E].set(p["bq"])
    b_qkv = b_qkv.at[0, EP:EP + E].set(p["bk"])
    b_qkv = b_qkv.at[0, 2 * EP:2 * EP + E].set(p["bv"])

    wo_p = jnp.zeros((EP, EP), f32).at[:E, :E].set(p["wo"].T)
    w1_p = jnp.zeros((EP, DIM_FF), f32).at[:E, :].set(p["w1"].T)
    w2_p = jnp.zeros((DIM_FF, EP), f32).at[:, :E].set(p["w2"].T)
    b1 = p["b1"].reshape(1, DIM_FF).astype(f32)

    # Pack the six (E,) vectors into one (8, 128) input (single DMA stream).
    vecs = jnp.zeros((8, EP), f32)
    for row, name in enumerate(("bo", "b2", "ln1w", "ln1b", "ln2w", "ln2b")):
        vecs = vecs.at[row, :E].set(p[name])

    # Precomputed head-selection masks (NHEAD, 1, 1, 128).
    lane = jnp.arange(EP)
    head = jnp.arange(NHEAD)[:, None]
    hmask = ((lane[None, :] >= head * HEAD_DIM) &
             (lane[None, :] < (head + 1) * HEAD_DIM)).astype(f32)
    hmask = hmask.reshape(NHEAD, 1, 1, EP)

    def full(shape):
        return pl.BlockSpec(shape, lambda b, _s=shape: (0,) * len(_s))

    grid_spec = pltpu.PrefetchScalarGridSpec(
        num_scalar_prefetch=0,
        grid=(n_blocks,),
        in_specs=[
            pl.BlockSpec((bb, L, EP), lambda b: (b, 0, 0)),         # x
            full((EP, 3 * EP)), full((1, 3 * EP)),                  # fused qkv W, b
            full((EP, EP)),                                         # wo
            full((EP, DIM_FF)), full((1, DIM_FF)),                  # w1, b1
            full((DIM_FF, EP)),                                     # w2
            full((8, EP)),                                          # packed vectors
            full((NHEAD, 1, 1, EP)),                                # head masks
        ],
        out_specs=pl.BlockSpec((bb, L, EP), lambda b: (b, 0, 0)),
    )

    out = pl.pallas_call(
        encoder_layer_kernel,
        out_shape=jax.ShapeDtypeStruct((n_pad, L, EP), jnp.float32),
        grid_spec=grid_spec,
        compiler_params=pltpu.CompilerParams(
            dimension_semantics=("parallel",)),
    )(x, w_qkv, b_qkv, wo_p, w1_p, b1, w2_p, vecs, hmask)

    return jnp.transpose(out[:N, :, :E], (1, 0, 2))                 # back to (L, N, E)


# ---------------- deterministic parameter init (PyTorch shapes) ----------------
def init_params(key):
    ks = jax.random.split(key, 16)
    n = lambda k, shape, s=0.1: s * jax.random.normal(k, shape, jnp.float32)
    return dict(
        wq=n(ks[0], (D_MODEL, D_MODEL)), bq=n(ks[1], (D_MODEL,)),
        wk=n(ks[2], (D_MODEL, D_MODEL)), bk=n(ks[3], (D_MODEL,)),
        wv=n(ks[4], (D_MODEL, D_MODEL)), bv=n(ks[5], (D_MODEL,)),
        wo=n(ks[6], (D_MODEL, D_MODEL)), bo=n(ks[7], (D_MODEL,)),
        w1=n(ks[8], (DIM_FF, D_MODEL)),  b1=n(ks[9], (DIM_FF,)),
        w2=n(ks[10], (D_MODEL, DIM_FF)), b2=n(ks[11], (D_MODEL,)),
        ln1w=1.0 + n(ks[12], (D_MODEL,)), ln1b=n(ks[13], (D_MODEL,)),
        ln2w=1.0 + n(ks[14], (D_MODEL,)), ln2b=n(ks[15], (D_MODEL,)),
    )


# ---------------- plain-JAX reference (mirrors PyTorch semantics) ----------------
def ref_forward(src, p):
    L, N, E = src.shape
    scaling = HEAD_DIM ** -0.5
    q = (src @ p["wq"].T + p["bq"]) * scaling
    k = src @ p["wk"].T + p["bk"]
    v = src @ p["wv"].T + p["bv"]
    split = lambda t: t.reshape(L, N * NHEAD, HEAD_DIM).transpose(1, 0, 2)
    qh, kh, vh = split(q), split(k), split(v)
    s = jnp.einsum("bld,bmd->blm", qh, kh)
    a = jax.nn.softmax(s, axis=-1)
    o = jnp.einsum("blm,bmd->bld", a, vh)
    o = o.transpose(1, 0, 2).reshape(L, N, E)
    attn = o @ p["wo"].T + p["bo"]

    def ln(x, w, b):
        mu = x.mean(-1, keepdims=True)
        var = ((x - mu) ** 2).mean(-1, keepdims=True)
        return (x - mu) / jnp.sqrt(var + LN_EPS) * w + b

    x = ln(src + attn, p["ln1w"], p["ln1b"])
    ff = jax.nn.relu(x @ p["w1"].T + p["b1"]) @ p["w2"].T + p["b2"]
    return ln(x + ff, p["ln2w"], p["ln2b"])


if __name__ == "__main__":
    key = jax.random.PRNGKey(0)
    pkey, xkey = jax.random.split(key)
    params = init_params(pkey)

    L, N = 8, 2                                            # seq=8, batch=2, d_model=50
    src = jax.random.normal(xkey, (L, N, D_MODEL), jnp.float32)

    out = transformer_encoder_layer(src, params)
    out = jax.block_until_ready(out)

    ref = ref_forward(src, params)
    assert out.shape == (L, N, D_MODEL)
    max_err = float(jnp.max(jnp.abs(out - ref)))
    assert max_err < 5e-2, f"mismatch vs reference: max |err| = {max_err}"
    print("KERNEL_OK")
</pallas_src>

<mosaic_0001>
module attributes {stable_mosaic.version = 11 : i64} {
  func.func @encoder_layer_kernel(%arg0: i32, %arg1: memref<1x8x128xf32, #tpu.memory_space<vmem>>, %arg2: memref<128x384xf32, #tpu.memory_space<vmem>>, %arg3: memref<1x384xf32, #tpu.memory_space<vmem>>, %arg4: memref<128x128xf32, #tpu.memory_space<vmem>>, %arg5: memref<128x2048xf32, #tpu.memory_space<vmem>>, %arg6: memref<1x2048xf32, #tpu.memory_space<vmem>>, %arg7: memref<2048x128xf32, #tpu.memory_space<vmem>>, %arg8: memref<8x128xf32, #tpu.memory_space<vmem>>, %arg9: memref<10x1x1x128xf32, #tpu.memory_space<vmem>>, %arg10: memref<1x8x128xf32, #tpu.memory_space<vmem>>) attributes {dimension_semantics = [#tpu.dimension_semantics<parallel>], iteration_bounds = array<i64: 2>, scalar_prefetch = 0 : i64, scratch_operands = 0 : i64, tpu.core_type = #tpu.core_type<tc>, window_params = [{transform_indices = @transform_0, window_bounds = array<i64: 1, 8, 128>}, {pipeline_mode = #tpu.pipeline_mode<synchronous>, transform_indices = @transform_1, window_bounds = array<i64: 128, 384>}, {pipeline_mode = #tpu.pipeline_mode<synchronous>, transform_indices = @transform_2, window_bounds = array<i64: 1, 384>}, {pipeline_mode = #tpu.pipeline_mode<synchronous>, transform_indices = @transform_3, window_bounds = array<i64: 128, 128>}, {pipeline_mode = #tpu.pipeline_mode<synchronous>, transform_indices = @transform_4, window_bounds = array<i64: 128, 2048>}, {pipeline_mode = #tpu.pipeline_mode<synchronous>, transform_indices = @transform_5, window_bounds = array<i64: 1, 2048>}, {pipeline_mode = #tpu.pipeline_mode<synchronous>, transform_indices = @transform_6, window_bounds = array<i64: 2048, 128>}, {pipeline_mode = #tpu.pipeline_mode<synchronous>, transform_indices = @transform_7, window_bounds = array<i64: 8, 128>}, {pipeline_mode = #tpu.pipeline_mode<synchronous>, transform_indices = @transform_8, window_bounds = array<i64: 10, 1, 1, 128>}, {transform_indices = @transform_9, window_bounds = array<i64: 1, 8, 128>}]} {
    %c0 = arith.constant 0 : index
    %c0_0 = arith.constant 0 : index
    %c0_1 = arith.constant 0 : index
    %0 = vector.load %arg1[%c0, %c0_0, %c0_1] : memref<1x8x128xf32, #tpu.memory_space<vmem>>, vector<1x8x128xf32>
    %1 = vector.shape_cast %0 : vector<1x8x128xf32> to vector<8x128xf32>
    %c0_2 = arith.constant 0 : index
    %c0_3 = arith.constant 0 : index
    %2 = vector.load %arg8[%c0_2, %c0_3] : memref<8x128xf32, #tpu.memory_space<vmem>>, vector<8x128xf32>
    %3 = vector.extract_strided_slice %2 {offsets = [0, 0], sizes = [1, 128], strides = [1, 1]} : vector<8x128xf32> to vector<1x128xf32>
    %4 = vector.extract_strided_slice %2 {offsets = [1, 0], sizes = [1, 128], strides = [1, 1]} : vector<8x128xf32> to vector<1x128xf32>
    %5 = vector.extract_strided_slice %2 {offsets = [2, 0], sizes = [1, 128], strides = [1, 1]} : vector<8x128xf32> to vector<1x128xf32>
    %6 = vector.extract_strided_slice %2 {offsets = [3, 0], sizes = [1, 128], strides = [1, 1]} : vector<8x128xf32> to vector<1x128xf32>
    %7 = vector.extract_strided_slice %2 {offsets = [4, 0], sizes = [1, 128], strides = [1, 1]} : vector<8x128xf32> to vector<1x128xf32>
    %8 = vector.extract_strided_slice %2 {offsets = [5, 0], sizes = [1, 128], strides = [1, 1]} : vector<8x128xf32> to vector<1x128xf32>
    %9 = tpu.iota {dimensions = array<i32: 1>} : vector<1x128xi32>
    %c50_i32 = arith.constant 50 : i32
    %10 = vector.broadcast %c50_i32 : i32 to vector<1x128xi32>
    %11 = arith.cmpi slt, %9, %10 : vector<1x128xi32>
    %12 = arith.extui %11 : vector<1x128xi1> to vector<1x128xi32>
    %13 = arith.sitofp %12 : vector<1x128xi32> to vector<1x128xf32>
    %c0_4 = arith.constant 0 : index
    %c0_5 = arith.constant 0 : index
    %14 = vector.load %arg2[%c0_4, %c0_5] : memref<128x384xf32, #tpu.memory_space<vmem>>, vector<128x384xf32>
    %cst = arith.constant dense<0.000000e+00> : vector<8x384xf32>
    %15 = tpu.matmul %1, %14, %cst {dimension_numbers = #tpu.dot_dimension_numbers<[1], [0], [0], [1], [0, 0, 1, 1], [], []>} : vector<8x128xf32>, vector<128x384xf32>, vector<8x384xf32> -> vector<8x384xf32>
    %c0_6 = arith.constant 0 : index
    %c0_7 = arith.constant 0 : index
    %16 = vector.load %arg3[%c0_6, %c0_7] : memref<1x384xf32, #tpu.memory_space<vmem>>, vector<1x384xf32>
    %17 = vector.broadcast %16 : vector<1x384xf32> to vector<8x384xf32>
    %18 = arith.addf %15, %17 : vector<8x384xf32>
    %19 = vector.extract_strided_slice %18 {offsets = [0, 0], sizes = [8, 128], strides = [1, 1]} : vector<8x384xf32> to vector<8x128xf32>
    %cst_8 = arith.constant 0.44721359 : f32
    %20 = vector.broadcast %cst_8 : f32 to vector<8x128xf32>
    %21 = arith.mulf %19, %20 : vector<8x128xf32>
    %22 = vector.extract_strided_slice %18 {offsets = [0, 128], sizes = [8, 128], strides = [1, 1]} : vector<8x384xf32> to vector<8x128xf32>
    %23 = vector.extract_strided_slice %18 {offsets = [0, 256], sizes = [8, 128], strides = [1, 1]} : vector<8x384xf32> to vector<8x128xf32>
    %24 = vector.shape_cast %21 : vector<8x128xf32> to vector<1x8x128xf32>
    %25 = vector.shape_cast %22 : vector<8x128xf32> to vector<1x8x128xf32>
    %26 = vector.shape_cast %23 : vector<8x128xf32> to vector<1x8x128xf32>
    %c0_9 = arith.constant 0 : index
    %c0_10 = arith.constant 0 : index
    %c0_11 = arith.constant 0 : index
    %c0_12 = arith.constant 0 : index
    %27 = vector.load %arg9[%c0_9, %c0_10, %c0_11, %c0_12] : memref<10x1x1x128xf32, #tpu.memory_space<vmem>>, vector<10x1x1x128xf32>
    %28 = vector.shape_cast %24 : vector<1x8x128xf32> to vector<1x1x8x128xf32>
    %29 = vector.broadcast %28 : vector<1x1x8x128xf32> to vector<10x1x8x128xf32>
    %30 = vector.broadcast %27 : vector<10x1x1x128xf32> to vector<10x1x8x128xf32>
    %31 = arith.mulf %29, %30 : vector<10x1x8x128xf32>
    %32 = vector.shape_cast %31 : vector<10x1x8x128xf32> to vector<10x8x128xf32>
    %33 = vector.shape_cast %26 : vector<1x8x128xf32> to vector<1x1x8x128xf32>
    %34 = vector.broadcast %33 : vector<1x1x8x128xf32> to vector<10x1x8x128xf32>
    %35 = vector.broadcast %27 : vector<10x1x1x128xf32> to vector<10x1x8x128xf32>
    %36 = arith.mulf %34, %35 : vector<10x1x8x128xf32>
    %37 = vector.shape_cast %36 : vector<10x1x8x128xf32> to vector<10x8x128xf32>
    %38 = vector.shape_cast %25 : vector<1x8x128xf32> to vector<1x1x8x128xf32>
    %39 = vector.shape_cast %38 : vector<1x1x8x128xf32> to vector<1x1x8x128xf32>
    %40 = vector.broadcast %39 : vector<1x1x8x128xf32> to vector<10x1x8x128xf32>
    %41 = vector.shape_cast %40 : vector<10x1x8x128xf32> to vector<10x8x128xf32>
    "tpu.trace_start"() <{level = 10 : i32, message = "bqd,bkd->bqk"}> : () -> ()
    %cst_13 = arith.constant dense<0.000000e+00> : vector<10x8x8xf32>
    %42 = tpu.matmul %32, %41, %cst_13 {dimension_numbers = #tpu.dot_dimension_numbers<[2], [2], [1], [1], [0, 0, 0, 1, 1, 1], [0], [0]>} : vector<10x8x128xf32>, vector<10x8x128xf32>, vector<10x8x8xf32> -> vector<10x8x8xf32>
    "tpu.trace_stop"() : () -> ()
    %cst_14 = arith.constant dense<0xFF800000> : vector<10x8xf32>
    %43 = vector.multi_reduction <maximumf>, %42, %cst_14 [2] : vector<10x8x8xf32> to vector<10x8xf32>
    %44 = vector.shape_cast %43 : vector<10x8xf32> to vector<10x8x1xf32>
    %45 = vector.broadcast %44 : vector<10x8x1xf32> to vector<10x8x8xf32>
    %46 = arith.subf %42, %45 : vector<10x8x8xf32>
    %47 = math.exp %46 : vector<10x8x8xf32>
    %cst_15 = arith.constant dense<0.000000e+00> : vector<10x8xf32>
    %48 = vector.multi_reduction <add>, %47, %cst_15 [2] : vector<10x8x8xf32> to vector<10x8xf32>
    %49 = vector.shape_cast %48 : vector<10x8xf32> to vector<10x8x1xf32>
    %50 = tpu.reciprocal %49 {approx = true} : vector<10x8x1xf32> -> vector<10x8x1xf32>
    %51 = vector.broadcast %50 : vector<10x8x1xf32> to vector<10x8x8xf32>
    %52 = arith.mulf %47, %51 : vector<10x8x8xf32>
    "tpu.trace_start"() <{level = 10 : i32, message = "bqk,bkd->bqd"}> : () -> ()
    %cst_16 = arith.constant dense<0.000000e+00> : vector<10x8x128xf32>
    %53 = tpu.matmul %52, %37, %cst_16 {dimension_numbers = #tpu.dot_dimension_numbers<[2], [1], [1], [2], [0, 0, 0, 1, 1, 2], [0], [0]>} : vector<10x8x8xf32>, vector<10x8x128xf32>, vector<10x8x128xf32> -> vector<10x8x128xf32>
    "tpu.trace_stop"() : () -> ()
    %54 = vector.shape_cast %53 : vector<10x8x128xf32> to vector<10x1x8x128xf32>
    %cst_17 = arith.constant dense<0.000000e+00> : vector<1x8x128xf32>
    %55 = vector.multi_reduction <add>, %54, %cst_17 [0] : vector<10x1x8x128xf32> to vector<1x8x128xf32>
    %56 = vector.shape_cast %55 : vector<1x8x128xf32> to vector<8x128xf32>
    %c0_18 = arith.constant 0 : index
    %c0_19 = arith.constant 0 : index
    %57 = vector.load %arg4[%c0_18, %c0_19] : memref<128x128xf32, #tpu.memory_space<vmem>>, vector<128x128xf32>
    %cst_20 = arith.constant dense<0.000000e+00> : vector<8x128xf32>
    %58 = tpu.matmul %56, %57, %cst_20 {dimension_numbers = #tpu.dot_dimension_numbers<[1], [0], [0], [1], [0, 0, 1, 1], [], []>} : vector<8x128xf32>, vector<128x128xf32>, vector<8x128xf32> -> vector<8x128xf32>
    %59 = vector.broadcast %3 : vector<1x128xf32> to vector<8x128xf32>
    %60 = arith.addf %58, %59 : vector<8x128xf32>
    %61 = arith.addf %1, %60 : vector<8x128xf32>
    %cst_21 = arith.constant dense<0.000000e+00> : vector<8xf32>
    %62 = vector.multi_reduction <add>, %61, %cst_21 [1] : vector<8x128xf32> to vector<8xf32>
    %63 = vector.shape_cast %62 : vector<8xf32> to vector<8x1xf32>
    %cst_22 = arith.constant 2.000000e-02 : f32
    %64 = vector.broadcast %cst_22 : f32 to vector<8x1xf32>
    %65 = arith.mulf %63, %64 : vector<8x1xf32>
    %66 = vector.broadcast %65 : vector<8x1xf32> to vector<8x128xf32>
    %67 = arith.subf %61, %66 : vector<8x128xf32>
    %68 = vector.broadcast %13 : vector<1x128xf32> to vector<8x128xf32>
    %69 = arith.mulf %67, %68 : vector<8x128xf32>
    %70 = arith.mulf %69, %69 : vector<8x128xf32>
    %cst_23 = arith.constant dense<0.000000e+00> : vector<8xf32>
    %71 = vector.multi_reduction <add>, %70, %cst_23 [1] : vector<8x128xf32> to vector<8xf32>
    %72 = vector.shape_cast %71 : vector<8xf32> to vector<8x1xf32>
    %cst_24 = arith.constant 2.000000e-02 : f32
    %73 = vector.broadcast %cst_24 : f32 to vector<8x1xf32>
    %74 = arith.mulf %72, %73 : vector<8x1xf32>
    %cst_25 = arith.constant 9.99999974E-6 : f32
    %75 = vector.broadcast %cst_25 : f32 to vector<8x1xf32>
    %76 = arith.addf %74, %75 : vector<8x1xf32>
    %77 = math.rsqrt %76 : vector<8x1xf32>
    %78 = vector.broadcast %77 : vector<8x1xf32> to vector<8x128xf32>
    %79 = arith.mulf %69, %78 : vector<8x128xf32>
    %80 = vector.broadcast %5 : vector<1x128xf32> to vector<8x128xf32>
    %81 = arith.mulf %79, %80 : vector<8x128xf32>
    %82 = vector.broadcast %6 : vector<1x128xf32> to vector<8x128xf32>
    %83 = arith.addf %81, %82 : vector<8x128xf32>
    %c0_26 = arith.constant 0 : index
    %c0_27 = arith.constant 0 : index
    %84 = vector.load %arg5[%c0_26, %c0_27] : memref<128x2048xf32, #tpu.memory_space<vmem>>, vector<128x2048xf32>
    %cst_28 = arith.constant dense<0.000000e+00> : vector<8x2048xf32>
    %85 = tpu.matmul %83, %84, %cst_28 {dimension_numbers = #tpu.dot_dimension_numbers<[1], [0], [0], [1], [0, 0, 1, 1], [], []>} : vector<8x128xf32>, vector<128x2048xf32>, vector<8x2048xf32> -> vector<8x2048xf32>
    %c0_29 = arith.constant 0 : index
    %c0_30 = arith.constant 0 : index
    %86 = vector.load %arg6[%c0_29, %c0_30] : memref<1x2048xf32, #tpu.memory_space<vmem>>, vector<1x2048xf32>
    %87 = vector.broadcast %86 : vector<1x2048xf32> to vector<8x2048xf32>
    %88 = arith.addf %85, %87 : vector<8x2048xf32>
    %cst_31 = arith.constant 0.000000e+00 : f32
    %89 = vector.broadcast %cst_31 : f32 to vector<8x2048xf32>
    %90 = arith.maximumf %88, %89 : vector<8x2048xf32>
    %c0_32 = arith.constant 0 : index
    %c0_33 = arith.constant 0 : index
    %91 = vector.load %arg7[%c0_32, %c0_33] : memref<2048x128xf32, #tpu.memory_space<vmem>>, vector<2048x128xf32>
    %cst_34 = arith.constant dense<0.000000e+00> : vector<8x128xf32>
    %92 = tpu.matmul %90, %91, %cst_34 {dimension_numbers = #tpu.dot_dimension_numbers<[1], [0], [0], [1], [0, 0, 1, 1], [], []>} : vector<8x2048xf32>, vector<2048x128xf32>, vector<8x128xf32> -> vector<8x128xf32>
    %93 = vector.broadcast %4 : vector<1x128xf32> to vector<8x128xf32>
    %94 = arith.addf %92, %93 : vector<8x128xf32>
    %95 = arith.addf %83, %94 : vector<8x128xf32>
    %cst_35 = arith.constant dense<0.000000e+00> : vector<8xf32>
    %96 = vector.multi_reduction <add>, %95, %cst_35 [1] : vector<8x128xf32> to vector<8xf32>
    %97 = vector.shape_cast %96 : vector<8xf32> to vector<8x1xf32>
    %cst_36 = arith.constant 2.000000e-02 : f32
    %98 = vector.broadcast %cst_36 : f32 to vector<8x1xf32>
    %99 = arith.mulf %97, %98 : vector<8x1xf32>
    %100 = vector.broadcast %99 : vector<8x1xf32> to vector<8x128xf32>
    %101 = arith.subf %95, %100 : vector<8x128xf32>
    %102 = vector.broadcast %13 : vector<1x128xf32> to vector<8x128xf32>
    %103 = arith.mulf %101, %102 : vector<8x128xf32>
    %104 = arith.mulf %103, %103 : vector<8x128xf32>
    %cst_37 = arith.constant dense<0.000000e+00> : vector<8xf32>
    %105 = vector.multi_reduction <add>, %104, %cst_37 [1] : vector<8x128xf32> to vector<8xf32>
    %106 = vector.shape_cast %105 : vector<8xf32> to vector<8x1xf32>
    %cst_38 = arith.constant 2.000000e-02 : f32
    %107 = vector.broadcast %cst_38 : f32 to vector<8x1xf32>
    %108 = arith.mulf %106, %107 : vector<8x1xf32>
    %cst_39 = arith.constant 9.99999974E-6 : f32
    %109 = vector.broadcast %cst_39 : f32 to vector<8x1xf32>
    %110 = arith.addf %108, %109 : vector<8x1xf32>
    %111 = math.rsqrt %110 : vector<8x1xf32>
    %112 = vector.broadcast %111 : vector<8x1xf32> to vector<8x128xf32>
    %113 = arith.mulf %103, %112 : vector<8x128xf32>
    %114 = vector.broadcast %7 : vector<1x128xf32> to vector<8x128xf32>
    %115 = arith.mulf %113, %114 : vector<8x128xf32>
    %116 = vector.broadcast %8 : vector<1x128xf32> to vector<8x128xf32>
    %117 = arith.addf %115, %116 : vector<8x128xf32>
    %118 = vector.shape_cast %117 : vector<8x128xf32> to vector<1x8x128xf32>
    %c0_40 = arith.constant 0 : index
    %c0_41 = arith.constant 0 : index
    %c0_42 = arith.constant 0 : index
    %119 = vector.load %arg10[%c0_40, %c0_41, %c0_42] : memref<1x8x128xf32, #tpu.memory_space<vmem>>, vector<1x8x128xf32>
    tpu.vector_store %arg10[%c0_40, %c0_41, %c0_42], %118 {strides = array<i32>} : memref<1x8x128xf32, #tpu.memory_space<vmem>>, vector<1x8x128xf32>,
    return
  }
  func.func @transform_0(%arg0: i32) -> (i32, i32, i32) {
    %c0_i32 = arith.constant 0 : i32
    %c0_i32_0 = arith.constant 0 : i32
    %c0_i32_1 = arith.constant 0 : i32
    return %arg0, %c0_i32, %c0_i32_0 : i32, i32, i32
  }
  func.func @transform_1(%arg0: i32) -> (i32, i32) {
    %c0_i32 = arith.constant 0 : i32
    %c0_i32_0 = arith.constant 0 : i32
    %c0_i32_1 = arith.constant 0 : i32
    return %c0_i32, %c0_i32_0 : i32, i32
  }
  func.func @transform_2(%arg0: i32) -> (i32, i32) {
    %c0_i32 = arith.constant 0 : i32
    %c0_i32_0 = arith.constant 0 : i32
    %c0_i32_1 = arith.constant 0 : i32
    return %c0_i32, %c0_i32_0 : i32, i32
  }
  func.func @transform_3(%arg0: i32) -> (i32, i32) {
    %c0_i32 = arith.constant 0 : i32
    %c0_i32_0 = arith.constant 0 : i32
    %c0_i32_1 = arith.constant 0 : i32
    return %c0_i32, %c0_i32_0 : i32, i32
  }
  func.func @transform_4(%arg0: i32) -> (i32, i32) {
    %c0_i32 = arith.constant 0 : i32
    %c0_i32_0 = arith.constant 0 : i32
    %c0_i32_1 = arith.constant 0 : i32
    return %c0_i32, %c0_i32_0 : i32, i32
  }
  func.func @transform_5(%arg0: i32) -> (i32, i32) {
    %c0_i32 = arith.constant 0 : i32
    %c0_i32_0 = arith.constant 0 : i32
    %c0_i32_1 = arith.constant 0 : i32
    return %c0_i32, %c0_i32_0 : i32, i32
  }
  func.func @transform_6(%arg0: i32) -> (i32, i32) {
    %c0_i32 = arith.constant 0 : i32
    %c0_i32_0 = arith.constant 0 : i32
    %c0_i32_1 = arith.constant 0 : i32
    return %c0_i32, %c0_i32_0 : i32, i32
  }
  func.func @transform_7(%arg0: i32) -> (i32, i32) {
    %c0_i32 = arith.constant 0 : i32
    %c0_i32_0 = arith.constant 0 : i32
    %c0_i32_1 = arith.constant 0 : i32
    return %c0_i32, %c0_i32_0 : i32, i32
  }
  func.func @transform_8(%arg0: i32) -> (i32, i32, i32, i32) {
    %c0_i32 = arith.constant 0 : i32
    %c0_i32_0 = arith.constant 0 : i32
    %c0_i32_1 = arith.constant 0 : i32
    %c0_i32_2 = arith.constant 0 : i32
    %c0_i32_3 = arith.constant 0 : i32
    return %c0_i32, %c0_i32_0, %c0_i32_1, %c0_i32_2 : i32, i32, i32, i32
  }
  func.func @transform_9(%arg0: i32) -> (i32, i32, i32) {
    %c0_i32 = arith.constant 0 : i32
    %c0_i32_0 = arith.constant 0 : i32
    %c0_i32_1 = arith.constant 0 : i32
    return %arg0, %c0_i32, %c0_i32_0 : i32, i32, i32
  }
}

</mosaic_0001>

<llo_original>
// kernel: tpu_custom_call.1
$region0: #{tpu_custom_call.1}
  #allocation0 [shape = 'u32[]', space=smem, size = 0x4, offset = 0x4, fixed_abs, tag = 'smem constant byte address 0x4 - core index']
  #allocation1 [shape = 'u32[144,128]{1,0:T(1,128)}', space=vmem, size = 0x12000, scoped, tag = 'internal scratch']
  %s0 = inlined_call_operand.hbm [shape: f32[2,8,128], index: 0, kind: input, shape index: {}]
  %s1 = inlined_call_operand.hbm [shape: f32[128,384], index: 1, kind: input, shape index: {}]
  %s2 = inlined_call_operand.hbm [shape: f32[1,384], index: 2, kind: input, shape index: {}]
  %s3 = inlined_call_operand.hbm [shape: f32[128,128], index: 3, kind: input, shape index: {}]
  %s4 = inlined_call_operand.hbm [shape: f32[128,2048], index: 4, kind: input, shape index: {}]
  %s5 = inlined_call_operand.vmem [shape: f32[1,2048], index: 5, kind: input, shape index: {}]
  %s6 = inlined_call_operand.hbm [shape: f32[2048,128], index: 6, kind: input, shape index: {}]
  %s7 = inlined_call_operand.hbm [shape: f32[8,128], index: 7, kind: input, shape index: {}]
  %s8 = inlined_call_operand.vmem [shape: f32[10,1,1,128], index: 8, kind: input, shape index: {}]
  %s9 = inlined_call_operand.hbm [shape: f32[2,8,128], index: 9, kind: output, shape index: {}]
  %s10 = sld [smem:[#allocation0]]
  $region97: #{tpu_custom_call.1} parent=0
    _
  %s12 = ssub.s32 1, %s10
  %s13 = scalar_select 0, %s12, %s10
  $region1: #{tpu_custom_call.1} parent=0
    #allocation2 [shape = 'u8[8192]{0}', space=vmem, size = 0x2000, scoped, tag = 'input window, operand 0']
    #allocation3 [shape = 's32[2]{0}', space=sflag, size = 0x8, scoped, tag = 'scoped memory for tpu_custom_call.1']
    #allocation4 [shape = 's32[2]{0}', space=sflag, size = 0x8, scoped, tag = 'scoped memory for tpu_custom_call.1']
    #allocation5 [shape = 'u8[196608]{0}', space=vmem, size = 0x30000, scoped, tag = 'input window, operand 1, single buffered']
    #allocation6 [shape = 's32[1]{0}', space=sflag, size = 0x4, scoped, tag = 'scoped memory for tpu_custom_call.1']
    #allocation7 [shape = 'u8[1536]{0}', space=vmem, size = 0x800, scoped, tag = 'input window, operand 2, single buffered']
    #allocation8 [shape = 'u8[65536]{0}', space=vmem, size = 0x10000, scoped, tag = 'input window, operand 3, single buffered']
    #allocation9 [shape = 's32[1]{0}', space=sflag, size = 0x4, scoped, tag = 'scoped memory for tpu_custom_call.1']
    #allocation10 [shape = 'u8[1048576]{0}', space=vmem, size = 0x100000, scoped, tag = 'input window, operand 4, single buffered']
    #allocation11 [shape = 'u8[1048576]{0}', space=vmem, size = 0x100000, scoped, tag = 'input window, operand 6, single buffered']
    #allocation12 [shape = 's32[1]{0}', space=sflag, size = 0x4, scoped, tag = 'scoped memory for tpu_custom_call.1']
    #allocation13 [shape = 'u8[4096]{0}', space=vmem, size = 0x1000, scoped, tag = 'input window, operand 7, single buffered']
    #allocation14 [shape = 'u8[8192]{0}', space=vmem, size = 0x2000, scoped, tag = 'output window, operand 0']
    %14 = vsyncpa [#allocation3], 0
    %s15 = scalar_lea.sflag [#allocation3], 1
    %16 = vsyncpa %s15, 0
    %17 = vsyncpa [#allocation6], 0
    %18 = vsyncpa [#allocation9], 0
    %19 = vsyncpa [#allocation12], 0
    %20 = vsyncpa [#allocation4], 0
    %s21 = scalar_lea.sflag [#allocation4], 1
    %22 = vsyncpa %s21, 0
    loop: start=0, step=1, limit=4
    $region2: #{tpu_custom_call.1} parent=1 // loop_pre_header
      _
    $region3: #{tpu_custom_call.1} parent=1 // loop_header
      %s24 = sphi 0, %s28
      %p25 = scmp.ge.s32.totalorder %s24, 4
      %s34 = sphi 0, %s36
      %s37 = sphi 0, %s34
      %s38 = sphi 0, %s37
      %s54 = sphi 0, %s38
      %s58 = sphi 0, %s58
      %s60 = sphi 0, %s58
      %s61 = sphi 0, %s60
      %s75 = sphi 0, %s61
      %s79 = sphi 0, %s79
      %s81 = sphi 0, %s79
      %s82 = sphi 0, %s81
      %s96 = sphi 0, %s82
      %s100 = sphi 0, %s100
      %s102 = sphi 0, %s100
      %s103 = sphi 0, %s102
      %s117 = sphi 0, %s103
      %s121 = sphi 0, %s121
      %s123 = sphi 0, %s121
      %s124 = sphi 0, %s123
      %s138 = sphi 0, %s124
      %s142 = sphi 0, %s142
      %s144 = sphi 0, %s142
      %s145 = sphi 0, %s144
      %s159 = sphi 0, %s145
      %s163 = sphi 0, %s163
      %s165 = sphi 0, %s163
      %s166 = sphi 0, %s165
      %s180 = sphi 0, %s166
      %s184 = sphi 0, %s184
      %s186 = sphi 0, %s184
      %s187 = sphi 0, %s186
      %s201 = sphi 0, %s187
      %s205 = sphi 0, %s205
      %s207 = sphi 0, %s205
      %s208 = sphi 0, %s207
      %s222 = sphi 0, %s208
      %s228 = sphi 0, %s230
      %s231 = sphi 0, %s228
      %s232 = sphi 0, %s231
      %s248 = sphi 0, %s232
    $region4: #{tpu_custom_call.1} parent=1 // loop_header_branch
      %27 = sbr.rel (%p25) target = $region8
    $region5: #{tpu_custom_call.1} parent=1 // loop_body
      %s29 = ssub.s32 %s24, 1
      %s30 = ssub.s32 %s24, 2
      %s31 = sadd.s32 %s24, 1
      %s32 = ssub.s32 %s24, %s31
      %p33 = scmp.eq.s32.totalorder %s32, 0
      %s35 = sadd.s32 %s34, 1
      %s36 = scalar_select %p33, %s34, %s35
      %p39 = pneg %p33
      %p40 = scmp.eq.s32.totalorder %s24, 1
      %p41 = por %p39, %p40
      %p42 = scmp.ne.s32.totalorder %s34, %s37
      %p43 = scmp.eq.s32.totalorder %s24, 0
      %p44 = por %p42, %p43
      %p45 = scmp.ne.s32.totalorder %s34, %s37
      %p46 = scmp.eq.s32.totalorder %s29, 1
      %p47 = por %p45, %p46
      %p48 = scmp.ne.s32.totalorder %s37, %s38
      %p49 = scmp.eq.s32.totalorder %s29, 0
      %p50 = por %p48, %p49
      %p51 = scmp.ne.s32.totalorder %s37, %s38
      %p52 = scmp.eq.s32.totalorder %s30, 1
      %p53 = por %p51, %p52
      %p55 = scmp.ne.s32.totalorder %s38, %s54
      %p56 = scmp.eq.s32.totalorder %s30, 0
      %p57 = por %p55, %p56
      %s59 = sadd.s32 %s58, 1
      %p62 = scmp.eq.s32.totalorder %s24, 1
      %p63 = scmp.ne.s32.totalorder %s58, %s60
      %p64 = scmp.eq.s32.totalorder %s24, 0
      %p65 = por %p63, %p64
      %p66 = scmp.ne.s32.totalorder %s58, %s60
      %p67 = scmp.eq.s32.totalorder %s29, 1
      %p68 = por %p66, %p67
      %p69 = scmp.ne.s32.totalorder %s60, %s61
      %p70 = scmp.eq.s32.totalorder %s29, 0
      %p71 = por %p69, %p70
      %p72 = scmp.ne.s32.totalorder %s60, %s61
      %p73 = scmp.eq.s32.totalorder %s30, 1
      %p74 = por %p72, %p73
      %p76 = scmp.ne.s32.totalorder %s61, %s75
      %p77 = scmp.eq.s32.totalorder %s30, 0
      %p78 = por %p76, %p77
      %s80 = sadd.s32 %s79, 1
      %p83 = scmp.eq.s32.totalorder %s24, 1
      %p84 = scmp.ne.s32.totalorder %s79, %s81
      %p85 = scmp.eq.s32.totalorder %s24, 0
      %p86 = por %p84, %p85
      %p87 = scmp.ne.s32.totalorder %s79, %s81
      %p88 = scmp.eq.s32.totalorder %s29, 1
      %p89 = por %p87, %p88
      %p90 = scmp.ne.s32.totalorder %s81, %s82
      %p91 = scmp.eq.s32.totalorder %s29, 0
      %p92 = por %p90, %p91
      %p93 = scmp.ne.s32.totalorder %s81, %s82
      %p94 = scmp.eq.s32.totalorder %s30, 1
      %p95 = por %p93, %p94
      %p97 = scmp.ne.s32.totalorder %s82, %s96
      %p98 = scmp.eq.s32.totalorder %s30, 0
      %p99 = por %p97, %p98
      %s101 = sadd.s32 %s100, 1
      %p104 = scmp.eq.s32.totalorder %s24, 1
      %p105 = scmp.ne.s32.totalorder %s100, %s102
      %p106 = scmp.eq.s32.totalorder %s24, 0
      %p107 = por %p105, %p106
      %p108 = scmp.ne.s32.totalorder %s100, %s102
      %p109 = scmp.eq.s32.totalorder %s29, 1
      %p110 = por %p108, %p109
      %p111 = scmp.ne.s32.totalorder %s102, %s103
      %p112 = scmp.eq.s32.totalorder %s29, 0
      %p113 = por %p111, %p112
      %p114 = scmp.ne.s32.totalorder %s102, %s103
      %p115 = scmp.eq.s32.totalorder %s30, 1
      %p116 = por %p114, %p115
      %p118 = scmp.ne.s32.totalorder %s103, %s117
      %p119 = scmp.eq.s32.totalorder %s30, 0
      %p120 = por %p118, %p119
      %s122 = sadd.s32 %s121, 1
      %p125 = scmp.eq.s32.totalorder %s24, 1
      %p126 = scmp.ne.s32.totalorder %s121, %s123
      %p127 = scmp.eq.s32.totalorder %s24, 0
      %p128 = por %p126, %p127
      %p129 = scmp.ne.s32.totalorder %s121, %s123
      %p130 = scmp.eq.s32.totalorder %s29, 1
      %p131 = por %p129, %p130
      %p132 = scmp.ne.s32.totalorder %s123, %s124
      %p133 = scmp.eq.s32.totalorder %s29, 0
      %p134 = por %p132, %p133
      %p135 = scmp.ne.s32.totalorder %s123, %s124
      %p136 = scmp.eq.s32.totalorder %s30, 1
      %p137 = por %p135, %p136
      %p139 = scmp.ne.s32.totalorder %s124, %s138
      %p140 = scmp.eq.s32.totalorder %s30, 0
      %p141 = por %p139, %p140
      %s143 = sadd.s32 %s142, 1
      %p146 = scmp.eq.s32.totalorder %s24, 1
      %p147 = scmp.ne.s32.totalorder %s142, %s144
      %p148 = scmp.eq.s32.totalorder %s24, 0
      %p149 = por %p147, %p148
      %p150 = scmp.ne.s32.totalorder %s142, %s144
      %p151 = scmp.eq.s32.totalorder %s29, 1
      %p152 = por %p150, %p151
      %p153 = scmp.ne.s32.totalorder %s144, %s145
      %p154 = scmp.eq.s32.totalorder %s29, 0
      %p155 = por %p153, %p154
      %p156 = scmp.ne.s32.totalorder %s144, %s145
      %p157 = scmp.eq.s32.totalorder %s30, 1
      %p158 = por %p156, %p157
      %p160 = scmp.ne.s32.totalorder %s145, %s159
      %p161 = scmp.eq.s32.totalorder %s30, 0
      %p162 = por %p160, %p161
      %s164 = sadd.s32 %s163, 1
      %p167 = scmp.eq.s32.totalorder %s24, 1
      %p168 = scmp.ne.s32.totalorder %s163, %s165
      %p169 = scmp.eq.s32.totalorder %s24, 0
      %p170 = por %p168, %p169
      %p171 = scmp.ne.s32.totalorder %s163, %s165
      %p172 = scmp.eq.s32.totalorder %s29, 1
      %p173 = por %p171, %p172
      %p174 = scmp.ne.s32.totalorder %s165, %s166
      %p175 = scmp.eq.s32.totalorder %s29, 0
      %p176 = por %p174, %p175
      %p177 = scmp.ne.s32.totalorder %s165, %s166
      %p178 = scmp.eq.s32.totalorder %s30, 1
      %p179 = por %p177, %p178
      %p181 = scmp.ne.s32.totalorder %s166, %s180
      %p182 = scmp.eq.s32.totalorder %s30, 0
      %p183 = por %p181, %p182
      %s185 = sadd.s32 %s184, 1
      %p188 = scmp.eq.s32.totalorder %s24, 1
      %p189 = scmp.ne.s32.totalorder %s184, %s186
      %p190 = scmp.eq.s32.totalorder %s24, 0
      %p191 = por %p189, %p190
      %p192 = scmp.ne.s32.totalorder %s184, %s186
      %p193 = scmp.eq.s32.totalorder %s29, 1
      %p194 = por %p192, %p193
      %p195 = scmp.ne.s32.totalorder %s186, %s187
      %p196 = scmp.eq.s32.totalorder %s29, 0
      %p197 = por %p195, %p196
      %p198 = scmp.ne.s32.totalorder %s186, %s187
      %p199 = scmp.eq.s32.totalorder %s30, 1
      %p200 = por %p198, %p199
      %p202 = scmp.ne.s32.totalorder %s187, %s201
      %p203 = scmp.eq.s32.totalorder %s30, 0
      %p204 = por %p202, %p203
      %s206 = sadd.s32 %s205, 1
      %p209 = scmp.eq.s32.totalorder %s24, 1
      %p210 = scmp.ne.s32.totalorder %s205, %s207
      %p211 = scmp.eq.s32.totalorder %s24, 0
      %p212 = por %p210, %p211
      %p213 = scmp.ne.s32.totalorder %s205, %s207
      %p214 = scmp.eq.s32.totalorder %s29, 1
      %p215 = por %p213, %p214
      %p216 = scmp.ne.s32.totalorder %s207, %s208
      %p217 = scmp.eq.s32.totalorder %s29, 0
      %p218 = por %p216, %p217
      %p219 = scmp.ne.s32.totalorder %s207, %s208
      %p220 = scmp.eq.s32.totalorder %s30, 1
      %p221 = por %p219, %p220
      %p223 = scmp.ne.s32.totalorder %s208, %s222
      %p224 = scmp.eq.s32.totalorder %s30, 0
      %p225 = por %p223, %p224
      %s226 = ssub.s32 %s24, %s31
      %p227 = scmp.eq.s32.totalorder %s226, 0
      %s229 = sadd.s32 %s228, 1
      %s230 = scalar_select %p227, %s228, %s229
      %p233 = pneg %p227
      %p234 = scmp.eq.s32.totalorder %s24, 1
      %p235 = por %p233, %p234
      %p236 = scmp.ne.s32.totalorder %s228, %s231
      %p237 = scmp.eq.s32.totalorder %s24, 0
      %p238 = por %p236, %p237
      %p239 = scmp.ne.s32.totalorder %s228, %s231
      %p240 = scmp.eq.s32.totalorder %s29, 1
      %p241 = por %p239, %p240
      %p242 = scmp.ne.s32.totalorder %s231, %s232
      %p243 = scmp.eq.s32.totalorder %s29, 0
      %p244 = por %p242, %p243
      %p245 = scmp.ne.s32.totalorder %s231, %s232
      %p246 = scmp.eq.s32.totalorder %s30, 1
      %p247 = por %p245, %p246
      %p249 = scmp.ne.s32.totalorder %s232, %s248
      %p250 = scmp.eq.s32.totalorder %s30, 0
      %p251 = por %p249, %p250
      %p252 = scmp.le.s32.totalorder 1, %s24
      %p253 = scmp.lt.s32.totalorder %s24, 3
      %p254 = pnand %p252, %p253
      %p255 = pneg %p254
      // Predicated region
      $region9: #{tpu_custom_call.1} parent=5 // pred_check
        _
      $region10: #{tpu_custom_call.1} parent=5 // pred_check_branch
        %257 = sbr.rel (%p254) target = $region12
      $region11: #{tpu_custom_call.1} parent=5 // pred_region
        %s258 = ssub.s32 %s24, 1
        // Predicated region
        $region13: #{tpu_custom_call.1} parent=11 // pred_check
          %p259 = pneg %p71
        $region14: #{tpu_custom_call.1} parent=11 // pred_check_branch
          %261 = sbr.rel (%p259) target = $region16
        $region15: #{tpu_custom_call.1} parent=11 // pred_region
          %s263 = ssub.s32 6144, 6144
          %264 = vsyncadd [#allocation6], %s263
          %s265 = sshll.u32 [#allocation5], 4
          %s266 = int_to_ptr.vmem [resolvable:$true] %s265
          %271 = dma.hbm_to_vmem [thread:$0]  %s1, 6144, %s266, [#allocation6], 384, 384, 24
        $region16: #{tpu_custom_call.1} parent=11 // pred_fallthru
          _
        // Predicated region
        $region17: #{tpu_custom_call.1} parent=11 // pred_check
          %p272 = pneg %p92
        $region18: #{tpu_custom_call.1} parent=11 // pred_check_branch
          %274 = sbr.rel (%p272) target = $region20
        $region19: #{tpu_custom_call.1} parent=11 // pred_region
          %s276 = ssub.s32 48, 48
          %277 = vsyncadd [#allocation6], %s276
          %s279 = sshll.u32 [#allocation7], 4
          %s280 = int_to_ptr.vmem [resolvable:$true] %s279
          %282 = dma.hbm_to_vmem [thread:$0]  %s2, 48, %s280, [#allocation6]
        $region20: #{tpu_custom_call.1} parent=11 // pred_fallthru
          _
        // Predicated region
        $region21: #{tpu_custom_call.1} parent=11 // pred_check
          %p283 = pneg %p113
        $region22: #{tpu_custom_call.1} parent=11 // pred_check_branch
          %285 = sbr.rel (%p283) target = $region24
        $region23: #{tpu_custom_call.1} parent=11 // pred_region
          %s287 = ssub.s32 2048, 2048
          %288 = vsyncadd [#allocation9], %s287
          %s289 = sshll.u32 [#allocation8], 4
          %s290 = int_to_ptr.vmem [resolvable:$true] %s289
          %295 = dma.hbm_to_vmem [thread:$0]  %s3, 2048, %s290, [#allocation9], 128, 128, 8
        $region24: #{tpu_custom_call.1} parent=11 // pred_fallthru
          _
        // Predicated region
        $region25: #{tpu_custom_call.1} parent=11 // pred_check
          %p296 = pneg %p134
        $region26: #{tpu_custom_call.1} parent=11 // pred_check_branch
          %298 = sbr.rel (%p296) target = $region28
        $region27: #{tpu_custom_call.1} parent=11 // pred_region
          %s300 = ssub.s32 32768, 32768
          %301 = vsyncadd [#allocation9], %s300
          %s302 = sshll.u32 [#allocation10], 4
          %s303 = int_to_ptr.vmem [resolvable:$true] %s302
          %308 = dma.hbm_to_vmem [thread:$0]  %s4, 32768, %s303, [#allocation9], 2048, 2048, 128
        $region28: #{tpu_custom_call.1} parent=11 // pred_fallthru
          _
        // Predicated region
        $region29: #{tpu_custom_call.1} parent=11 // pred_check
          %p309 = pneg %p155
        $region30: #{tpu_custom_call.1} parent=11 // pred_check_branch
          %311 = sbr.rel (%p309) target = $region32
        $region31: #{tpu_custom_call.1} parent=11 // pred_region
          _
        $region32: #{tpu_custom_call.1} parent=11 // pred_fallthru
          _
        // Predicated region
        $region33: #{tpu_custom_call.1} parent=11 // pred_check
          %p312 = pneg %p176
        $region34: #{tpu_custom_call.1} parent=11 // pred_check_branch
          %314 = sbr.rel (%p312) target = $region36
        $region35: #{tpu_custom_call.1} parent=11 // pred_region
          %s316 = ssub.s32 32768, 32768
          %317 = vsyncadd [#allocation12], %s316
          %s318 = sshll.u32 [#allocation11], 4
          %s319 = int_to_ptr.vmem [resolvable:$true] %s318
          %324 = dma.hbm_to_vmem [thread:$0]  %s6, 32768, %s319, [#allocation12], 128, 128, 8
        $region36: #{tpu_custom_call.1} parent=11 // pred_fallthru
          _
        // Predicated region
        $region37: #{tpu_custom_call.1} parent=11 // pred_check
          %p325 = pneg %p197
        $region38: #{tpu_custom_call.1} parent=11 // pred_check_branch
          %327 = sbr.rel (%p325) target = $region40
        $region39: #{tpu_custom_call.1} parent=11 // pred_region
          %s329 = ssub.s32 128, 128
          %330 = vsyncadd [#allocation12], %s329
          %s332 = sshll.u32 [#allocation13], 4
          %s333 = int_to_ptr.vmem [resolvable:$true] %s332
          %335 = dma.hbm_to_vmem [thread:$0]  %s7, 128, %s333, [#allocation12]
        $region40: #{tpu_custom_call.1} parent=11 // pred_fallthru
          _
        // Predicated region
        $region41: #{tpu_custom_call.1} parent=11 // pred_check
          %p336 = pneg %p218
        $region42: #{tpu_custom_call.1} parent=11 // pred_check_branch
          %338 = sbr.rel (%p336) target = $region44
        $region43: #{tpu_custom_call.1} parent=11 // pred_region
          _
        $region44: #{tpu_custom_call.1} parent=11 // pred_fallthru
          _
      $region12: #{tpu_custom_call.1} parent=5 // pred_fallthru
        _
      %p339 = scmp.lt.s32.totalorder %s24, 2
      // Predicated region
      $region45: #{tpu_custom_call.1} parent=5 // pred_check
        %p340 = pneg %p339
      $region46: #{tpu_custom_call.1} parent=5 // pred_check_branch
        %342 = sbr.rel (%p340) target = $region48
      $region47: #{tpu_custom_call.1} parent=5 // pred_region
        // Predicated region
        $region49: #{tpu_custom_call.1} parent=47 // pred_check
          %p343 = pneg %p44
        $region50: #{tpu_custom_call.1} parent=47 // pred_check_branch
          %345 = sbr.rel (%p343) target = $region52
        $region51: #{tpu_custom_call.1} parent=47 // pred_region
          %s346 = sand.u32 %s34, 1
          %s347 = scalar_lea.sflag [#allocation3], %s346
          %s348 = sand.u32 %s34, 1
          %s349 = smul.addr %s348, 8
          %s350 = scalar_lea.vmem [#allocation2], %s349
          %s352 = ssub.s32 128, 128
          %353 = vsyncadd %s347, %s352
          %s354 = smul.addr %s24, 128
          %s355 = scalar_lea.hbm %s0, %s354
          %s357 = sshll.u32 %s350, 4
          %s358 = int_to_ptr.vmem [resolvable:$true] %s357
          %360 = dma.hbm_to_vmem [thread:$0]  %s355, 128, %s358, %s347
        $region52: #{tpu_custom_call.1} parent=47 // pred_fallthru
          _
      $region48: #{tpu_custom_call.1} parent=5 // pred_fallthru
        _
      %p361 = scmp.le.s32.totalorder 1, %s24
      %p362 = scmp.lt.s32.totalorder %s24, 3
      %p363 = pnand %p361, %p362
      %p364 = pneg %p363
      // Predicated region
      $region53: #{tpu_custom_call.1} parent=5 // pred_check
        _
      $region54: #{tpu_custom_call.1} parent=5 // pred_check_branch
        %366 = sbr.rel (%p363) target = $region56
      $region55: #{tpu_custom_call.1} parent=5 // pred_region
        %s367 = ssub.s32 %s24, 1
        %s368 = sand.u32 %s37, 1
        %s369 = scalar_lea.sflag [#allocation3], %s368
        %s370 = sand.u32 %s37, 1
        %s371 = smul.addr %s370, 8
        %s372 = scalar_lea.vmem [#allocation2], %s371
        // Predicated region
        $region57: #{tpu_custom_call.1} parent=55 // pred_check
          %p373 = pneg %p50
        $region58: #{tpu_custom_call.1} parent=55 // pred_check_branch
          %375 = sbr.rel (%p373) target = $region60
        $region59: #{tpu_custom_call.1} parent=55 // pred_region
          %376 = dma.done %s369, 128
        $region60: #{tpu_custom_call.1} parent=55 // pred_fallthru
          _
        // Predicated region
        $region61: #{tpu_custom_call.1} parent=55 // pred_check
          %p377 = pneg %p71
        $region62: #{tpu_custom_call.1} parent=55 // pred_check_branch
          %379 = sbr.rel (%p377) target = $region64
        $region63: #{tpu_custom_call.1} parent=55 // pred_region
          %380 = dma.done [#allocation6], 6144
        $region64: #{tpu_custom_call.1} parent=55 // pred_fallthru
          _
        // Predicated region
        $region65: #{tpu_custom_call.1} parent=55 // pred_check
          %p381 = pneg %p92
        $region66: #{tpu_custom_call.1} parent=55 // pred_check_branch
          %383 = sbr.rel (%p381) target = $region68
        $region67: #{tpu_custom_call.1} parent=55 // pred_region
          %384 = dma.done [#allocation6], 48
        $region68: #{tpu_custom_call.1} parent=55 // pred_fallthru
          _
        // Predicated region
        $region69: #{tpu_custom_call.1} parent=55 // pred_check
          %p385 = pneg %p113
        $region70: #{tpu_custom_call.1} parent=55 // pred_check_branch
          %387 = sbr.rel (%p385) target = $region72
        $region71: #{tpu_custom_call.1} parent=55 // pred_region
          %388 = dma.done [#allocation9], 2048
        $region72: #{tpu_custom_call.1} parent=55 // pred_fallthru
          _
        // Predicated region
        $region73: #{tpu_custom_call.1} parent=55 // pred_check
          %p389 = pneg %p134
        $region74: #{tpu_custom_call.1} parent=55 // pred_check_branch
          %391 = sbr.rel (%p389) target = $region76
        $region75: #{tpu_custom_call.1} parent=55 // pred_region
          %392 = dma.done [#allocation9], 32768
        $region76: #{tpu_custom_call.1} parent=55 // pred_fallthru
          _
        // Predicated region
        $region77: #{tpu_custom_call.1} parent=55 // pred_check
          %p393 = pneg %p176
        $region78: #{tpu_custom_call.1} parent=55 // pred_check_branch
          %395 = sbr.rel (%p393) target = $region80
        $region79: #{tpu_custom_call.1} parent=55 // pred_region
          %396 = dma.done [#allocation12], 32768
        $region80: #{tpu_custom_call.1} parent=55 // pred_fallthru
          _
        // Predicated region
        $region81: #{tpu_custom_call.1} parent=55 // pred_check
          %p397 = pneg %p197
        $region82: #{tpu_custom_call.1} parent=55 // pred_check_branch
          %399 = sbr.rel (%p397) target = $region84
        $region83: #{tpu_custom_call.1} parent=55 // pred_region
          %400 = dma.done [#allocation12], 128
        $region84: #{tpu_custom_call.1} parent=55 // pred_fallthru
          _
        %s401 = sand.u32 %s37, 1
        %s402 = scalar_lea.sflag [#allocation3], %s401
        %s403 = sand.u32 %s37, 1
        %s404 = smul.addr %s403, 8
        %s405 = scalar_lea.vmem [#allocation2], %s404
        %p406 = pneg %p50
        %p407 = pneg %p47
        %p408 = pneg %p71
        %p409 = pneg %p68
        %p410 = pneg %p92
        %p411 = pneg %p89
        %p412 = pneg %p113
        %p413 = pneg %p110
        %p414 = pneg %p134
        %p415 = pneg %p131
        %p416 = pneg %p155
        %p417 = pneg %p152
        %p418 = pneg %p176
        %p419 = pneg %p173
        %p420 = pneg %p197
        %p421 = pneg %p194
        %p422 = pneg %p218
        %p423 = pneg %p215
        %p424 = pneg %p244
        %p425 = pneg %p241
        %s426 = sand.u32 %s231, 1
        %s427 = scalar_lea.sflag [#allocation4], %s426
        %s428 = sand.u32 %s231, 1
        %s429 = smul.addr %s428, 8
        %s430 = scalar_lea.vmem [#allocation14], %s429
        %v431 = vld [vmem:[%s372] sm:$0xff]
        %v432 = vld [vmem:[#allocation13] sm:$0xff]
        %v433 = vlaneseq
        %v434 = vand.u32 %v433, 127
        %vm435 = vcmp.lt.s32.totalorder %v434, 50
        %v436 = vsel %vm435, 1, 0
        %v437 = vcvt.s32.f32 %v436
        %v438 = vld [vmem:[#allocation5] sm:$0xff]
        %v439 = vld [vmem:[#allocation5 + $0x8] sm:$0xff]
        %v440 = vld [vmem:[#allocation5 + $0x10] sm:$0xff]
        %v441 = vld [vmem:[#allocation5 + $0x18] sm:$0xff]
        %v442 = vld [vmem:[#allocation5 + $0x20] sm:$0xff]
        %v443 = vld [vmem:[#allocation5 + $0x28] sm:$0xff]
        %v444 = vld [vmem:[#allocation5 + $0x30] sm:$0xff]
        %v445 = vld [vmem:[#allocation5 + $0x38] sm:$0xff]
        %v446 = vld [vmem:[#allocation5 + $0x40] sm:$0xff]
        %v447 = vld [vmem:[#allocation5 + $0x48] sm:$0xff]
        %v448 = vld [vmem:[#allocation5 + $0x50] sm:$0xff]
        %v449 = vld [vmem:[#allocation5 + $0x58] sm:$0xff]
        %v450 = vld [vmem:[#allocation5 + $0x60] sm:$0xff]
        %v451 = vld [vmem:[#allocation5 + $0x68] sm:$0xff]
        %v452 = vld [vmem:[#allocation5 + $0x70] sm:$0xff]
        %v453 = vld [vmem:[#allocation5 + $0x78] sm:$0xff]
        %v454 = vld [vmem:[#allocation5 + $0x80] sm:$0xff]
        %v455 = vld [vmem:[#allocation5 + $0x88] sm:$0xff]
        %v456 = vld [vmem:[#allocation5 + $0x90] sm:$0xff]
        %v457 = vld [vmem:[#allocation5 + $0x98] sm:$0xff]
        %v458 = vld [vmem:[#allocation5 + $0xa0] sm:$0xff]
        %v459 = vld [vmem:[#allocation5 + $0xa8] sm:$0xff]
        %v460 = vld [vmem:[#allocation5 + $0xb0] sm:$0xff]
        %v461 = vld [vmem:[#allocation5 + $0xb8] sm:$0xff]
        %v462 = vld [vmem:[#allocation5 + $0xc0] sm:$0xff]
        %v463 = vld [vmem:[#allocation5 + $0xc8] sm:$0xff]
        %v464 = vld [vmem:[#allocation5 + $0xd0] sm:$0xff]
        %v465 = vld [vmem:[#allocation5 + $0xd8] sm:$0xff]
        %v466 = vld [vmem:[#allocation5 + $0xe0] sm:$0xff]
        %v467 = vld [vmem:[#allocation5 + $0xe8] sm:$0xff]
        %v468 = vld [vmem:[#allocation5 + $0xf0] sm:$0xff]
        %v469 = vld [vmem:[#allocation5 + $0xf8] sm:$0xff]
        %v470 = vld [vmem:[#allocation5 + $0x100] sm:$0xff]
        %v471 = vld [vmem:[#allocation5 + $0x108] sm:$0xff]
        %v472 = vld [vmem:[#allocation5 + $0x110] sm:$0xff]
        %v473 = vld [vmem:[#allocation5 + $0x118] sm:$0xff]
        %v474 = vld [vmem:[#allocation5 + $0x120] sm:$0xff]
        %v475 = vld [vmem:[#allocation5 + $0x128] sm:$0xff]
        %v476 = vld [vmem:[#allocation5 + $0x130] sm:$0xff]
        %v477 = vld [vmem:[#allocation5 + $0x138] sm:$0xff]
        %v478 = vld [vmem:[#allocation5 + $0x140] sm:$0xff]
        %v479 = vld [vmem:[#allocation5 + $0x148] sm:$0xff]
        %v480 = vld [vmem:[#allocation5 + $0x150] sm:$0xff]
        %v481 = vld [vmem:[#allocation5 + $0x158] sm:$0xff]
        %v482 = vld [vmem:[#allocation5 + $0x160] sm:$0xff]
        %v483 = vld [vmem:[#allocation5 + $0x168] sm:$0xff]
        %v484 = vld [vmem:[#allocation5 + $0x170] sm:$0xff]
        %v485 = vld [vmem:[#allocation5 + $0x178] sm:$0xff]
        %v486 = vld [vmem:[#allocation7] sm:$0x7]
        %v488 = vlaneseq
        %v489 = vshrl.u32 %v488, 7
        %v490 = vsub.s32 0, %v489
        %v491 = vrot.slane %v486, %v490
        %v492 = vlaneseq
        %v493 = vshrl.u32 %v492, 7
        %v494 = vsub.s32 1, %v493
        %v495 = vrot.slane %v486, %v494
        %v496 = vlaneseq
        %v497 = vshrl.u32 %v496, 7
        %v498 = vsub.s32 2, %v497
        %v499 = vrot.slane %v486, %v498
        %503 = vmatprep.subr.mxu0 %v439
        %504 = vmatpush1.msra.mxu0 %v438
        %505 = vmatprep.subr.mxu0 %v442
        %506 = vmatpush1.msra.mxu0 %v441
        %507 = vmatprep.subr.mxu0 %v445
        %508 = vmatpush1.msra.mxu0 %v444
        %509 = vmatprep.subr.mxu0 %v448
        %510 = vmatpush1.msra.mxu0 %v447
        %511 = vmatprep.subr.mxu0 %v451
        %512 = vmatpush1.msra.mxu0 %v450
        %513 = vmatprep.subr.mxu0 %v454
        %514 = vmatpush1.msra.mxu0 %v453
        %515 = vmatprep.subr.mxu0 %v457
        %516 = vmatpush1.msra.mxu0 %v456
        %517 = vmatprep.subr.mxu0 %v460
        %518 = vmatpush1.msra.mxu0 %v459
        %519 = vmatprep.subr.mxu0 %v463
        %520 = vmatpush1.msra.mxu0 %v462
        %521 = vmatprep.subr.mxu0 %v466
        %522 = vmatpush1.msra.mxu0 %v465
        %523 = vmatprep.subr.mxu0 %v469
        %524 = vmatpush1.msra.mxu0 %v468
        %525 = vmatprep.subr.mxu0 %v472
        %526 = vmatpush1.msra.mxu0 %v471
        %527 = vmatprep.subr.mxu0 %v475
        %528 = vmatpush1.msra.mxu0 %v474
        %529 = vmatprep.subr.mxu0 %v478
        %530 = vmatpush1.msra.mxu0 %v477
        %531 = vmatprep.subr.mxu0 %v481
        %532 = vmatpush1.msra.mxu0 %v480
        %533 = vmatprep.subr.mxu0 %v484
        %534 = vmatpush1.msra.mxu0 %v483
        %535 = vmatprep.subr.mxu0 0.0
        %536 = vmatpush1.msra.mxu0 0.0
        %537 = vmatprep.subr.mxu0 0.0
        %538 = vmatpush1.msra.mxu0 0.0
        %539 = vmatprep.subr.mxu0 0.0
        %540 = vmatpush1.msra.mxu0 0.0
        %541 = vmatprep.subr.mxu0 0.0
        %542 = vmatpush1.msra.mxu0 0.0
        %543 = vmatprep.subr.mxu0 0.0
        %544 = vmatpush1.msra.mxu0 0.0
        %545 = vmatprep.subr.mxu0 0.0
        %546 = vmatpush1.msra.mxu0 0.0
        %547 = vmatprep.subr.mxu0 0.0
        %548 = vmatpush1.msra.mxu0 0.0
        %549 = vmatprep.subr.mxu0 0.0
        %550 = vmatpush1.msra.mxu0 0.0
        %551 = vmatprep.subr.mxu0 0.0
        %552 = vmatpush1.msra.mxu0 0.0
        %553 = vmatprep.subr.mxu0 0.0
        %554 = vmatpush1.msra.mxu0 0.0
        %555 = vmatprep.subr.mxu0 0.0
        %556 = vmatpush1.msra.mxu0 0.0
        %557 = vmatprep.subr.mxu0 0.0
        %558 = vmatpush1.msra.mxu0 0.0
        %559 = vmatprep.subr.mxu0 0.0
        %560 = vmatpush1.msra.mxu0 0.0
        %561 = vmatprep.subr.mxu0 0.0
        %562 = vmatpush1.msra.mxu0 0.0
        %563 = vmatprep.subr.mxu0 0.0
        %564 = vmatpush1.msra.mxu0 0.0
        %565 = vmatprep.subr.mxu0 0.0
        %566 = vmatpush1.msra.mxu0 0.0
        %567 = vmatprep.mubr.f32.mxu0 0.0
        %568 = vmatmul.mubr.f32.gmra.mrb[0].mxu0 %v431
        %v569 = vpop.f32.mrb[0].mxu0
        %v570 = vadd.f32 %v491, %v569
        %v571 = vpop.f32.mrb[0].mxu0
        %v572 = vadd.f32 %v495, %v571
        %573 = vdwg.mxu0
        %574 = vmatprep.subr.mxu0 0.0
        %575 = vmatpush1.msra.mxu0 %v440
        %576 = vmatprep.subr.mxu0 0.0
        %577 = vmatpush1.msra.mxu0 %v443
        %578 = vmatprep.subr.mxu0 0.0
        %579 = vmatpush1.msra.mxu0 %v446
        %580 = vmatprep.subr.mxu0 0.0
        %581 = vmatpush1.msra.mxu0 %v449
        %582 = vmatprep.subr.mxu0 0.0
        %583 = vmatpush1.msra.mxu0 %v452
        %584 = vmatprep.subr.mxu0 0.0
        %585 = vmatpush1.msra.mxu0 %v455
        %586 = vmatprep.subr.mxu0 0.0
        %587 = vmatpush1.msra.mxu0 %v458
        %588 = vmatprep.subr.mxu0 0.0
        %589 = vmatpush1.msra.mxu0 %v461
        %590 = vmatprep.subr.mxu0 0.0
        %591 = vmatpush1.msra.mxu0 %v464
        %592 = vmatprep.subr.mxu0 0.0
        %593 = vmatpush1.msra.mxu0 %v467
        %594 = vmatprep.subr.mxu0 0.0
        %595 = vmatpush1.msra.mxu0 %v470
        %596 = vmatprep.subr.mxu0 0.0
        %597 = vmatpush1.msra.mxu0 %v473
        %598 = vmatprep.subr.mxu0 0.0
        %599 = vmatpush1.msra.mxu0 %v476
        %600 = vmatprep.subr.mxu0 0.0
        %601 = vmatpush1.msra.mxu0 %v479
        %602 = vmatprep.subr.mxu0 0.0
        %603 = vmatpush1.msra.mxu0 %v482
        %604 = vmatprep.subr.mxu0 0.0
        %605 = vmatpush1.msra.mxu0 %v485
        %606 = vmatprep.subr.mxu0 0.0
        %607 = vmatpush1.msra.mxu0 0.0
        %608 = vmatprep.subr.mxu0 0.0
        %609 = vmatpush1.msra.mxu0 0.0
        %610 = vmatprep.subr.mxu0 0.0
        %611 = vmatpush1.msra.mxu0 0.0
        %612 = vmatprep.subr.mxu0 0.0
        %613 = vmatpush1.msra.mxu0 0.0
        %614 = vmatprep.subr.mxu0 0.0
        %615 = vmatpush1.msra.mxu0 0.0
        %616 = vmatprep.subr.mxu0 0.0
        %617 = vmatpush1.msra.mxu0 0.0
        %618 = vmatprep.subr.mxu0 0.0
        %619 = vmatpush1.msra.mxu0 0.0
        %620 = vmatprep.subr.mxu0 0.0
        %621 = vmatpush1.msra.mxu0 0.0
        %622 = vmatprep.subr.mxu0 0.0
        %623 = vmatpush1.msra.mxu0 0.0
        %624 = vmatprep.subr.mxu0 0.0
        %625 = vmatpush1.msra.mxu0 0.0
        %626 = vmatprep.subr.mxu0 0.0
        %627 = vmatpush1.msra.mxu0 0.0
        %628 = vmatprep.subr.mxu0 0.0
        %629 = vmatpush1.msra.mxu0 0.0
        %630 = vmatprep.subr.mxu0 0.0
        %631 = vmatpush1.msra.mxu0 0.0
        %632 = vmatprep.subr.mxu0 0.0
        %633 = vmatpush1.msra.mxu0 0.0
        %634 = vmatprep.subr.mxu0 0.0
        %635 = vmatpush1.msra.mxu0 0.0
        %636 = vmatprep.subr.mxu0 0.0
        %637 = vmatpush1.msra.mxu0 0.0
        %638 = vmatprep.mubr.f32.mxu0 0.0
        %639 = vmatmul.mubr.f32.gmra.mrb[0].mxu0 %v431
        %v640 = vpop.f32.mrb[0].mxu0
        %v641 = vadd.f32 %v499, %v640
        %v642 = vpop.f32.mrb[0].mxu0
        %643 = vdwg.mxu0
        %v644 = vmul.f32 %v570, 0.4472136
        %v645 = vld [vmem:[%s8] sm:$0x1]
        %v646 = vld [vmem:[%s8 + $0x1] sm:$0x1]
        %v647 = vld [vmem:[%s8 + $0x2] sm:$0x1]
        %v648 = vld [vmem:[%s8 + $0x3] sm:$0x1]
        %v649 = vld [vmem:[%s8 + $0x4] sm:$0x1]
        %v650 = vld [vmem:[%s8 + $0x5] sm:$0x1]
        %v651 = vld [vmem:[%s8 + $0x6] sm:$0x1]
        %v652 = vld [vmem:[%s8 + $0x7] sm:$0x1]
        %v653 = vld [vmem:[%s8 + $0x8] sm:$0x1]
        %v654 = vld [vmem:[%s8 + $0x9] sm:$0x1]
        %v665 = vlaneseq
        %v666 = vshrl.u32 %v665, 7
        %v667 = vsub.s32 0, %v666
        %v668 = vrot.slane %v645, %v667
        %v669 = vlaneseq
        %v670 = vshrl.u32 %v669, 7
        %v671 = vsub.s32 0, %v670
        %v672 = vrot.slane %v646, %v671
        %v673 = vlaneseq
        %v674 = vshrl.u32 %v673, 7
        %v675 = vsub.s32 0, %v674
        %v676 = vrot.slane %v647, %v675
        %v677 = vlaneseq
        %v678 = vshrl.u32 %v677, 7
        %v679 = vsub.s32 0, %v678
        %v680 = vrot.slane %v648, %v679
        %v681 = vlaneseq
        %v682 = vshrl.u32 %v681, 7
        %v683 = vsub.s32 0, %v682
        %v684 = vrot.slane %v649, %v683
        %v685 = vlaneseq
        %v686 = vshrl.u32 %v685, 7
        %v687 = vsub.s32 0, %v686
        %v688 = vrot.slane %v650, %v687
        %v689 = vlaneseq
        %v690 = vshrl.u32 %v689, 7
        %v691 = vsub.s32 0, %v690
        %v692 = vrot.slane %v651, %v691
        %v693 = vlaneseq
        %v694 = vshrl.u32 %v693, 7
        %v695 = vsub.s32 0, %v694
        %v696 = vrot.slane %v652, %v695
        %v697 = vlaneseq
        %v698 = vshrl.u32 %v697, 7
        %v699 = vsub.s32 0, %v698
        %v700 = vrot.slane %v653, %v699
        %v701 = vlaneseq
        %v702 = vshrl.u32 %v701, 7
        %v703 = vsub.s32 0, %v702
        %v704 = vrot.slane %v654, %v703
        %v715 = vmul.f32 %v644, %v668
        %v716 = vmul.f32 %v644, %v672
        %v717 = vmul.f32 %v644, %v676
        %v718 = vmul.f32 %v644, %v680
        %v719 = vmul.f32 %v644, %v684
        %v720 = vmul.f32 %v644, %v688
        %v721 = vmul.f32 %v644, %v692
        %v722 = vmul.f32 %v644, %v696
        %v723 = vmul.f32 %v644, %v700
        %v724 = vmul.f32 %v644, %v704
        %v725 = vmul.f32 %v641, %v668
        %v726 = vmul.f32 %v641, %v672
        %v727 = vmul.f32 %v641, %v676
        %v728 = vmul.f32 %v641, %v680
        %v729 = vmul.f32 %v641, %v684
        %v730 = vmul.f32 %v641, %v688
        %v731 = vmul.f32 %v641, %v692
        %v732 = vmul.f32 %v641, %v696
        %v733 = vmul.f32 %v641, %v700
        %v734 = vmul.f32 %v641, %v704
        %735 = vmatprep.subr.mxu0 0.0
        %736 = vmatpush1.xpose.msra.mxu0 %v572
        %737 = vmatprep.subr.mxu0 0.0
        %738 = vmatpush1.xpose.msra.mxu0 0.0
        %739 = vmatprep.subr.mxu0 0.0
        %740 = vmatpush1.xpose.msra.mxu0 0.0
        %741 = vmatprep.subr.mxu0 0.0
        %742 = vmatpush1.xpose.msra.mxu0 0.0
        %743 = vmatprep.subr.mxu0 0.0
        %744 = vmatpush1.xpose.msra.mxu0 0.0
        %745 = vmatprep.subr.mxu0 0.0
        %746 = vmatpush1.xpose.msra.mxu0 0.0
        %747 = vmatprep.subr.mxu0 0.0
        %748 = vmatpush1.xpose.msra.mxu0 0.0
        %749 = vmatprep.subr.mxu0 0.0
        %750 = vmatpush1.xpose.msra.mxu0 0.0
        %751 = vmatprep.subr.mxu0 0.0
        %752 = vmatpush1.xpose.msra.mxu0 0.0
        %753 = vmatprep.subr.mxu0 0.0
        %754 = vmatpush1.xpose.msra.mxu0 0.0
        %755 = vmatprep.subr.mxu0 0.0
        %756 = vmatpush1.xpose.msra.mxu0 0.0
        %757 = vmatprep.subr.mxu0 0.0
        %758 = vmatpush1.xpose.msra.mxu0 0.0
        %759 = vmatprep.subr.mxu0 0.0
        %760 = vmatpush1.xpose.msra.mxu0 0.0
        %761 = vmatprep.subr.mxu0 0.0
        %762 = vmatpush1.xpose.msra.mxu0 0.0
        %763 = vmatprep.subr.mxu0 0.0
        %764 = vmatpush1.xpose.msra.mxu0 0.0
        %765 = vmatprep.subr.mxu0 0.0
        %766 = vmatpush1.xpose.msra.mxu0 0.0
        %767 = vmatprep.subr.mxu0 0.0
        %768 = vmatpush1.xpose.msra.mxu0 0.0
        %769 = vmatprep.subr.mxu0 0.0
        %770 = vmatpush1.xpose.msra.mxu0 0.0
        %771 = vmatprep.subr.mxu0 0.0
        %772 = vmatpush1.xpose.msra.mxu0 0.0
        %773 = vmatprep.subr.mxu0 0.0
        %774 = vmatpush1.xpose.msra.mxu0 0.0
        %775 = vmatprep.subr.mxu0 0.0
        %776 = vmatpush1.xpose.msra.mxu0 0.0
        %777 = vmatprep.subr.mxu0 0.0
        %778 = vmatpush1.xpose.msra.mxu0 0.0
        %779 = vmatprep.subr.mxu0 0.0
        %780 = vmatpush1.xpose.msra.mxu0 0.0
        %781 = vmatprep.subr.mxu0 0.0
        %782 = vmatpush1.xpose.msra.mxu0 0.0
        %783 = vmatprep.subr.mxu0 0.0
        %784 = vmatpush1.xpose.msra.mxu0 0.0
        %785 = vmatprep.subr.mxu0 0.0
        %786 = vmatpush1.xpose.msra.mxu0 0.0
        %787 = vmatprep.subr.mxu0 0.0
        %788 = vmatpush1.xpose.msra.mxu0 0.0
        %789 = vmatprep.subr.mxu0 0.0
        %790 = vmatpush1.xpose.msra.mxu0 0.0
        %791 = vmatprep.subr.mxu0 0.0
        %792 = vmatpush1.xpose.msra.mxu0 0.0
        %793 = vmatprep.subr.mxu0 0.0
        %794 = vmatpush1.xpose.msra.mxu0 0.0
        %795 = vmatprep.subr.mxu0 0.0
        %796 = vmatpush1.xpose.msra.mxu0 0.0
        %797 = vmatprep.subr.mxu0 0.0
        %798 = vmatpush1.xpose.msra.mxu0 0.0
        %799 = vmatprep.mubr.f32.mxu0 0.0
        %800 = vmatmul.mubr.f32.gmra.mrb[0].mxu0 %v715
        %v801 = vpop.f32.mrb[0].mxu0
        %v802 = vadd.f32 0.0, %v801
        %v803 = vpop.f32.mrb[0].mxu0
        %804 = vdwg.mxu0
        %805 = vmatprep.subr.mxu0 0.0
        %806 = vmatpush1.xpose.msra.mxu0 %v572
        %807 = vmatprep.subr.mxu0 0.0
        %808 = vmatpush1.xpose.msra.mxu0 0.0
        %809 = vmatprep.subr.mxu0 0.0
        %810 = vmatpush1.xpose.msra.mxu0 0.0
        %811 = vmatprep.subr.mxu0 0.0
        %812 = vmatpush1.xpose.msra.mxu0 0.0
        %813 = vmatprep.subr.mxu0 0.0
        %814 = vmatpush1.xpose.msra.mxu0 0.0
        %815 = vmatprep.subr.mxu0 0.0
        %816 = vmatpush1.xpose.msra.mxu0 0.0
        %817 = vmatprep.subr.mxu0 0.0
        %818 = vmatpush1.xpose.msra.mxu0 0.0
        %819 = vmatprep.subr.mxu0 0.0
        %820 = vmatpush1.xpose.msra.mxu0 0.0
        %821 = vmatprep.subr.mxu0 0.0
        %822 = vmatpush1.xpose.msra.mxu0 0.0
        %823 = vmatprep.subr.mxu0 0.0
        %824 = vmatpush1.xpose.msra.mxu0 0.0
        %825 = vmatprep.subr.mxu0 0.0
        %826 = vmatpush1.xpose.msra.mxu0 0.0
        %827 = vmatprep.subr.mxu0 0.0
        %828 = vmatpush1.xpose.msra.mxu0 0.0
        %829 = vmatprep.subr.mxu0 0.0
        %830 = vmatpush1.xpose.msra.mxu0 0.0
        %831 = vmatprep.subr.mxu0 0.0
        %832 = vmatpush1.xpose.msra.mxu0 0.0
        %833 = vmatprep.subr.mxu0 0.0
        %834 = vmatpush1.xpose.msra.mxu0 0.0
        %835 = vmatprep.subr.mxu0 0.0
        %836 = vmatpush1.xpose.msra.mxu0 0.0
        %837 = vmatprep.subr.mxu0 0.0
        %838 = vmatpush1.xpose.msra.mxu0 0.0
        %839 = vmatprep.subr.mxu0 0.0
        %840 = vmatpush1.xpose.msra.mxu0 0.0
        %841 = vmatprep.subr.mxu0 0.0
        %842 = vmatpush1.xpose.msra.mxu0 0.0
        %843 = vmatprep.subr.mxu0 0.0
        %844 = vmatpush1.xpose.msra.mxu0 0.0
        %845 = vmatprep.subr.mxu0 0.0
        %846 = vmatpush1.xpose.msra.mxu0 0.0
        %847 = vmatprep.subr.mxu0 0.0
        %848 = vmatpush1.xpose.msra.mxu0 0.0
        %849 = vmatprep.subr.mxu0 0.0
        %850 = vmatpush1.xpose.msra.mxu0 0.0
        %851 = vmatprep.subr.mxu0 0.0
        %852 = vmatpush1.xpose.msra.mxu0 0.0
        %853 = vmatprep.subr.mxu0 0.0
        %854 = vmatpush1.xpose.msra.mxu0 0.0
        %855 = vmatprep.subr.mxu0 0.0
        %856 = vmatpush1.xpose.msra.mxu0 0.0
        %857 = vmatprep.subr.mxu0 0.0
        %858 = vmatpush1.xpose.msra.mxu0 0.0
        %859 = vmatprep.subr.mxu0 0.0
        %860 = vmatpush1.xpose.msra.mxu0 0.0
        %861 = vmatprep.subr.mxu0 0.0
        %862 = vmatpush1.xpose.msra.mxu0 0.0
        %863 = vmatprep.subr.mxu0 0.0
        %864 = vmatpush1.xpose.msra.mxu0 0.0
        %865 = vmatprep.subr.mxu0 0.0
        %866 = vmatpush1.xpose.msra.mxu0 0.0
        %867 = vmatprep.subr.mxu0 0.0
        %868 = vmatpush1.xpose.msra.mxu0 0.0
        %869 = vmatprep.mubr.f32.mxu0 0.0
        %870 = vmatmul.mubr.f32.gmra.mrb[0].mxu0 %v716
        %v871 = vpop.f32.mrb[0].mxu0
        %v872 = vadd.f32 0.0, %v871
        %v873 = vpop.f32.mrb[0].mxu0
        %874 = vdwg.mxu0
        %875 = vmatprep.subr.mxu0 0.0
        %876 = vmatpush1.xpose.msra.mxu0 %v572
        %877 = vmatprep.subr.mxu0 0.0
        %878 = vmatpush1.xpose.msra.mxu0 0.0
        %879 = vmatprep.subr.mxu0 0.0
        %880 = vmatpush1.xpose.msra.mxu0 0.0
        %881 = vmatprep.subr.mxu0 0.0
        %882 = vmatpush1.xpose.msra.mxu0 0.0
        %883 = vmatprep.subr.mxu0 0.0
        %884 = vmatpush1.xpose.msra.mxu0 0.0
        %885 = vmatprep.subr.mxu0 0.0
        %886 = vmatpush1.xpose.msra.mxu0 0.0
        %887 = vmatprep.subr.mxu0 0.0
        %888 = vmatpush1.xpose.msra.mxu0 0.0
        %889 = vmatprep.subr.mxu0 0.0
        %890 = vmatpush1.xpose.msra.mxu0 0.0
        %891 = vmatprep.subr.mxu0 0.0
        %892 = vmatpush1.xpose.msra.mxu0 0.0
        %893 = vmatprep.subr.mxu0 0.0
        %894 = vmatpush1.xpose.msra.mxu0 0.0
        %895 = vmatprep.subr.mxu0 0.0
        %896 = vmatpush1.xpose.msra.mxu0 0.0
        %897 = vmatprep.subr.mxu0 0.0
        %898 = vmatpush1.xpose.msra.mxu0 0.0
        %899 = vmatprep.subr.mxu0 0.0
        %900 = vmatpush1.xpose.msra.mxu0 0.0
        %901 = vmatprep.subr.mxu0 0.0
        %902 = vmatpush1.xpose.msra.mxu0 0.0
        %903 = vmatprep.subr.mxu0 0.0
        %904 = vmatpush1.xpose.msra.mxu0 0.0
        %905 = vmatprep.subr.mxu0 0.0
        %906 = vmatpush1.xpose.msra.mxu0 0.0
        %907 = vmatprep.subr.mxu0 0.0
        %908 = vmatpush1.xpose.msra.mxu0 0.0
        %909 = vmatprep.subr.mxu0 0.0
        %910 = vmatpush1.xpose.msra.mxu0 0.0
        %911 = vmatprep.subr.mxu0 0.0
        %912 = vmatpush1.xpose.msra.mxu0 0.0
        %913 = vmatprep.subr.mxu0 0.0
        %914 = vmatpush1.xpose.msra.mxu0 0.0
        %915 = vmatprep.subr.mxu0 0.0
        %916 = vmatpush1.xpose.msra.mxu0 0.0
        %917 = vmatprep.subr.mxu0 0.0
        %918 = vmatpush1.xpose.msra.mxu0 0.0
        %919 = vmatprep.subr.mxu0 0.0
        %920 = vmatpush1.xpose.msra.mxu0 0.0
        %921 = vmatprep.subr.mxu0 0.0
        %922 = vmatpush1.xpose.msra.mxu0 0.0
        %923 = vmatprep.subr.mxu0 0.0
        %924 = vmatpush1.xpose.msra.mxu0 0.0
        %925 = vmatprep.subr.mxu0 0.0
        %926 = vmatpush1.xpose.msra.mxu0 0.0
        %927 = vmatprep.subr.mxu0 0.0
        %928 = vmatpush1.xpose.msra.mxu0 0.0
        %929 = vmatprep.subr.mxu0 0.0
        %930 = vmatpush1.xpose.msra.mxu0 0.0
        %931 = vmatprep.subr.mxu0 0.0
        %932 = vmatpush1.xpose.msra.mxu0 0.0
        %933 = vmatprep.subr.mxu0 0.0
        %934 = vmatpush1.xpose.msra.mxu0 0.0
        %935 = vmatprep.subr.mxu0 0.0
        %936 = vmatpush1.xpose.msra.mxu0 0.0
        %937 = vmatprep.subr.mxu0 0.0
        %938 = vmatpush1.xpose.msra.mxu0 0.0
        %939 = vmatprep.mubr.f32.mxu0 0.0
        %940 = vmatmul.mubr.f32.gmra.mrb[0].mxu0 %v717
        %v941 = vpop.f32.mrb[0].mxu0
        %v942 = vadd.f32 0.0, %v941
        %v943 = vpop.f32.mrb[0].mxu0
        %944 = vdwg.mxu0
        %945 = vmatprep.subr.mxu0 0.0
        %946 = vmatpush1.xpose.msra.mxu0 %v572
        %947 = vmatprep.subr.mxu0 0.0
        %948 = vmatpush1.xpose.msra.mxu0 0.0
        %949 = vmatprep.subr.mxu0 0.0
        %950 = vmatpush1.xpose.msra.mxu0 0.0
        %951 = vmatprep.subr.mxu0 0.0
        %952 = vmatpush1.xpose.msra.mxu0 0.0
        %953 = vmatprep.subr.mxu0 0.0
        %954 = vmatpush1.xpose.msra.mxu0 0.0
        %955 = vmatprep.subr.mxu0 0.0
        %956 = vmatpush1.xpose.msra.mxu0 0.0
        %957 = vmatprep.subr.mxu0 0.0
        %958 = vmatpush1.xpose.msra.mxu0 0.0
        %959 = vmatprep.subr.mxu0 0.0
        %960 = vmatpush1.xpose.msra.mxu0 0.0
        %961 = vmatprep.subr.mxu0 0.0
        %962 = vmatpush1.xpose.msra.mxu0 0.0
        %963 = vmatprep.subr.mxu0 0.0
        %964 = vmatpush1.xpose.msra.mxu0 0.0
        %965 = vmatprep.subr.mxu0 0.0
        %966 = vmatpush1.xpose.msra.mxu0 0.0
        %967 = vmatprep.subr.mxu0 0.0
        %968 = vmatpush1.xpose.msra.mxu0 0.0
        %969 = vmatprep.subr.mxu0 0.0
        %970 = vmatpush1.xpose.msra.mxu0 0.0
        %971 = vmatprep.subr.mxu0 0.0
        %972 = vmatpush1.xpose.msra.mxu0 0.0
        %973 = vmatprep.subr.mxu0 0.0
        %974 = vmatpush1.xpose.msra.mxu0 0.0
        %975 = vmatprep.subr.mxu0 0.0
        %976 = vmatpush1.xpose.msra.mxu0 0.0
        %977 = vmatprep.subr.mxu0 0.0
        %978 = vmatpush1.xpose.msra.mxu0 0.0
        %979 = vmatprep.subr.mxu0 0.0
        %980 = vmatpush1.xpose.msra.mxu0 0.0
        %981 = vmatprep.subr.mxu0 0.0
        %982 = vmatpush1.xpose.msra.mxu0 0.0
        %983 = vmatprep.subr.mxu0 0.0
        %984 = vmatpush1.xpose.msra.mxu0 0.0
        %985 = vmatprep.subr.mxu0 0.0
        %986 = vmatpush1.xpose.msra.mxu0 0.0
        %987 = vmatprep.subr.mxu0 0.0
        %988 = vmatpush1.xpose.msra.mxu0 0.0
        %989 = vmatprep.subr.mxu0 0.0
        %990 = vmatpush1.xpose.msra.mxu0 0.0
        %991 = vmatprep.subr.mxu0 0.0
        %992 = vmatpush1.xpose.msra.mxu0 0.0
        %993 = vmatprep.subr.mxu0 0.0
        %994 = vmatpush1.xpose.msra.mxu0 0.0
        %995 = vmatprep.subr.mxu0 0.0
        %996 = vmatpush1.xpose.msra.mxu0 0.0
        %997 = vmatprep.subr.mxu0 0.0
        %998 = vmatpush1.xpose.msra.mxu0 0.0
        %999 = vmatprep.subr.mxu0 0.0
        %1000 = vmatpush1.xpose.msra.mxu0 0.0
        %1001 = vmatprep.subr.mxu0 0.0
        %1002 = vmatpush1.xpose.msra.mxu0 0.0
        %1003 = vmatprep.subr.mxu0 0.0
        %1004 = vmatpush1.xpose.msra.mxu0 0.0
        %1005 = vmatprep.subr.mxu0 0.0
        %1006 = vmatpush1.xpose.msra.mxu0 0.0
        %1007 = vmatprep.subr.mxu0 0.0
        %1008 = vmatpush1.xpose.msra.mxu0 0.0
        %1009 = vmatprep.mubr.f32.mxu0 0.0
        %1010 = vmatmul.mubr.f32.gmra.mrb[0].mxu0 %v718
        %v1011 = vpop.f32.mrb[0].mxu0
        %v1012 = vadd.f32 0.0, %v1011
        %v1013 = vpop.f32.mrb[0].mxu0
        %1014 = vdwg.mxu0
        %1015 = vmatprep.subr.mxu0 0.0
        %1016 = vmatpush1.xpose.msra.mxu0 %v572
        %1017 = vmatprep.subr.mxu0 0.0
        %1018 = vmatpush1.xpose.msra.mxu0 0.0
        %1019 = vmatprep.subr.mxu0 0.0
        %1020 = vmatpush1.xpose.msra.mxu0 0.0
        %1021 = vmatprep.subr.mxu0 0.0
        %1022 = vmatpush1.xpose.msra.mxu0 0.0
        %1023 = vmatprep.subr.mxu0 0.0
        %1024 = vmatpush1.xpose.msra.mxu0 0.0
        %1025 = vmatprep.subr.mxu0 0.0
        %1026 = vmatpush1.xpose.msra.mxu0 0.0
        %1027 = vmatprep.subr.mxu0 0.0
        %1028 = vmatpush1.xpose.msra.mxu0 0.0
        %1029 = vmatprep.subr.mxu0 0.0
        %1030 = vmatpush1.xpose.msra.mxu0 0.0
        %1031 = vmatprep.subr.mxu0 0.0
        %1032 = vmatpush1.xpose.msra.mxu0 0.0
        %1033 = vmatprep.subr.mxu0 0.0
        %1034 = vmatpush1.xpose.msra.mxu0 0.0
        %1035 = vmatprep.subr.mxu0 0.0
        %1036 = vmatpush1.xpose.msra.mxu0 0.0
        %1037 = vmatprep.subr.mxu0 0.0
        %1038 = vmatpush1.xpose.msra.mxu0 0.0
        %1039 = vmatprep.subr.mxu0 0.0
        %1040 = vmatpush1.xpose.msra.mxu0 0.0
        %1041 = vmatprep.subr.mxu0 0.0
        %1042 = vmatpush1.xpose.msra.mxu0 0.0
        %1043 = vmatprep.subr.mxu0 0.0
        %1044 = vmatpush1.xpose.msra.mxu0 0.0
        %1045 = vmatprep.subr.mxu0 0.0
        %1046 = vmatpush1.xpose.msra.mxu0 0.0
        %1047 = vmatprep.subr.mxu0 0.0
        %1048 = vmatpush1.xpose.msra.mxu0 0.0
        %1049 = vmatprep.subr.mxu0 0.0
        %1050 = vmatpush1.xpose.msra.mxu0 0.0
        %1051 = vmatprep.subr.mxu0 0.0
        %1052 = vmatpush1.xpose.msra.mxu0 0.0
        %1053 = vmatprep.subr.mxu0 0.0
        %1054 = vmatpush1.xpose.msra.mxu0 0.0
        %1055 = vmatprep.subr.mxu0 0.0
        %1056 = vmatpush1.xpose.msra.mxu0 0.0
        %1057 = vmatprep.subr.mxu0 0.0
        %1058 = vmatpush1.xpose.msra.mxu0 0.0
        %1059 = vmatprep.subr.mxu0 0.0
        %1060 = vmatpush1.xpose.msra.mxu0 0.0
        %1061 = vmatprep.subr.mxu0 0.0
        %1062 = vmatpush1.xpose.msra.mxu0 0.0
        %1063 = vmatprep.subr.mxu0 0.0
        %1064 = vmatpush1.xpose.msra.mxu0 0.0
        %1065 = vmatprep.subr.mxu0 0.0
        %1066 = vmatpush1.xpose.msra.mxu0 0.0
        %1067 = vmatprep.subr.mxu0 0.0
        %1068 = vmatpush1.xpose.msra.mxu0 0.0
        %1069 = vmatprep.subr.mxu0 0.0
        %1070 = vmatpush1.xpose.msra.mxu0 0.0
        %1071 = vmatprep.subr.mxu0 0.0
        %1072 = vmatpush1.xpose.msra.mxu0 0.0
        %1073 = vmatprep.subr.mxu0 0.0
        %1074 = vmatpush1.xpose.msra.mxu0 0.0
        %1075 = vmatprep.subr.mxu0 0.0
        %1076 = vmatpush1.xpose.msra.mxu0 0.0
        %1077 = vmatprep.subr.mxu0 0.0
        %1078 = vmatpush1.xpose.msra.mxu0 0.0
        %1079 = vmatprep.mubr.f32.mxu0 0.0
        %1080 = vmatmul.mubr.f32.gmra.mrb[0].mxu0 %v719
        %v1081 = vpop.f32.mrb[0].mxu0
        %v1082 = vadd.f32 0.0, %v1081
        %v1083 = vpop.f32.mrb[0].mxu0
        %1084 = vdwg.mxu0
        %1085 = vmatprep.subr.mxu0 0.0
        %1086 = vmatpush1.xpose.msra.mxu0 %v572
        %1087 = vmatprep.subr.mxu0 0.0
        %1088 = vmatpush1.xpose.msra.mxu0 0.0
        %1089 = vmatprep.subr.mxu0 0.0
        %1090 = vmatpush1.xpose.msra.mxu0 0.0
        %1091 = vmatprep.subr.mxu0 0.0
        %1092 = vmatpush1.xpose.msra.mxu0 0.0
        %1093 = vmatprep.subr.mxu0 0.0
        %1094 = vmatpush1.xpose.msra.mxu0 0.0
        %1095 = vmatprep.subr.mxu0 0.0
        %1096 = vmatpush1.xpose.msra.mxu0 0.0
        %1097 = vmatprep.subr.mxu0 0.0
        %1098 = vmatpush1.xpose.msra.mxu0 0.0
        %1099 = vmatprep.subr.mxu0 0.0
        %1100 = vmatpush1.xpose.msra.mxu0 0.0
        %1101 = vmatprep.subr.mxu0 0.0
        %1102 = vmatpush1.xpose.msra.mxu0 0.0
        %1103 = vmatprep.subr.mxu0 0.0
        %1104 = vmatpush1.xpose.msra.mxu0 0.0
        %1105 = vmatprep.subr.mxu0 0.0
        %1106 = vmatpush1.xpose.msra.mxu0 0.0
        %1107 = vmatprep.subr.mxu0 0.0
        %1108 = vmatpush1.xpose.msra.mxu0 0.0
        %1109 = vmatprep.subr.mxu0 0.0
        %1110 = vmatpush1.xpose.msra.mxu0 0.0
        %1111 = vmatprep.subr.mxu0 0.0
        %1112 = vmatpush1.xpose.msra.mxu0 0.0
        %1113 = vmatprep.subr.mxu0 0.0
        %1114 = vmatpush1.xpose.msra.mxu0 0.0
        %1115 = vmatprep.subr.mxu0 0.0
        %1116 = vmatpush1.xpose.msra.mxu0 0.0
        %1117 = vmatprep.subr.mxu0 0.0
        %1118 = vmatpush1.xpose.msra.mxu0 0.0
        %1119 = vmatprep.subr.mxu0 0.0
        %1120 = vmatpush1.xpose.msra.mxu0 0.0
        %1121 = vmatprep.subr.mxu0 0.0
        %1122 = vmatpush1.xpose.msra.mxu0 0.0
        %1123 = vmatprep.subr.mxu0 0.0
        %1124 = vmatpush1.xpose.msra.mxu0 0.0
        %1125 = vmatprep.subr.mxu0 0.0
        %1126 = vmatpush1.xpose.msra.mxu0 0.0
        %1127 = vmatprep.subr.mxu0 0.0
        %1128 = vmatpush1.xpose.msra.mxu0 0.0
        %1129 = vmatprep.subr.mxu0 0.0
        %1130 = vmatpush1.xpose.msra.mxu0 0.0
        %1131 = vmatprep.subr.mxu0 0.0
        %1132 = vmatpush1.xpose.msra.mxu0 0.0
        %1133 = vmatprep.subr.mxu0 0.0
        %1134 = vmatpush1.xpose.msra.mxu0 0.0
        %1135 = vmatprep.subr.mxu0 0.0
        %1136 = vmatpush1.xpose.msra.mxu0 0.0
        %1137 = vmatprep.subr.mxu0 0.0
        %1138 = vmatpush1.xpose.msra.mxu0 0.0
        %1139 = vmatprep.subr.mxu0 0.0
        %1140 = vmatpush1.xpose.msra.mxu0 0.0
        %1141 = vmatprep.subr.mxu0 0.0
        %1142 = vmatpush1.xpose.msra.mxu0 0.0
        %1143 = vmatprep.subr.mxu0 0.0
        %1144 = vmatpush1.xpose.msra.mxu0 0.0
        %1145 = vmatprep.subr.mxu0 0.0
        %1146 = vmatpush1.xpose.msra.mxu0 0.0
        %1147 = vmatprep.subr.mxu0 0.0
        %1148 = vmatpush1.xpose.msra.mxu0 0.0
        %1149 = vmatprep.mubr.f32.mxu0 0.0
        %1150 = vmatmul.mubr.f32.gmra.mrb[0].mxu0 %v720
        %v1151 = vpop.f32.mrb[0].mxu0
        %v1152 = vadd.f32 0.0, %v1151
        %v1153 = vpop.f32.mrb[0].mxu0
        %1154 = vdwg.mxu0
        %1155 = vmatprep.subr.mxu0 0.0
        %1156 = vmatpush1.xpose.msra.mxu0 %v572
        %1157 = vmatprep.subr.mxu0 0.0
        %1158 = vmatpush1.xpose.msra.mxu0 0.0
        %1159 = vmatprep.subr.mxu0 0.0
        %1160 = vmatpush1.xpose.msra.mxu0 0.0
        %1161 = vmatprep.subr.mxu0 0.0
        %1162 = vmatpush1.xpose.msra.mxu0 0.0
        %1163 = vmatprep.subr.mxu0 0.0
        %1164 = vmatpush1.xpose.msra.mxu0 0.0
        %1165 = vmatprep.subr.mxu0 0.0
        %1166 = vmatpush1.xpose.msra.mxu0 0.0
        %1167 = vmatprep.subr.mxu0 0.0
        %1168 = vmatpush1.xpose.msra.mxu0 0.0
        %1169 = vmatprep.subr.mxu0 0.0
        %1170 = vmatpush1.xpose.msra.mxu0 0.0
        %1171 = vmatprep.subr.mxu0 0.0
        %1172 = vmatpush1.xpose.msra.mxu0 0.0
        %1173 = vmatprep.subr.mxu0 0.0
        %1174 = vmatpush1.xpose.msra.mxu0 0.0
        %1175 = vmatprep.subr.mxu0 0.0
        %1176 = vmatpush1.xpose.msra.mxu0 0.0
        %1177 = vmatprep.subr.mxu0 0.0
        %1178 = vmatpush1.xpose.msra.mxu0 0.0
        %1179 = vmatprep.subr.mxu0 0.0
        %1180 = vmatpush1.xpose.msra.mxu0 0.0
        %1181 = vmatprep.subr.mxu0 0.0
        %1182 = vmatpush1.xpose.msra.mxu0 0.0
        %1183 = vmatprep.subr.mxu0 0.0
        %1184 = vmatpush1.xpose.msra.mxu0 0.0
        %1185 = vmatprep.subr.mxu0 0.0
        %1186 = vmatpush1.xpose.msra.mxu0 0.0
        %1187 = vmatprep.subr.mxu0 0.0
        %1188 = vmatpush1.xpose.msra.mxu0 0.0
        %1189 = vmatprep.subr.mxu0 0.0
        %1190 = vmatpush1.xpose.msra.mxu0 0.0
        %1191 = vmatprep.subr.mxu0 0.0
        %1192 = vmatpush1.xpose.msra.mxu0 0.0
        %1193 = vmatprep.subr.mxu0 0.0
        %1194 = vmatpush1.xpose.msra.mxu0 0.0
        %1195 = vmatprep.subr.mxu0 0.0
        %1196 = vmatpush1.xpose.msra.mxu0 0.0
        %1197 = vmatprep.subr.mxu0 0.0
        %1198 = vmatpush1.xpose.msra.mxu0 0.0
        %1199 = vmatprep.subr.mxu0 0.0
        %1200 = vmatpush1.xpose.msra.mxu0 0.0
        %1201 = vmatprep.subr.mxu0 0.0
        %1202 = vmatpush1.xpose.msra.mxu0 0.0
        %1203 = vmatprep.subr.mxu0 0.0
        %1204 = vmatpush1.xpose.msra.mxu0 0.0
        %1205 = vmatprep.subr.mxu0 0.0
        %1206 = vmatpush1.xpose.msra.mxu0 0.0
        %1207 = vmatprep.subr.mxu0 0.0
        %1208 = vmatpush1.xpose.msra.mxu0 0.0
        %1209 = vmatprep.subr.mxu0 0.0
        %1210 = vmatpush1.xpose.msra.mxu0 0.0
        %1211 = vmatprep.subr.mxu0 0.0
        %1212 = vmatpush1.xpose.msra.mxu0 0.0
        %1213 = vmatprep.subr.mxu0 0.0
        %1214 = vmatpush1.xpose.msra.mxu0 0.0
        %1215 = vmatprep.subr.mxu0 0.0
        %1216 = vmatpush1.xpose.msra.mxu0 0.0
        %1217 = vmatprep.subr.mxu0 0.0
        %1218 = vmatpush1.xpose.msra.mxu0 0.0
        %1219 = vmatprep.mubr.f32.mxu0 0.0
        %1220 = vmatmul.mubr.f32.gmra.mrb[0].mxu0 %v721
        %v1221 = vpop.f32.mrb[0].mxu0
        %v1222 = vadd.f32 0.0, %v1221
        %v1223 = vpop.f32.mrb[0].mxu0
        %1224 = vdwg.mxu0
        %1225 = vmatprep.subr.mxu0 0.0
        %1226 = vmatpush1.xpose.msra.mxu0 %v572
        %1227 = vmatprep.subr.mxu0 0.0
        %1228 = vmatpush1.xpose.msra.mxu0 0.0
        %1229 = vmatprep.subr.mxu0 0.0
        %1230 = vmatpush1.xpose.msra.mxu0 0.0
        %1231 = vmatprep.subr.mxu0 0.0
        %1232 = vmatpush1.xpose.msra.mxu0 0.0
        %1233 = vmatprep.subr.mxu0 0.0
        %1234 = vmatpush1.xpose.msra.mxu0 0.0
        %1235 = vmatprep.subr.mxu0 0.0
        %1236 = vmatpush1.xpose.msra.mxu0 0.0
        %1237 = vmatprep.subr.mxu0 0.0
        %1238 = vmatpush1.xpose.msra.mxu0 0.0
        %1239 = vmatprep.subr.mxu0 0.0
        %1240 = vmatpush1.xpose.msra.mxu0 0.0
        %1241 = vmatprep.subr.mxu0 0.0
        %1242 = vmatpush1.xpose.msra.mxu0 0.0
        %1243 = vmatprep.subr.mxu0 0.0
        %1244 = vmatpush1.xpose.msra.mxu0 0.0
        %1245 = vmatprep.subr.mxu0 0.0
        %1246 = vmatpush1.xpose.msra.mxu0 0.0
        %1247 = vmatprep.subr.mxu0 0.0
        %1248 = vmatpush1.xpose.msra.mxu0 0.0
        %1249 = vmatprep.subr.mxu0 0.0
        %1250 = vmatpush1.xpose.msra.mxu0 0.0
        %1251 = vmatprep.subr.mxu0 0.0
        %1252 = vmatpush1.xpose.msra.mxu0 0.0
        %1253 = vmatprep.subr.mxu0 0.0
        %1254 = vmatpush1.xpose.msra.mxu0 0.0
        %1255 = vmatprep.subr.mxu0 0.0
        %1256 = vmatpush1.xpose.msra.mxu0 0.0
        %1257 = vmatprep.subr.mxu0 0.0
        %1258 = vmatpush1.xpose.msra.mxu0 0.0
        %1259 = vmatprep.subr.mxu0 0.0
        %1260 = vmatpush1.xpose.msra.mxu0 0.0
        %1261 = vmatprep.subr.mxu0 0.0
        %1262 = vmatpush1.xpose.msra.mxu0 0.0
        %1263 = vmatprep.subr.mxu0 0.0
        %1264 = vmatpush1.xpose.msra.mxu0 0.0
        %1265 = vmatprep.subr.mxu0 0.0
        %1266 = vmatpush1.xpose.msra.mxu0 0.0
        %1267 = vmatprep.subr.mxu0 0.0
        %1268 = vmatpush1.xpose.msra.mxu0 0.0
        %1269 = vmatprep.subr.mxu0 0.0
        %1270 = vmatpush1.xpose.msra.mxu0 0.0
        %1271 = vmatprep.subr.mxu0 0.0
        %1272 = vmatpush1.xpose.msra.mxu0 0.0
        %1273 = vmatprep.subr.mxu0 0.0
        %1274 = vmatpush1.xpose.msra.mxu0 0.0
        %1275 = vmatprep.subr.mxu0 0.0
        %1276 = vmatpush1.xpose.msra.mxu0 0.0
        %1277 = vmatprep.subr.mxu0 0.0
        %1278 = vmatpush1.xpose.msra.mxu0 0.0
        %1279 = vmatprep.subr.mxu0 0.0
        %1280 = vmatpush1.xpose.msra.mxu0 0.0
        %1281 = vmatprep.subr.mxu0 0.0
        %1282 = vmatpush1.xpose.msra.mxu0 0.0
        %1283 = vmatprep.subr.mxu0 0.0
        %1284 = vmatpush1.xpose.msra.mxu0 0.0
        %1285 = vmatprep.subr.mxu0 0.0
        %1286 = vmatpush1.xpose.msra.mxu0 0.0
        %1287 = vmatprep.subr.mxu0 0.0
        %1288 = vmatpush1.xpose.msra.mxu0 0.0
        %1289 = vmatprep.mubr.f32.mxu0 0.0
        %1290 = vmatmul.mubr.f32.gmra.mrb[0].mxu0 %v722
        %v1291 = vpop.f32.mrb[0].mxu0
        %v1292 = vadd.f32 0.0, %v1291
        %v1293 = vpop.f32.mrb[0].mxu0
        %1294 = vdwg.mxu0
        %1295 = vmatprep.subr.mxu0 0.0
        %1296 = vmatpush1.xpose.msra.mxu0 %v572
        %1297 = vmatprep.subr.mxu0 0.0
        %1298 = vmatpush1.xpose.msra.mxu0 0.0
        %1299 = vmatprep.subr.mxu0 0.0
        %1300 = vmatpush1.xpose.msra.mxu0 0.0
        %1301 = vmatprep.subr.mxu0 0.0
        %1302 = vmatpush1.xpose.msra.mxu0 0.0
        %1303 = vmatprep.subr.mxu0 0.0
        %1304 = vmatpush1.xpose.msra.mxu0 0.0
        %1305 = vmatprep.subr.mxu0 0.0
        %1306 = vmatpush1.xpose.msra.mxu0 0.0
        %1307 = vmatprep.subr.mxu0 0.0
        %1308 = vmatpush1.xpose.msra.mxu0 0.0
        %1309 = vmatprep.subr.mxu0 0.0
        %1310 = vmatpush1.xpose.msra.mxu0 0.0
        %1311 = vmatprep.subr.mxu0 0.0
        %1312 = vmatpush1.xpose.msra.mxu0 0.0
        %1313 = vmatprep.subr.mxu0 0.0
        %1314 = vmatpush1.xpose.msra.mxu0 0.0
        %1315 = vmatprep.subr.mxu0 0.0
        %1316 = vmatpush1.xpose.msra.mxu0 0.0
        %1317 = vmatprep.subr.mxu0 0.0
        %1318 = vmatpush1.xpose.msra.mxu0 0.0
        %1319 = vmatprep.subr.mxu0 0.0
        %1320 = vmatpush1.xpose.msra.mxu0 0.0
        %1321 = vmatprep.subr.mxu0 0.0
        %1322 = vmatpush1.xpose.msra.mxu0 0.0
        %1323 = vmatprep.subr.mxu0 0.0
        %1324 = vmatpush1.xpose.msra.mxu0 0.0
        %1325 = vmatprep.subr.mxu0 0.0
        %1326 = vmatpush1.xpose.msra.mxu0 0.0
        %1327 = vmatprep.subr.mxu0 0.0
        %1328 = vmatpush1.xpose.msra.mxu0 0.0
        %1329 = vmatprep.subr.mxu0 0.0
        %1330 = vmatpush1.xpose.msra.mxu0 0.0
        %1331 = vmatprep.subr.mxu0 0.0
        %1332 = vmatpush1.xpose.msra.mxu0 0.0
        %1333 = vmatprep.subr.mxu0 0.0
        %1334 = vmatpush1.xpose.msra.mxu0 0.0
        %1335 = vmatprep.subr.mxu0 0.0
        %1336 = vmatpush1.xpose.msra.mxu0 0.0
        %1337 = vmatprep.subr.mxu0 0.0
        %1338 = vmatpush1.xpose.msra.mxu0 0.0
        %1339 = vmatprep.subr.mxu0 0.0
        %1340 = vmatpush1.xpose.msra.mxu0 0.0
        %1341 = vmatprep.subr.mxu0 0.0
        %1342 = vmatpush1.xpose.msra.mxu0 0.0
        %1343 = vmatprep.subr.mxu0 0.0
        %1344 = vmatpush1.xpose.msra.mxu0 0.0
        %1345 = vmatprep.subr.mxu0 0.0
        %1346 = vmatpush1.xpose.msra.mxu0 0.0
        %1347 = vmatprep.subr.mxu0 0.0
        %1348 = vmatpush1.xpose.msra.mxu0 0.0
        %1349 = vmatprep.subr.mxu0 0.0
        %1350 = vmatpush1.xpose.msra.mxu0 0.0
        %1351 = vmatprep.subr.mxu0 0.0
        %1352 = vmatpush1.xpose.msra.mxu0 0.0
        %1353 = vmatprep.subr.mxu0 0.0
        %1354 = vmatpush1.xpose.msra.mxu0 0.0
        %1355 = vmatprep.subr.mxu0 0.0
        %1356 = vmatpush1.xpose.msra.mxu0 0.0
        %1357 = vmatprep.subr.mxu0 0.0
        %1358 = vmatpush1.xpose.msra.mxu0 0.0
        %1359 = vmatprep.mubr.f32.mxu0 0.0
        %1360 = vmatmul.mubr.f32.gmra.mrb[0].mxu0 %v723
        %v1361 = vpop.f32.mrb[0].mxu0
        %v1362 = vadd.f32 0.0, %v1361
        %v1363 = vpop.f32.mrb[0].mxu0
        %1364 = vdwg.mxu0
        %1365 = vmatprep.subr.mxu0 0.0
        %1366 = vmatpush1.xpose.msra.mxu0 %v572
        %1367 = vmatprep.subr.mxu0 0.0
        %1368 = vmatpush1.xpose.msra.mxu0 0.0
        %1369 = vmatprep.subr.mxu0 0.0
        %1370 = vmatpush1.xpose.msra.mxu0 0.0
        %1371 = vmatprep.subr.mxu0 0.0
        %1372 = vmatpush1.xpose.msra.mxu0 0.0
        %1373 = vmatprep.subr.mxu0 0.0
        %1374 = vmatpush1.xpose.msra.mxu0 0.0
        %1375 = vmatprep.subr.mxu0 0.0
        %1376 = vmatpush1.xpose.msra.mxu0 0.0
        %1377 = vmatprep.subr.mxu0 0.0
        %1378 = vmatpush1.xpose.msra.mxu0 0.0
        %1379 = vmatprep.subr.mxu0 0.0
        %1380 = vmatpush1.xpose.msra.mxu0 0.0
        %1381 = vmatprep.subr.mxu0 0.0
        %1382 = vmatpush1.xpose.msra.mxu0 0.0
        %1383 = vmatprep.subr.mxu0 0.0
        %1384 = vmatpush1.xpose.msra.mxu0 0.0
        %1385 = vmatprep.subr.mxu0 0.0
        %1386 = vmatpush1.xpose.msra.mxu0 0.0
        %1387 = vmatprep.subr.mxu0 0.0
        %1388 = vmatpush1.xpose.msra.mxu0 0.0
        %1389 = vmatprep.subr.mxu0 0.0
        %1390 = vmatpush1.xpose.msra.mxu0 0.0
        %1391 = vmatprep.subr.mxu0 0.0
        %1392 = vmatpush1.xpose.msra.mxu0 0.0
        %1393 = vmatprep.subr.mxu0 0.0
        %1394 = vmatpush1.xpose.msra.mxu0 0.0
        %1395 = vmatprep.subr.mxu0 0.0
        %1396 = vmatpush1.xpose.msra.mxu0 0.0
        %1397 = vmatprep.subr.mxu0 0.0
        %1398 = vmatpush1.xpose.msra.mxu0 0.0
        %1399 = vmatprep.subr.mxu0 0.0
        %1400 = vmatpush1.xpose.msra.mxu0 0.0
        %1401 = vmatprep.subr.mxu0 0.0
        %1402 = vmatpush1.xpose.msra.mxu0 0.0
        %1403 = vmatprep.subr.mxu0 0.0
        %1404 = vmatpush1.xpose.msra.mxu0 0.0
        %1405 = vmatprep.subr.mxu0 0.0
        %1406 = vmatpush1.xpose.msra.mxu0 0.0
        %1407 = vmatprep.subr.mxu0 0.0
        %1408 = vmatpush1.xpose.msra.mxu0 0.0
        %1409 = vmatprep.subr.mxu0 0.0
        %1410 = vmatpush1.xpose.msra.mxu0 0.0
        %1411 = vmatprep.subr.mxu0 0.0
        %1412 = vmatpush1.xpose.msra.mxu0 0.0
        %1413 = vmatprep.subr.mxu0 0.0
        %1414 = vmatpush1.xpose.msra.mxu0 0.0
        %1415 = vmatprep.subr.mxu0 0.0
        %1416 = vmatpush1.xpose.msra.mxu0 0.0
        %1417 = vmatprep.subr.mxu0 0.0
        %1418 = vmatpush1.xpose.msra.mxu0 0.0
        %1419 = vmatprep.subr.mxu0 0.0
        %1420 = vmatpush1.xpose.msra.mxu0 0.0
        %1421 = vmatprep.subr.mxu0 0.0
        %1422 = vmatpush1.xpose.msra.mxu0 0.0
        %1423 = vmatprep.subr.mxu0 0.0
        %1424 = vmatpush1.xpose.msra.mxu0 0.0
        %1425 = vmatprep.subr.mxu0 0.0
        %1426 = vmatpush1.xpose.msra.mxu0 0.0
        %1427 = vmatprep.subr.mxu0 0.0
        %1428 = vmatpush1.xpose.msra.mxu0 0.0
        %1429 = vmatprep.mubr.f32.mxu0 0.0
        %1430 = vmatmul.mubr.f32.gmra.mrb[0].mxu0 %v724
        %v1431 = vpop.f32.mrb[0].mxu0
        %v1432 = vadd.f32 0.0, %v1431
        %v1433 = vpop.f32.mrb[0].mxu0
        %1434 = vdwg.mxu0
        %vm1435 = vcmask 64512
        %v1436 = vsel %vm1435, %v802, -inf
        %1437 = vmax.xlane.f32.xlu0 %v1436
        %v1438 = vpop.xlane.xlu0 %1437
        %v1439 = vsel %vm1435, %v872, -inf
        %1440 = vmax.xlane.f32.xlu0 %v1439
        %v1441 = vpop.xlane.xlu0 %1440
        %v1442 = vsel %vm1435, %v942, -inf
        %1443 = vmax.xlane.f32.xlu0 %v1442
        %v1444 = vpop.xlane.xlu0 %1443
        %v1445 = vsel %vm1435, %v1012, -inf
        %1446 = vmax.xlane.f32.xlu0 %v1445
        %v1447 = vpop.xlane.xlu0 %1446
        %v1448 = vsel %vm1435, %v1082, -inf
        %1449 = vmax.xlane.f32.xlu0 %v1448
        %v1450 = vpop.xlane.xlu0 %1449
        %v1451 = vsel %vm1435, %v1152, -inf
        %1452 = vmax.xlane.f32.xlu0 %v1451
        %v1453 = vpop.xlane.xlu0 %1452
        %v1454 = vsel %vm1435, %v1222, -inf
        %1455 = vmax.xlane.f32.xlu0 %v1454
        %v1456 = vpop.xlane.xlu0 %1455
        %v1457 = vsel %vm1435, %v1292, -inf
        %1458 = vmax.xlane.f32.xlu0 %v1457
        %v1459 = vpop.xlane.xlu0 %1458
        %v1460 = vsel %vm1435, %v1362, -inf
        %1461 = vmax.xlane.f32.xlu0 %v1460
        %v1462 = vpop.xlane.xlu0 %1461
        %v1463 = vsel %vm1435, %v1432, -inf
        %1464 = vmax.xlane.f32.xlu0 %v1463
        %v1465 = vpop.xlane.xlu0 %1464
        %v1466 = vsub.f32 %v802, %v1438
        %v1467 = vsub.f32 %v872, %v1441
        %v1468 = vsub.f32 %v942, %v1444
        %v1469 = vsub.f32 %v1012, %v1447
        %v1470 = vsub.f32 %v1082, %v1450
        %v1471 = vsub.f32 %v1152, %v1453
        %v1472 = vsub.f32 %v1222, %v1456
        %v1473 = vsub.f32 %v1292, %v1459
        %v1474 = vsub.f32 %v1362, %v1462
        %v1475 = vsub.f32 %v1432, %v1465
        %v1476 = vmul.f32 %v1466, 1.442695
        %v1477 = vpow.pop %v1476
        %v1478 = vmul.f32 %v1467, 1.442695
        %v1479 = vpow.pop %v1478
        %v1480 = vmul.f32 %v1468, 1.442695
        %v1481 = vpow.pop %v1480
        %v1482 = vmul.f32 %v1469, 1.442695
        %v1483 = vpow.pop %v1482
        %v1484 = vmul.f32 %v1470, 1.442695
        %v1485 = vpow.pop %v1484
        %v1486 = vmul.f32 %v1471, 1.442695
        %v1487 = vpow.pop %v1486
        %v1488 = vmul.f32 %v1472, 1.442695
        %v1489 = vpow.pop %v1488
        %v1490 = vmul.f32 %v1473, 1.442695
        %v1491 = vpow.pop %v1490
        %v1492 = vmul.f32 %v1474, 1.442695
        %v1493 = vpow.pop %v1492
        %v1494 = vmul.f32 %v1475, 1.442695
        %v1495 = vpow.pop %v1494
        %v1496 = vsel %vm1435, %v1477, 0.0
        %1497 = vadd.xlane.f32.xlu0 %v1496
        %v1498 = vpop.xlane.xlu0 %1497
        %v1499 = vsel %vm1435, %v1479, 0.0
        %1500 = vadd.xlane.f32.xlu0 %v1499
        %v1501 = vpop.xlane.xlu0 %1500
        %v1502 = vsel %vm1435, %v1481, 0.0
        %1503 = vadd.xlane.f32.xlu0 %v1502
        %v1504 = vpop.xlane.xlu0 %1503
        %v1505 = vsel %vm1435, %v1483, 0.0
        %1506 = vadd.xlane.f32.xlu0 %v1505
        %v1507 = vpop.xlane.xlu0 %1506
        %v1508 = vsel %vm1435, %v1485, 0.0
        %1509 = vadd.xlane.f32.xlu0 %v1508
        %v1510 = vpop.xlane.xlu0 %1509
        %v1511 = vsel %vm1435, %v1487, 0.0
        %1512 = vadd.xlane.f32.xlu0 %v1511
        %v1513 = vpop.xlane.xlu0 %1512
        %v1514 = vsel %vm1435, %v1489, 0.0
        %1515 = vadd.xlane.f32.xlu0 %v1514
        %v1516 = vpop.xlane.xlu0 %1515
        %v1517 = vsel %vm1435, %v1491, 0.0
        %1518 = vadd.xlane.f32.xlu0 %v1517
        %v1519 = vpop.xlane.xlu0 %1518
        %v1520 = vsel %vm1435, %v1493, 0.0
        %1521 = vadd.xlane.f32.xlu0 %v1520
        %v1522 = vpop.xlane.xlu0 %1521
        %v1523 = vsel %vm1435, %v1495, 0.0
        %1524 = vadd.xlane.f32.xlu0 %v1523
        %v1525 = vpop.xlane.xlu0 %1524
        %v1526 = vrcp.pop %v1498
        %v1527 = vrcp.pop %v1501
        %v1528 = vrcp.pop %v1504
        %v1529 = vrcp.pop %v1507
        %v1530 = vrcp.pop %v1510
        %v1531 = vrcp.pop %v1513
        %v1532 = vrcp.pop %v1516
        %v1533 = vrcp.pop %v1519
        %v1534 = vrcp.pop %v1522
        %v1535 = vrcp.pop %v1525
        %v1536 = vmul.f32 %v1477, %v1526
        %v1537 = vmul.f32 %v1479, %v1527
        %v1538 = vmul.f32 %v1481, %v1528
        %v1539 = vmul.f32 %v1483, %v1529
        %v1540 = vmul.f32 %v1485, %v1530
        %v1541 = vmul.f32 %v1487, %v1531
        %v1542 = vmul.f32 %v1489, %v1532
        %v1543 = vmul.f32 %v1491, %v1533
        %v1544 = vmul.f32 %v1493, %v1534
        %v1545 = vmul.f32 %v1495, %v1535
        %v1547 = vsel %vm1435, %v1536, 0
        %1549 = vmatprep.subr.mxu0 0.0
        %1550 = vmatpush1.msra.mxu0 %v725
        %1551 = vmatprep.subr.mxu0 0.0
        %1552 = vmatpush1.msra.mxu0 0.0
        %1553 = vmatprep.subr.mxu0 0.0
        %1554 = vmatpush1.msra.mxu0 0.0
        %1555 = vmatprep.subr.mxu0 0.0
        %1556 = vmatpush1.msra.mxu0 0.0
        %1557 = vmatprep.subr.mxu0 0.0
        %1558 = vmatpush1.msra.mxu0 0.0
        %1559 = vmatprep.subr.mxu0 0.0
        %1560 = vmatpush1.msra.mxu0 0.0
        %1561 = vmatprep.subr.mxu0 0.0
        %1562 = vmatpush1.msra.mxu0 0.0
        %1563 = vmatprep.subr.mxu0 0.0
        %1564 = vmatpush1.msra.mxu0 0.0
        %1565 = vmatprep.subr.mxu0 0.0
        %1566 = vmatpush1.msra.mxu0 0.0
        %1567 = vmatprep.subr.mxu0 0.0
        %1568 = vmatpush1.msra.mxu0 0.0
        %1569 = vmatprep.subr.mxu0 0.0
        %1570 = vmatpush1.msra.mxu0 0.0
        %1571 = vmatprep.subr.mxu0 0.0
        %1572 = vmatpush1.msra.mxu0 0.0
        %1573 = vmatprep.subr.mxu0 0.0
        %1574 = vmatpush1.msra.mxu0 0.0
        %1575 = vmatprep.subr.mxu0 0.0
        %1576 = vmatpush1.msra.mxu0 0.0
        %1577 = vmatprep.subr.mxu0 0.0
        %1578 = vmatpush1.msra.mxu0 0.0
        %1579 = vmatprep.subr.mxu0 0.0
        %1580 = vmatpush1.msra.mxu0 0.0
        %1581 = vmatprep.subr.mxu0 0.0
        %1582 = vmatpush1.msra.mxu0 0.0
        %1583 = vmatprep.subr.mxu0 0.0
        %1584 = vmatpush1.msra.mxu0 0.0
        %1585 = vmatprep.subr.mxu0 0.0
        %1586 = vmatpush1.msra.mxu0 0.0
        %1587 = vmatprep.subr.mxu0 0.0
        %1588 = vmatpush1.msra.mxu0 0.0
        %1589 = vmatprep.subr.mxu0 0.0
        %1590 = vmatpush1.msra.mxu0 0.0
        %1591 = vmatprep.subr.mxu0 0.0
        %1592 = vmatpush1.msra.mxu0 0.0
        %1593 = vmatprep.subr.mxu0 0.0
        %1594 = vmatpush1.msra.mxu0 0.0
        %1595 = vmatprep.subr.mxu0 0.0
        %1596 = vmatpush1.msra.mxu0 0.0
        %1597 = vmatprep.subr.mxu0 0.0
        %1598 = vmatpush1.msra.mxu0 0.0
        %1599 = vmatprep.subr.mxu0 0.0
        %1600 = vmatpush1.msra.mxu0 0.0
        %1601 = vmatprep.subr.mxu0 0.0
        %1602 = vmatpush1.msra.mxu0 0.0
        %1603 = vmatprep.subr.mxu0 0.0
        %1604 = vmatpush1.msra.mxu0 0.0
        %1605 = vmatprep.subr.mxu0 0.0
        %1606 = vmatpush1.msra.mxu0 0.0
        %1607 = vmatprep.subr.mxu0 0.0
        %1608 = vmatpush1.msra.mxu0 0.0
        %1609 = vmatprep.subr.mxu0 0.0
        %1610 = vmatpush1.msra.mxu0 0.0
        %1611 = vmatprep.subr.mxu0 0.0
        %1612 = vmatpush1.msra.mxu0 0.0
        %1613 = vmatprep.mubr.f32.mxu0 0.0
        %1614 = vmatmul.mubr.f32.gmra.mrb[0].mxu0 %v1547
        %v1615 = vpop.f32.mrb[0].mxu0
        %v1616 = vadd.f32 0.0, %v1615
        %v1617 = vpop.f32.mrb[0].mxu0
        %1618 = vdwg.mxu0
        %v1620 = vsel %vm1435, %v1537, 0
        %1622 = vmatprep.subr.mxu0 0.0
        %1623 = vmatpush1.msra.mxu0 %v726
        %1624 = vmatprep.subr.mxu0 0.0
        %1625 = vmatpush1.msra.mxu0 0.0
        %1626 = vmatprep.subr.mxu0 0.0
        %1627 = vmatpush1.msra.mxu0 0.0
        %1628 = vmatprep.subr.mxu0 0.0
        %1629 = vmatpush1.msra.mxu0 0.0
        %1630 = vmatprep.subr.mxu0 0.0
        %1631 = vmatpush1.msra.mxu0 0.0
        %1632 = vmatprep.subr.mxu0 0.0
        %1633 = vmatpush1.msra.mxu0 0.0
        %1634 = vmatprep.subr.mxu0 0.0
        %1635 = vmatpush1.msra.mxu0 0.0
        %1636 = vmatprep.subr.mxu0 0.0
        %1637 = vmatpush1.msra.mxu0 0.0
        %1638 = vmatprep.subr.mxu0 0.0
        %1639 = vmatpush1.msra.mxu0 0.0
        %1640 = vmatprep.subr.mxu0 0.0
        %1641 = vmatpush1.msra.mxu0 0.0
        %1642 = vmatprep.subr.mxu0 0.0
        %1643 = vmatpush1.msra.mxu0 0.0
        %1644 = vmatprep.subr.mxu0 0.0
        %1645 = vmatpush1.msra.mxu0 0.0
        %1646 = vmatprep.subr.mxu0 0.0
        %1647 = vmatpush1.msra.mxu0 0.0
        %1648 = vmatprep.subr.mxu0 0.0
        %1649 = vmatpush1.msra.mxu0 0.0
        %1650 = vmatprep.subr.mxu0 0.0
        %1651 = vmatpush1.msra.mxu0 0.0
        %1652 = vmatprep.subr.mxu0 0.0
        %1653 = vmatpush1.msra.mxu0 0.0
        %1654 = vmatprep.subr.mxu0 0.0
        %1655 = vmatpush1.msra.mxu0 0.0
        %1656 = vmatprep.subr.mxu0 0.0
        %1657 = vmatpush1.msra.mxu0 0.0
        %1658 = vmatprep.subr.mxu0 0.0
        %1659 = vmatpush1.msra.mxu0 0.0
        %1660 = vmatprep.subr.mxu0 0.0
        %1661 = vmatpush1.msra.mxu0 0.0
        %1662 = vmatprep.subr.mxu0 0.0
        %1663 = vmatpush1.msra.mxu0 0.0
        %1664 = vmatprep.subr.mxu0 0.0
        %1665 = vmatpush1.msra.mxu0 0.0
        %1666 = vmatprep.subr.mxu0 0.0
        %1667 = vmatpush1.msra.mxu0 0.0
        %1668 = vmatprep.subr.mxu0 0.0
        %1669 = vmatpush1.msra.mxu0 0.0
        %1670 = vmatprep.subr.mxu0 0.0
        %1671 = vmatpush1.msra.mxu0 0.0
        %1672 = vmatprep.subr.mxu0 0.0
        %1673 = vmatpush1.msra.mxu0 0.0
        %1674 = vmatprep.subr.mxu0 0.0
        %1675 = vmatpush1.msra.mxu0 0.0
        %1676 = vmatprep.subr.mxu0 0.0
        %1677 = vmatpush1.msra.mxu0 0.0
        %1678 = vmatprep.subr.mxu0 0.0
        %1679 = vmatpush1.msra.mxu0 0.0
        %1680 = vmatprep.subr.mxu0 0.0
        %1681 = vmatpush1.msra.mxu0 0.0
        %1682 = vmatprep.subr.mxu0 0.0
        %1683 = vmatpush1.msra.mxu0 0.0
        %1684 = vmatprep.subr.mxu0 0.0
        %1685 = vmatpush1.msra.mxu0 0.0
        %1686 = vmatprep.mubr.f32.mxu0 0.0
        %1687 = vmatmul.mubr.f32.gmra.mrb[0].mxu0 %v1620
        %v1688 = vpop.f32.mrb[0].mxu0
        %v1689 = vadd.f32 0.0, %v1688
        %v1690 = vpop.f32.mrb[0].mxu0
        %1691 = vdwg.mxu0
        %v1693 = vsel %vm1435, %v1538, 0
        %1695 = vmatprep.subr.mxu0 0.0
        %1696 = vmatpush1.msra.mxu0 %v727
        %1697 = vmatprep.subr.mxu0 0.0
        %1698 = vmatpush1.msra.mxu0 0.0
        %1699 = vmatprep.subr.mxu0 0.0
        %1700 = vmatpush1.msra.mxu0 0.0
        %1701 = vmatprep.subr.mxu0 0.0
        %1702 = vmatpush1.msra.mxu0 0.0
        %1703 = vmatprep.subr.mxu0 0.0
        %1704 = vmatpush1.msra.mxu0 0.0
        %1705 = vmatprep.subr.mxu0 0.0
        %1706 = vmatpush1.msra.mxu0 0.0
        %1707 = vmatprep.subr.mxu0 0.0
        %1708 = vmatpush1.msra.mxu0 0.0
        %1709 = vmatprep.subr.mxu0 0.0
        %1710 = vmatpush1.msra.mxu0 0.0
        %1711 = vmatprep.subr.mxu0 0.0
        %1712 = vmatpush1.msra.mxu0 0.0
        %1713 = vmatprep.subr.mxu0 0.0
        %1714 = vmatpush1.msra.mxu0 0.0
        %1715 = vmatprep.subr.mxu0 0.0
        %1716 = vmatpush1.msra.mxu0 0.0
        %1717 = vmatprep.subr.mxu0 0.0
        %1718 = vmatpush1.msra.mxu0 0.0
        %1719 = vmatprep.subr.mxu0 0.0
        %1720 = vmatpush1.msra.mxu0 0.0
        %1721 = vmatprep.subr.mxu0 0.0
        %1722 = vmatpush1.msra.mxu0 0.0
        %1723 = vmatprep.subr.mxu0 0.0
        %1724 = vmatpush1.msra.mxu0 0.0
        %1725 = vmatprep.subr.mxu0 0.0
        %1726 = vmatpush1.msra.mxu0 0.0
        %1727 = vmatprep.subr.mxu0 0.0
        %1728 = vmatpush1.msra.mxu0 0.0
        %1729 = vmatprep.subr.mxu0 0.0
        %1730 = vmatpush1.msra.mxu0 0.0
        %1731 = vmatprep.subr.mxu0 0.0
        %1732 = vmatpush1.msra.mxu0 0.0
        %1733 = vmatprep.subr.mxu0 0.0
        %1734 = vmatpush1.msra.mxu0 0.0
        %1735 = vmatprep.subr.mxu0 0.0
        %1736 = vmatpush1.msra.mxu0 0.0
        %1737 = vmatprep.subr.mxu0 0.0
        %1738 = vmatpush1.msra.mxu0 0.0
        %1739 = vmatprep.subr.mxu0 0.0
        %1740 = vmatpush1.msra.mxu0 0.0
        %1741 = vmatprep.subr.mxu0 0.0
        %1742 = vmatpush1.msra.mxu0 0.0
        %1743 = vmatprep.subr.mxu0 0.0
        %1744 = vmatpush1.msra.mxu0 0.0
        %1745 = vmatprep.subr.mxu0 0.0
        %1746 = vmatpush1.msra.mxu0 0.0
        %1747 = vmatprep.subr.mxu0 0.0
        %1748 = vmatpush1.msra.mxu0 0.0
        %1749 = vmatprep.subr.mxu0 0.0
        %1750 = vmatpush1.msra.mxu0 0.0
        %1751 = vmatprep.subr.mxu0 0.0
        %1752 = vmatpush1.msra.mxu0 0.0
        %1753 = vmatprep.subr.mxu0 0.0
        %1754 = vmatpush1.msra.mxu0 0.0
        %1755 = vmatprep.subr.mxu0 0.0
        %1756 = vmatpush1.msra.mxu0 0.0
        %1757 = vmatprep.subr.mxu0 0.0
        %1758 = vmatpush1.msra.mxu0 0.0
        %1759 = vmatprep.mubr.f32.mxu0 0.0
        %1760 = vmatmul.mubr.f32.gmra.mrb[0].mxu0 %v1693
        %v1761 = vpop.f32.mrb[0].mxu0
        %v1762 = vadd.f32 0.0, %v1761
        %v1763 = vpop.f32.mrb[0].mxu0
        %1764 = vdwg.mxu0
        %v1766 = vsel %vm1435, %v1539, 0
        %1768 = vmatprep.subr.mxu0 0.0
        %1769 = vmatpush1.msra.mxu0 %v728
        %1770 = vmatprep.subr.mxu0 0.0
        %1771 = vmatpush1.msra.mxu0 0.0
        %1772 = vmatprep.subr.mxu0 0.0
        %1773 = vmatpush1.msra.mxu0 0.0
        %1774 = vmatprep.subr.mxu0 0.0
        %1775 = vmatpush1.msra.mxu0 0.0
        %1776 = vmatprep.subr.mxu0 0.0
        %1777 = vmatpush1.msra.mxu0 0.0
        %1778 = vmatprep.subr.mxu0 0.0
        %1779 = vmatpush1.msra.mxu0 0.0
        %1780 = vmatprep.subr.mxu0 0.0
        %1781 = vmatpush1.msra.mxu0 0.0
        %1782 = vmatprep.subr.mxu0 0.0
        %1783 = vmatpush1.msra.mxu0 0.0
        %1784 = vmatprep.subr.mxu0 0.0
        %1785 = vmatpush1.msra.mxu0 0.0
        %1786 = vmatprep.subr.mxu0 0.0
        %1787 = vmatpush1.msra.mxu0 0.0
        %1788 = vmatprep.subr.mxu0 0.0
        %1789 = vmatpush1.msra.mxu0 0.0
        %1790 = vmatprep.subr.mxu0 0.0
        %1791 = vmatpush1.msra.mxu0 0.0
        %1792 = vmatprep.subr.mxu0 0.0
        %1793 = vmatpush1.msra.mxu0 0.0
        %1794 = vmatprep.subr.mxu0 0.0
        %1795 = vmatpush1.msra.mxu0 0.0
        %1796 = vmatprep.subr.mxu0 0.0
        %1797 = vmatpush1.msra.mxu0 0.0
        %1798 = vmatprep.subr.mxu0 0.0
        %1799 = vmatpush1.msra.mxu0 0.0
        %1800 = vmatprep.subr.mxu0 0.0
        %1801 = vmatpush1.msra.mxu0 0.0
        %1802 = vmatprep.subr.mxu0 0.0
        %1803 = vmatpush1.msra.mxu0 0.0
        %1804 = vmatprep.subr.mxu0 0.0
        %1805 = vmatpush1.msra.mxu0 0.0
        %1806 = vmatprep.subr.mxu0 0.0
        %1807 = vmatpush1.msra.mxu0 0.0
        %1808 = vmatprep.subr.mxu0 0.0
        %1809 = vmatpush1.msra.mxu0 0.0
        %1810 = vmatprep.subr.mxu0 0.0
        %1811 = vmatpush1.msra.mxu0 0.0
        %1812 = vmatprep.subr.mxu0 0.0
        %1813 = vmatpush1.msra.mxu0 0.0
        %1814 = vmatprep.subr.mxu0 0.0
        %1815 = vmatpush1.msra.mxu0 0.0
        %1816 = vmatprep.subr.mxu0 0.0
        %1817 = vmatpush1.msra.mxu0 0.0
        %1818 = vmatprep.subr.mxu0 0.0
        %1819 = vmatpush1.msra.mxu0 0.0
        %1820 = vmatprep.subr.mxu0 0.0
        %1821 = vmatpush1.msra.mxu0 0.0
        %1822 = vmatprep.subr.mxu0 0.0
        %1823 = vmatpush1.msra.mxu0 0.0
        %1824 = vmatprep.subr.mxu0 0.0
        %1825 = vmatpush1.msra.mxu0 0.0
        %1826 = vmatprep.subr.mxu0 0.0
        %1827 = vmatpush1.msra.mxu0 0.0
        %1828 = vmatprep.subr.mxu0 0.0
        %1829 = vmatpush1.msra.mxu0 0.0
        %1830 = vmatprep.subr.mxu0 0.0
        %1831 = vmatpush1.msra.mxu0 0.0
        %1832 = vmatprep.mubr.f32.mxu0 0.0
        %1833 = vmatmul.mubr.f32.gmra.mrb[0].mxu0 %v1766
        %v1834 = vpop.f32.mrb[0].mxu0
        %v1835 = vadd.f32 0.0, %v1834
        %v1836 = vpop.f32.mrb[0].mxu0
        %1837 = vdwg.mxu0
        %v1839 = vsel %vm1435, %v1540, 0
        %1841 = vmatprep.subr.mxu0 0.0
        %1842 = vmatpush1.msra.mxu0 %v729
        %1843 = vmatprep.subr.mxu0 0.0
        %1844 = vmatpush1.msra.mxu0 0.0
        %1845 = vmatprep.subr.mxu0 0.0
        %1846 = vmatpush1.msra.mxu0 0.0
        %1847 = vmatprep.subr.mxu0 0.0
        %1848 = vmatpush1.msra.mxu0 0.0
        %1849 = vmatprep.subr.mxu0 0.0
        %1850 = vmatpush1.msra.mxu0 0.0
        %1851 = vmatprep.subr.mxu0 0.0
        %1852 = vmatpush1.msra.mxu0 0.0
        %1853 = vmatprep.subr.mxu0 0.0
        %1854 = vmatpush1.msra.mxu0 0.0
        %1855 = vmatprep.subr.mxu0 0.0
        %1856 = vmatpush1.msra.mxu0 0.0
        %1857 = vmatprep.subr.mxu0 0.0
        %1858 = vmatpush1.msra.mxu0 0.0
        %1859 = vmatprep.subr.mxu0 0.0
        %1860 = vmatpush1.msra.mxu0 0.0
        %1861 = vmatprep.subr.mxu0 0.0
        %1862 = vmatpush1.msra.mxu0 0.0
        %1863 = vmatprep.subr.mxu0 0.0
        %1864 = vmatpush1.msra.mxu0 0.0
        %1865 = vmatprep.subr.mxu0 0.0
        %1866 = vmatpush1.msra.mxu0 0.0
        %1867 = vmatprep.subr.mxu0 0.0
        %1868 = vmatpush1.msra.mxu0 0.0
        %1869 = vmatprep.subr.mxu0 0.0
        %1870 = vmatpush1.msra.mxu0 0.0
        %1871 = vmatprep.subr.mxu0 0.0
        %1872 = vmatpush1.msra.mxu0 0.0
        %1873 = vmatprep.subr.mxu0 0.0
        %1874 = vmatpush1.msra.mxu0 0.0
        %1875 = vmatprep.subr.mxu0 0.0
        %1876 = vmatpush1.msra.mxu0 0.0
        %1877 = vmatprep.subr.mxu0 0.0
        %1878 = vmatpush1.msra.mxu0 0.0
        %1879 = vmatprep.subr.mxu0 0.0
        %1880 = vmatpush1.msra.mxu0 0.0
        %1881 = vmatprep.subr.mxu0 0.0
        %1882 = vmatpush1.msra.mxu0 0.0
        %1883 = vmatprep.subr.mxu0 0.0
        %1884 = vmatpush1.msra.mxu0 0.0
        %1885 = vmatprep.subr.mxu0 0.0
        %1886 = vmatpush1.msra.mxu0 0.0
        %1887 = vmatprep.subr.mxu0 0.0
        %1888 = vmatpush1.msra.mxu0 0.0
        %1889 = vmatprep.subr.mxu0 0.0
        %1890 = vmatpush1.msra.mxu0 0.0
        %1891 = vmatprep.subr.mxu0 0.0
        %1892 = vmatpush1.msra.mxu0 0.0
        %1893 = vmatprep.subr.mxu0 0.0
        %1894 = vmatpush1.msra.mxu0 0.0
        %1895 = vmatprep.subr.mxu0 0.0
        %1896 = vmatpush1.msra.mxu0 0.0
        %1897 = vmatprep.subr.mxu0 0.0
        %1898 = vmatpush1.msra.mxu0 0.0
        %1899 = vmatprep.subr.mxu0 0.0
        %1900 = vmatpush1.msra.mxu0 0.0
        %1901 = vmatprep.subr.mxu0 0.0
        %1902 = vmatpush1.msra.mxu0 0.0
        %1903 = vmatprep.subr.mxu0 0.0
        %1904 = vmatpush1.msra.mxu0 0.0
        %1905 = vmatprep.mubr.f32.mxu0 0.0
        %1906 = vmatmul.mubr.f32.gmra.mrb[0].mxu0 %v1839
        %v1907 = vpop.f32.mrb[0].mxu0
        %v1908 = vadd.f32 0.0, %v1907
        %v1909 = vpop.f32.mrb[0].mxu0
        %1910 = vdwg.mxu0
        %v1912 = vsel %vm1435, %v1541, 0
        %1914 = vmatprep.subr.mxu0 0.0
        %1915 = vmatpush1.msra.mxu0 %v730
        %1916 = vmatprep.subr.mxu0 0.0
        %1917 = vmatpush1.msra.mxu0 0.0
        %1918 = vmatprep.subr.mxu0 0.0
        %1919 = vmatpush1.msra.mxu0 0.0
        %1920 = vmatprep.subr.mxu0 0.0
        %1921 = vmatpush1.msra.mxu0 0.0
        %1922 = vmatprep.subr.mxu0 0.0
        %1923 = vmatpush1.msra.mxu0 0.0
        %1924 = vmatprep.subr.mxu0 0.0
        %1925 = vmatpush1.msra.mxu0 0.0
        %1926 = vmatprep.subr.mxu0 0.0
        %1927 = vmatpush1.msra.mxu0 0.0
        %1928 = vmatprep.subr.mxu0 0.0
        %1929 = vmatpush1.msra.mxu0 0.0
        %1930 = vmatprep.subr.mxu0 0.0
        %1931 = vmatpush1.msra.mxu0 0.0
        %1932 = vmatprep.subr.mxu0 0.0
        %1933 = vmatpush1.msra.mxu0 0.0
        %1934 = vmatprep.subr.mxu0 0.0
        %1935 = vmatpush1.msra.mxu0 0.0
        %1936 = vmatprep.subr.mxu0 0.0
        %1937 = vmatpush1.msra.mxu0 0.0
        %1938 = vmatprep.subr.mxu0 0.0
        %1939 = vmatpush1.msra.mxu0 0.0
        %1940 = vmatprep.subr.mxu0 0.0
        %1941 = vmatpush1.msra.mxu0 0.0
        %1942 = vmatprep.subr.mxu0 0.0
        %1943 = vmatpush1.msra.mxu0 0.0
        %1944 = vmatprep.subr.mxu0 0.0
        %1945 = vmatpush1.msra.mxu0 0.0
        %1946 = vmatprep.subr.mxu0 0.0
        %1947 = vmatpush1.msra.mxu0 0.0
        %1948 = vmatprep.subr.mxu0 0.0
        %1949 = vmatpush1.msra.mxu0 0.0
        %1950 = vmatprep.subr.mxu0 0.0
        %1951 = vmatpush1.msra.mxu0 0.0
        %1952 = vmatprep.subr.mxu0 0.0
        %1953 = vmatpush1.msra.mxu0 0.0
        %1954 = vmatprep.subr.mxu0 0.0
        %1955 = vmatpush1.msra.mxu0 0.0
        %1956 = vmatprep.subr.mxu0 0.0
        %1957 = vmatpush1.msra.mxu0 0.0
        %1958 = vmatprep.subr.mxu0 0.0
        %1959 = vmatpush1.msra.mxu0 0.0
        %1960 = vmatprep.subr.mxu0 0.0
        %1961 = vmatpush1.msra.mxu0 0.0
        %1962 = vmatprep.subr.mxu0 0.0
        %1963 = vmatpush1.msra.mxu0 0.0
        %1964 = vmatprep.subr.mxu0 0.0
        %1965 = vmatpush1.msra.mxu0 0.0
        %1966 = vmatprep.subr.mxu0 0.0
        %1967 = vmatpush1.msra.mxu0 0.0
        %1968 = vmatprep.subr.mxu0 0.0
        %1969 = vmatpush1.msra.mxu0 0.0
        %1970 = vmatprep.subr.mxu0 0.0
        %1971 = vmatpush1.msra.mxu0 0.0
        %1972 = vmatprep.subr.mxu0 0.0
        %1973 = vmatpush1.msra.mxu0 0.0
        %1974 = vmatprep.subr.mxu0 0.0
        %1975 = vmatpush1.msra.mxu0 0.0
        %1976 = vmatprep.subr.mxu0 0.0
        %1977 = vmatpush1.msra.mxu0 0.0
        %1978 = vmatprep.mubr.f32.mxu0 0.0
        %1979 = vmatmul.mubr.f32.gmra.mrb[0].mxu0 %v1912
        %v1980 = vpop.f32.mrb[0].mxu0
        %v1981 = vadd.f32 0.0, %v1980
        %v1982 = vpop.f32.mrb[0].mxu0
        %1983 = vdwg.mxu0
        %v1985 = vsel %vm1435, %v1542, 0
        %1987 = vmatprep.subr.mxu0 0.0
        %1988 = vmatpush1.msra.mxu0 %v731
        %1989 = vmatprep.subr.mxu0 0.0
        %1990 = vmatpush1.msra.mxu0 0.0
        %1991 = vmatprep.subr.mxu0 0.0
        %1992 = vmatpush1.msra.mxu0 0.0
        %1993 = vmatprep.subr.mxu0 0.0
        %1994 = vmatpush1.msra.mxu0 0.0
        %1995 = vmatprep.subr.mxu0 0.0
        %1996 = vmatpush1.msra.mxu0 0.0
        %1997 = vmatprep.subr.mxu0 0.0
        %1998 = vmatpush1.msra.mxu0 0.0
        %1999 = vmatprep.subr.mxu0 0.0
        %2000 = vmatpush1.msra.mxu0 0.0
        %2001 = vmatprep.subr.mxu0 0.0
        %2002 = vmatpush1.msra.mxu0 0.0
        %2003 = vmatprep.subr.mxu0 0.0
        %2004 = vmatpush1.msra.mxu0 0.0
        %2005 = vmatprep.subr.mxu0 0.0
        %2006 = vmatpush1.msra.mxu0 0.0
        %2007 = vmatprep.subr.mxu0 0.0
        %2008 = vmatpush1.msra.mxu0 0.0
        %2009 = vmatprep.subr.mxu0 0.0
        %2010 = vmatpush1.msra.mxu0 0.0
        %2011 = vmatprep.subr.mxu0 0.0
        %2012 = vmatpush1.msra.mxu0 0.0
        %2013 = vmatprep.subr.mxu0 0.0
        %2014 = vmatpush1.msra.mxu0 0.0
        %2015 = vmatprep.subr.mxu0 0.0
        %2016 = vmatpush1.msra.mxu0 0.0
        %2017 = vmatprep.subr.mxu0 0.0
        %2018 = vmatpush1.msra.mxu0 0.0
        %2019 = vmatprep.subr.mxu0 0.0
        %2020 = vmatpush1.msra.mxu0 0.0
        %2021 = vmatprep.subr.mxu0 0.0
        %2022 = vmatpush1.msra.mxu0 0.0
        %2023 = vmatprep.subr.mxu0 0.0
        %2024 = vmatpush1.msra.mxu0 0.0
        %2025 = vmatprep.subr.mxu0 0.0
        %2026 = vmatpush1.msra.mxu0 0.0
        %2027 = vmatprep.subr.mxu0 0.0
        %2028 = vmatpush1.msra.mxu0 0.0
        %2029 = vmatprep.subr.mxu0 0.0
        %2030 = vmatpush1.msra.mxu0 0.0
        %2031 = vmatprep.subr.mxu0 0.0
        %2032 = vmatpush1.msra.mxu0 0.0
        %2033 = vmatprep.subr.mxu0 0.0
        %2034 = vmatpush1.msra.mxu0 0.0
        %2035 = vmatprep.subr.mxu0 0.0
        %2036 = vmatpush1.msra.mxu0 0.0
        %2037 = vmatprep.subr.mxu0 0.0
        %2038 = vmatpush1.msra.mxu0 0.0
        %2039 = vmatprep.subr.mxu0 0.0
        %2040 = vmatpush1.msra.mxu0 0.0
        %2041 = vmatprep.subr.mxu0 0.0
        %2042 = vmatpush1.msra.mxu0 0.0
        %2043 = vmatprep.subr.mxu0 0.0
        %2044 = vmatpush1.msra.mxu0 0.0
        %2045 = vmatprep.subr.mxu0 0.0
        %2046 = vmatpush1.msra.mxu0 0.0
        %2047 = vmatprep.subr.mxu0 0.0
        %2048 = vmatpush1.msra.mxu0 0.0
        %2049 = vmatprep.subr.mxu0 0.0
        %2050 = vmatpush1.msra.mxu0 0.0
        %2051 = vmatprep.mubr.f32.mxu0 0.0
        %2052 = vmatmul.mubr.f32.gmra.mrb[0].mxu0 %v1985
        %v2053 = vpop.f32.mrb[0].mxu0
        %v2054 = vadd.f32 0.0, %v2053
        %v2055 = vpop.f32.mrb[0].mxu0
        %2056 = vdwg.mxu0
        %v2058 = vsel %vm1435, %v1543, 0
        %2060 = vmatprep.subr.mxu0 0.0
        %2061 = vmatpush1.msra.mxu0 %v732
        %2062 = vmatprep.subr.mxu0 0.0
        %2063 = vmatpush1.msra.mxu0 0.0
        %2064 = vmatprep.subr.mxu0 0.0
        %2065 = vmatpush1.msra.mxu0 0.0
        %2066 = vmatprep.subr.mxu0 0.0
        %2067 = vmatpush1.msra.mxu0 0.0
        %2068 = vmatprep.subr.mxu0 0.0
        %2069 = vmatpush1.msra.mxu0 0.0
        %2070 = vmatprep.subr.mxu0 0.0
        %2071 = vmatpush1.msra.mxu0 0.0
        %2072 = vmatprep.subr.mxu0 0.0
        %2073 = vmatpush1.msra.mxu0 0.0
        %2074 = vmatprep.subr.mxu0 0.0
        %2075 = vmatpush1.msra.mxu0 0.0
        %2076 = vmatprep.subr.mxu0 0.0
        %2077 = vmatpush1.msra.mxu0 0.0
        %2078 = vmatprep.subr.mxu0 0.0
        %2079 = vmatpush1.msra.mxu0 0.0
        %2080 = vmatprep.subr.mxu0 0.0
        %2081 = vmatpush1.msra.mxu0 0.0
        %2082 = vmatprep.subr.mxu0 0.0
        %2083 = vmatpush1.msra.mxu0 0.0
        %2084 = vmatprep.subr.mxu0 0.0
        %2085 = vmatpush1.msra.mxu0 0.0
        %2086 = vmatprep.subr.mxu0 0.0
        %2087 = vmatpush1.msra.mxu0 0.0
        %2088 = vmatprep.subr.mxu0 0.0
        %2089 = vmatpush1.msra.mxu0 0.0
        %2090 = vmatprep.subr.mxu0 0.0
        %2091 = vmatpush1.msra.mxu0 0.0
        %2092 = vmatprep.subr.mxu0 0.0
        %2093 = vmatpush1.msra.mxu0 0.0
        %2094 = vmatprep.subr.mxu0 0.0
        %2095 = vmatpush1.msra.mxu0 0.0
        %2096 = vmatprep.subr.mxu0 0.0
        %2097 = vmatpush1.msra.mxu0 0.0
        %2098 = vmatprep.subr.mxu0 0.0
        %2099 = vmatpush1.msra.mxu0 0.0
        %2100 = vmatprep.subr.mxu0 0.0
        %2101 = vmatpush1.msra.mxu0 0.0
        %2102 = vmatprep.subr.mxu0 0.0
        %2103 = vmatpush1.msra.mxu0 0.0
        %2104 = vmatprep.subr.mxu0 0.0
        %2105 = vmatpush1.msra.mxu0 0.0
        %2106 = vmatprep.subr.mxu0 0.0
        %2107 = vmatpush1.msra.mxu0 0.0
        %2108 = vmatprep.subr.mxu0 0.0
        %2109 = vmatpush1.msra.mxu0 0.0
        %2110 = vmatprep.subr.mxu0 0.0
        %2111 = vmatpush1.msra.mxu0 0.0
        %2112 = vmatprep.subr.mxu0 0.0
        %2113 = vmatpush1.msra.mxu0 0.0
        %2114 = vmatprep.subr.mxu0 0.0
        %2115 = vmatpush1.msra.mxu0 0.0
        %2116 = vmatprep.subr.mxu0 0.0
        %2117 = vmatpush1.msra.mxu0 0.0
        %2118 = vmatprep.subr.mxu0 0.0
        %2119 = vmatpush1.msra.mxu0 0.0
        %2120 = vmatprep.subr.mxu0 0.0
        %2121 = vmatpush1.msra.mxu0 0.0
        %2122 = vmatprep.subr.mxu0 0.0
        %2123 = vmatpush1.msra.mxu0 0.0
        %2124 = vmatprep.mubr.f32.mxu0 0.0
        %2125 = vmatmul.mubr.f32.gmra.mrb[0].mxu0 %v2058
        %v2126 = vpop.f32.mrb[0].mxu0
        %v2127 = vadd.f32 0.0, %v2126
        %v2128 = vpop.f32.mrb[0].mxu0
        %2129 = vdwg.mxu0
        %v2131 = vsel %vm1435, %v1544, 0
        %2133 = vmatprep.subr.mxu0 0.0
        %2134 = vmatpush1.msra.mxu0 %v733
        %2135 = vmatprep.subr.mxu0 0.0
        %2136 = vmatpush1.msra.mxu0 0.0
        %2137 = vmatprep.subr.mxu0 0.0
        %2138 = vmatpush1.msra.mxu0 0.0
        %2139 = vmatprep.subr.mxu0 0.0
        %2140 = vmatpush1.msra.mxu0 0.0
        %2141 = vmatprep.subr.mxu0 0.0
        %2142 = vmatpush1.msra.mxu0 0.0
        %2143 = vmatprep.subr.mxu0 0.0
        %2144 = vmatpush1.msra.mxu0 0.0
        %2145 = vmatprep.subr.mxu0 0.0
        %2146 = vmatpush1.msra.mxu0 0.0
        %2147 = vmatprep.subr.mxu0 0.0
        %2148 = vmatpush1.msra.mxu0 0.0
        %2149 = vmatprep.subr.mxu0 0.0
        %2150 = vmatpush1.msra.mxu0 0.0
        %2151 = vmatprep.subr.mxu0 0.0
        %2152 = vmatpush1.msra.mxu0 0.0
        %2153 = vmatprep.subr.mxu0 0.0
        %2154 = vmatpush1.msra.mxu0 0.0
        %2155 = vmatprep.subr.mxu0 0.0
        %2156 = vmatpush1.msra.mxu0 0.0
        %2157 = vmatprep.subr.mxu0 0.0
        %2158 = vmatpush1.msra.mxu0 0.0
        %2159 = vmatprep.subr.mxu0 0.0
        %2160 = vmatpush1.msra.mxu0 0.0
        %2161 = vmatprep.subr.mxu0 0.0
        %2162 = vmatpush1.msra.mxu0 0.0
        %2163 = vmatprep.subr.mxu0 0.0
        %2164 = vmatpush1.msra.mxu0 0.0
        %2165 = vmatprep.subr.mxu0 0.0
        %2166 = vmatpush1.msra.mxu0 0.0
        %2167 = vmatprep.subr.mxu0 0.0
        %2168 = vmatpush1.msra.mxu0 0.0
        %2169 = vmatprep.subr.mxu0 0.0
        %2170 = vmatpush1.msra.mxu0 0.0
        %2171 = vmatprep.subr.mxu0 0.0
        %2172 = vmatpush1.msra.mxu0 0.0
        %2173 = vmatprep.subr.mxu0 0.0
        %2174 = vmatpush1.msra.mxu0 0.0
        %2175 = vmatprep.subr.mxu0 0.0
        %2176 = vmatpush1.msra.mxu0 0.0
        %2177 = vmatprep.subr.mxu0 0.0
        %2178 = vmatpush1.msra.mxu0 0.0
        %2179 = vmatprep.subr.mxu0 0.0
        %2180 = vmatpush1.msra.mxu0 0.0
        %2181 = vmatprep.subr.mxu0 0.0
        %2182 = vmatpush1.msra.mxu0 0.0
        %2183 = vmatprep.subr.mxu0 0.0
        %2184 = vmatpush1.msra.mxu0 0.0
        %2185 = vmatprep.subr.mxu0 0.0
        %2186 = vmatpush1.msra.mxu0 0.0
        %2187 = vmatprep.subr.mxu0 0.0
        %2188 = vmatpush1.msra.mxu0 0.0
        %2189 = vmatprep.subr.mxu0 0.0
        %2190 = vmatpush1.msra.mxu0 0.0
        %2191 = vmatprep.subr.mxu0 0.0
        %2192 = vmatpush1.msra.mxu0 0.0
        %2193 = vmatprep.subr.mxu0 0.0
        %2194 = vmatpush1.msra.mxu0 0.0
        %2195 = vmatprep.subr.mxu0 0.0
        %2196 = vmatpush1.msra.mxu0 0.0
        %2197 = vmatprep.mubr.f32.mxu0 0.0
        %2198 = vmatmul.mubr.f32.gmra.mrb[0].mxu0 %v2131
        %v2199 = vpop.f32.mrb[0].mxu0
        %v2200 = vadd.f32 0.0, %v2199
        %v2201 = vpop.f32.mrb[0].mxu0
        %2202 = vdwg.mxu0
        %v2204 = vsel %vm1435, %v1545, 0
        %2206 = vmatprep.subr.mxu0 0.0
        %2207 = vmatpush1.msra.mxu0 %v734
        %2208 = vmatprep.subr.mxu0 0.0
        %2209 = vmatpush1.msra.mxu0 0.0
        %2210 = vmatprep.subr.mxu0 0.0
        %2211 = vmatpush1.msra.mxu0 0.0
        %2212 = vmatprep.subr.mxu0 0.0
        %2213 = vmatpush1.msra.mxu0 0.0
        %2214 = vmatprep.subr.mxu0 0.0
        %2215 = vmatpush1.msra.mxu0 0.0
        %2216 = vmatprep.subr.mxu0 0.0
        %2217 = vmatpush1.msra.mxu0 0.0
        %2218 = vmatprep.subr.mxu0 0.0
        %2219 = vmatpush1.msra.mxu0 0.0
        %2220 = vmatprep.subr.mxu0 0.0
        %2221 = vmatpush1.msra.mxu0 0.0
        %2222 = vmatprep.subr.mxu0 0.0
        %2223 = vmatpush1.msra.mxu0 0.0
        %2224 = vmatprep.subr.mxu0 0.0
        %2225 = vmatpush1.msra.mxu0 0.0
        %2226 = vmatprep.subr.mxu0 0.0
        %2227 = vmatpush1.msra.mxu0 0.0
        %2228 = vmatprep.subr.mxu0 0.0
        %2229 = vmatpush1.msra.mxu0 0.0
        %2230 = vmatprep.subr.mxu0 0.0
        %2231 = vmatpush1.msra.mxu0 0.0
        %2232 = vmatprep.subr.mxu0 0.0
        %2233 = vmatpush1.msra.mxu0 0.0
        %2234 = vmatprep.subr.mxu0 0.0
        %2235 = vmatpush1.msra.mxu0 0.0
        %2236 = vmatprep.subr.mxu0 0.0
        %2237 = vmatpush1.msra.mxu0 0.0
        %2238 = vmatprep.subr.mxu0 0.0
        %2239 = vmatpush1.msra.mxu0 0.0
        %2240 = vmatprep.subr.mxu0 0.0
        %2241 = vmatpush1.msra.mxu0 0.0
        %2242 = vmatprep.subr.mxu0 0.0
        %2243 = vmatpush1.msra.mxu0 0.0
        %2244 = vmatprep.subr.mxu0 0.0
        %2245 = vmatpush1.msra.mxu0 0.0
        %2246 = vmatprep.subr.mxu0 0.0
        %2247 = vmatpush1.msra.mxu0 0.0
        %2248 = vmatprep.subr.mxu0 0.0
        %2249 = vmatpush1.msra.mxu0 0.0
        %2250 = vmatprep.subr.mxu0 0.0
        %2251 = vmatpush1.msra.mxu0 0.0
        %2252 = vmatprep.subr.mxu0 0.0
        %2253 = vmatpush1.msra.mxu0 0.0
        %2254 = vmatprep.subr.mxu0 0.0
        %2255 = vmatpush1.msra.mxu0 0.0
        %2256 = vmatprep.subr.mxu0 0.0
        %2257 = vmatpush1.msra.mxu0 0.0
        %2258 = vmatprep.subr.mxu0 0.0
        %2259 = vmatpush1.msra.mxu0 0.0
        %2260 = vmatprep.subr.mxu0 0.0
        %2261 = vmatpush1.msra.mxu0 0.0
        %2262 = vmatprep.subr.mxu0 0.0
        %2263 = vmatpush1.msra.mxu0 0.0
        %2264 = vmatprep.subr.mxu0 0.0
        %2265 = vmatpush1.msra.mxu0 0.0
        %2266 = vmatprep.subr.mxu0 0.0
        %2267 = vmatpush1.msra.mxu0 0.0
        %2268 = vmatprep.subr.mxu0 0.0
        %2269 = vmatpush1.msra.mxu0 0.0
        %2270 = vmatprep.mubr.f32.mxu0 0.0
        %2271 = vmatmul.mubr.f32.gmra.mrb[0].mxu0 %v2204
        %v2272 = vpop.f32.mrb[0].mxu0
        %v2273 = vadd.f32 0.0, %v2272
        %v2274 = vpop.f32.mrb[0].mxu0
        %2275 = vdwg.mxu0
        %v2276 = vadd.f32 %v1616, %v1689
        %v2277 = vadd.f32 %v2276, %v1762
        %v2278 = vadd.f32 %v2277, %v1835
        %v2279 = vadd.f32 %v2278, %v1908
        %v2280 = vadd.f32 %v2279, %v1981
        %v2281 = vadd.f32 %v2280, %v2054
        %v2282 = vadd.f32 %v2281, %v2127
        %v2283 = vadd.f32 %v2282, %v2200
        %v2284 = vadd.f32 %v2283, %v2273
        %v2285 = vld [vmem:[#allocation8] sm:$0xff]
        %v2286 = vld [vmem:[#allocation8 + $0x8] sm:$0xff]
        %v2287 = vld [vmem:[#allocation8 + $0x10] sm:$0xff]
        %v2288 = vld [vmem:[#allocation8 + $0x18] sm:$0xff]
        %v2289 = vld [vmem:[#allocation8 + $0x20] sm:$0xff]
        %v2290 = vld [vmem:[#allocation8 + $0x28] sm:$0xff]
        %v2291 = vld [vmem:[#allocation8 + $0x30] sm:$0xff]
        %v2292 = vld [vmem:[#allocation8 + $0x38] sm:$0xff]
        %v2293 = vld [vmem:[#allocation8 + $0x40] sm:$0xff]
        %v2294 = vld [vmem:[#allocation8 + $0x48] sm:$0xff]
        %v2295 = vld [vmem:[#allocation8 + $0x50] sm:$0xff]
        %v2296 = vld [vmem:[#allocation8 + $0x58] sm:$0xff]
        %v2297 = vld [vmem:[#allocation8 + $0x60] sm:$0xff]
        %v2298 = vld [vmem:[#allocation8 + $0x68] sm:$0xff]
        %v2299 = vld [vmem:[#allocation8 + $0x70] sm:$0xff]
        %v2300 = vld [vmem:[#allocation8 + $0x78] sm:$0xff]
        %v2301 = vlaneseq
        %v2302 = vshrl.u32 %v2301, 7
        %v2303 = vsub.s32 0, %v2302
        %v2304 = vrot.slane %v432, %v2303
        %2305 = vmatprep.subr.mxu0 0.0
        %2306 = vmatpush1.msra.mxu0 %v2285
        %2307 = vmatprep.subr.mxu0 0.0
        %2308 = vmatpush1.msra.mxu0 %v2286
        %2309 = vmatprep.subr.mxu0 0.0
        %2310 = vmatpush1.msra.mxu0 %v2287
        %2311 = vmatprep.subr.mxu0 0.0
        %2312 = vmatpush1.msra.mxu0 %v2288
        %2313 = vmatprep.subr.mxu0 0.0
        %2314 = vmatpush1.msra.mxu0 %v2289
        %2315 = vmatprep.subr.mxu0 0.0
        %2316 = vmatpush1.msra.mxu0 %v2290
        %2317 = vmatprep.subr.mxu0 0.0
        %2318 = vmatpush1.msra.mxu0 %v2291
        %2319 = vmatprep.subr.mxu0 0.0
        %2320 = vmatpush1.msra.mxu0 %v2292
        %2321 = vmatprep.subr.mxu0 0.0
        %2322 = vmatpush1.msra.mxu0 %v2293
        %2323 = vmatprep.subr.mxu0 0.0
        %2324 = vmatpush1.msra.mxu0 %v2294
        %2325 = vmatprep.subr.mxu0 0.0
        %2326 = vmatpush1.msra.mxu0 %v2295
        %2327 = vmatprep.subr.mxu0 0.0
        %2328 = vmatpush1.msra.mxu0 %v2296
        %2329 = vmatprep.subr.mxu0 0.0
        %2330 = vmatpush1.msra.mxu0 %v2297
        %2331 = vmatprep.subr.mxu0 0.0
        %2332 = vmatpush1.msra.mxu0 %v2298
        %2333 = vmatprep.subr.mxu0 0.0
        %2334 = vmatpush1.msra.mxu0 %v2299
        %2335 = vmatprep.subr.mxu0 0.0
        %2336 = vmatpush1.msra.mxu0 %v2300
        %2337 = vmatprep.subr.mxu0 0.0
        %2338 = vmatpush1.msra.mxu0 0.0
        %2339 = vmatprep.subr.mxu0 0.0
        %2340 = vmatpush1.msra.mxu0 0.0
        %2341 = vmatprep.subr.mxu0 0.0
        %2342 = vmatpush1.msra.mxu0 0.0
        %2343 = vmatprep.subr.mxu0 0.0
        %2344 = vmatpush1.msra.mxu0 0.0
        %2345 = vmatprep.subr.mxu0 0.0
        %2346 = vmatpush1.msra.mxu0 0.0
        %2347 = vmatprep.subr.mxu0 0.0
        %2348 = vmatpush1.msra.mxu0 0.0
        %2349 = vmatprep.subr.mxu0 0.0
        %2350 = vmatpush1.msra.mxu0 0.0
        %2351 = vmatprep.subr.mxu0 0.0
        %2352 = vmatpush1.msra.mxu0 0.0
        %2353 = vmatprep.subr.mxu0 0.0
        %2354 = vmatpush1.msra.mxu0 0.0
        %2355 = vmatprep.subr.mxu0 0.0
        %2356 = vmatpush1.msra.mxu0 0.0
        %2357 = vmatprep.subr.mxu0 0.0
        %2358 = vmatpush1.msra.mxu0 0.0
        %2359 = vmatprep.subr.mxu0 0.0
        %2360 = vmatpush1.msra.mxu0 0.0
        %2361 = vmatprep.subr.mxu0 0.0
        %2362 = vmatpush1.msra.mxu0 0.0
        %2363 = vmatprep.subr.mxu0 0.0
        %2364 = vmatpush1.msra.mxu0 0.0
        %2365 = vmatprep.subr.mxu0 0.0
        %2366 = vmatpush1.msra.mxu0 0.0
        %2367 = vmatprep.subr.mxu0 0.0
        %2368 = vmatpush1.msra.mxu0 0.0
        %2369 = vmatprep.mubr.f32.mxu0 0.0
        %2370 = vmatmul.mubr.f32.gmra.mrb[0].mxu0 %v2284
        %v2371 = vpop.f32.mrb[0].mxu0
        %v2372 = vadd.f32 %v2304, %v2371
        %v2373 = vpop.f32.mrb[0].mxu0
        %2374 = vdwg.mxu0
        %v2375 = vadd.f32 %v431, %v2372
        %2376 = vadd.xlane.f32.xlu0 %v2375
        %v2377 = vpop.xlane.xlu0 %2376
        %v2378 = vmul.f32 %v2377, 0.02
        %v2379 = vsub.f32 %v2375, %v2378
        %v2380 = vmul.f32 %v2379, %v437
        %v2381 = vmul.f32 %v2380, %v2380
        %2382 = vadd.xlane.f32.xlu0 %v2381
        %v2383 = vpop.xlane.xlu0 %2382
        %v2384 = vmul.f32 %v2383, 0.02
        %v2385 = vadd.f32 %v2384, 1e-05
        %v2386 = vrsqrt.pop %v2385
        %v2387 = vmul.f32 %v2380, %v2386
        %v2388 = vlaneseq
        %v2389 = vshrl.u32 %v2388, 7
        %v2390 = vsub.s32 2, %v2389
        %v2391 = vrot.slane %v432, %v2390
        %v2392 = vmul.f32 %v2387, %v2391
        %v2393 = vlaneseq
        %v2394 = vshrl.u32 %v2393, 7
        %v2395 = vsub.s32 3, %v2394
        %v2396 = vrot.slane %v432, %v2395
        %v2397 = vadd.f32 %v2392, %v2396
        %v2398 = vld [vmem:[#allocation10] sm:$0xff]
        %v2399 = vld [vmem:[#allocation10 + $0x8] sm:$0xff]
        %v2400 = vld [vmem:[#allocation10 + $0x10] sm:$0xff]
        %v2401 = vld [vmem:[#allocation10 + $0x18] sm:$0xff]
        %v2402 = vld [vmem:[#allocation10 + $0x20] sm:$0xff]
        %v2403 = vld [vmem:[#allocation10 + $0x28] sm:$0xff]
        %v2404 = vld [vmem:[#allocation10 + $0x30] sm:$0xff]
        %v2405 = vld [vmem:[#allocation10 + $0x38] sm:$0xff]
        %v2406 = vld [vmem:[#allocation10 + $0x40] sm:$0xff]
        %v2407 = vld [vmem:[#allocation10 + $0x48] sm:$0xff]
        %v2408 = vld [vmem:[#allocation10 + $0x50] sm:$0xff]
        %v2409 = vld [vmem:[#allocation10 + $0x58] sm:$0xff]
        %v2410 = vld [vmem:[#allocation10 + $0x60] sm:$0xff]
        %v2411 = vld [vmem:[#allocation10 + $0x68] sm:$0xff]
        %v2412 = vld [vmem:[#allocation10 + $0x70] sm:$0xff]
        %v2413 = vld [vmem:[#allocation10 + $0x78] sm:$0xff]
        %v2414 = vld [vmem:[#allocation10 + $0x80] sm:$0xff]
        %v2415 = vld [vmem:[#allocation10 + $0x88] sm:$0xff]
        %v2416 = vld [vmem:[#allocation10 + $0x90] sm:$0xff]
        %v2417 = vld [vmem:[#allocation10 + $0x98] sm:$0xff]
        %v2418 = vld [vmem:[#allocation10 + $0xa0] sm:$0xff]
        %v2419 = vld [vmem:[#allocation10 + $0xa8] sm:$0xff]
        %v2420 = vld [vmem:[#allocation10 + $0xb0] sm:$0xff]
        %v2421 = vld [vmem:[#allocation10 + $0xb8] sm:$0xff]
        %v2422 = vld [vmem:[#allocation10 + $0xc0] sm:$0xff]
        %v2423 = vld [vmem:[#allocation10 + $0xc8] sm:$0xff]
        %v2424 = vld [vmem:[#allocation10 + $0xd0] sm:$0xff]
        %v2425 = vld [vmem:[#allocation10 + $0xd8] sm:$0xff]
        %v2426 = vld [vmem:[#allocation10 + $0xe0] sm:$0xff]
        %v2427 = vld [vmem:[#allocation10 + $0xe8] sm:$0xff]
        %v2428 = vld [vmem:[#allocation10 + $0xf0] sm:$0xff]
        %v2429 = vld [vmem:[#allocation10 + $0xf8] sm:$0xff]
        %v2430 = vld [vmem:[#allocation10 + $0x100] sm:$0xff]
        %v2431 = vld [vmem:[#allocation10 + $0x108] sm:$0xff]
        %v2432 = vld [vmem:[#allocation10 + $0x110] sm:$0xff]
        %v2433 = vld [vmem:[#allocation10 + $0x118] sm:$0xff]
        %v2434 = vld [vmem:[#allocation10 + $0x120] sm:$0xff]
        %v2435 = vld [vmem:[#allocation10 + $0x128] sm:$0xff]
        %v2436 = vld [vmem:[#allocation10 + $0x130] sm:$0xff]
        %v2437 = vld [vmem:[#allocation10 + $0x138] sm:$0xff]
        %v2438 = vld [vmem:[#allocation10 + $0x140] sm:$0xff]
        %v2439 = vld [vmem:[#allocation10 + $0x148] sm:$0xff]
        %v2440 = vld [vmem:[#allocation10 + $0x150] sm:$0xff]
        %v2441 = vld [vmem:[#allocation10 + $0x158] sm:$0xff]
        %v2442 = vld [vmem:[#allocation10 + $0x160] sm:$0xff]
        %v2443 = vld [vmem:[#allocation10 + $0x168] sm:$0xff]
        %v2444 = vld [vmem:[#allocation10 + $0x170] sm:$0xff]
        %v2445 = vld [vmem:[#allocation10 + $0x178] sm:$0xff]
        %v2446 = vld [vmem:[#allocation10 + $0x180] sm:$0xff]
        %v2447 = vld [vmem:[#allocation10 + $0x188] sm:$0xff]
        %v2448 = vld [vmem:[#allocation10 + $0x190] sm:$0xff]
        %v2449 = vld [vmem:[#allocation10 + $0x198] sm:$0xff]
        %v2450 = vld [vmem:[#allocation10 + $0x1a0] sm:$0xff]
        %v2451 = vld [vmem:[#allocation10 + $0x1a8] sm:$0xff]
        %v2452 = vld [vmem:[#allocation10 + $0x1b0] sm:$0xff]
        %v2453 = vld [vmem:[#allocation10 + $0x1b8] sm:$0xff]
        %v2454 = vld [vmem:[#allocation10 + $0x1c0] sm:$0xff]
        %v2455 = vld [vmem:[#allocation10 + $0x1c8] sm:$0xff]
        %v2456 = vld [vmem:[#allocation10 + $0x1d0] sm:$0xff]
        %v2457 = vld [vmem:[#allocation10 + $0x1d8] sm:$0xff]
        %v2458 = vld [vmem:[#allocation10 + $0x1e0] sm:$0xff]
        %v2459 = vld [vmem:[#allocation10 + $0x1e8] sm:$0xff]
        %v2460 = vld [vmem:[#allocation10 + $0x1f0] sm:$0xff]
        %v2461 = vld [vmem:[#allocation10 + $0x1f8] sm:$0xff]
        %v2462 = vld [vmem:[#allocation10 + $0x200] sm:$0xff]
        %v2463 = vld [vmem:[#allocation10 + $0x208] sm:$0xff]
        %v2464 = vld [vmem:[#allocation10 + $0x210] sm:$0xff]
        %v2465 = vld [vmem:[#allocation10 + $0x218] sm:$0xff]
        %v2466 = vld [vmem:[#allocation10 + $0x220] sm:$0xff]
        %v2467 = vld [vmem:[#allocation10 + $0x228] sm:$0xff]
        %v2468 = vld [vmem:[#allocation10 + $0x230] sm:$0xff]
        %v2469 = vld [vmem:[#allocation10 + $0x238] sm:$0xff]
        %v2470 = vld [vmem:[#allocation10 + $0x240] sm:$0xff]
        %v2471 = vld [vmem:[#allocation10 + $0x248] sm:$0xff]
        %v2472 = vld [vmem:[#allocation10 + $0x250] sm:$0xff]
        %v2473 = vld [vmem:[#allocation10 + $0x258] sm:$0xff]
        %v2474 = vld [vmem:[#allocation10 + $0x260] sm:$0xff]
        %v2475 = vld [vmem:[#allocation10 + $0x268] sm:$0xff]
        %v2476 = vld [vmem:[#allocation10 + $0x270] sm:$0xff]
        %v2477 = vld [vmem:[#allocation10 + $0x278] sm:$0xff]
        %v2478 = vld [vmem:[#allocation10 + $0x280] sm:$0xff]
        %v2479 = vld [vmem:[#allocation10 + $0x288] sm:$0xff]
        %v2480 = vld [vmem:[#allocation10 + $0x290] sm:$0xff]
        %v2481 = vld [vmem:[#allocation10 + $0x298] sm:$0xff]
        %v2482 = vld [vmem:[#allocation10 + $0x2a0] sm:$0xff]
        %v2483 = vld [vmem:[#allocation10 + $0x2a8] sm:$0xff]
        %v2484 = vld [vmem:[#allocation10 + $0x2b0] sm:$0xff]
        %v2485 = vld [vmem:[#allocation10 + $0x2b8] sm:$0xff]
        %v2486 = vld [vmem:[#allocation10 + $0x2c0] sm:$0xff]
        %v2487 = vld [vmem:[#allocation10 + $0x2c8] sm:$0xff]
        %v2488 = vld [vmem:[#allocation10 + $0x2d0] sm:$0xff]
        %v2489 = vld [vmem:[#allocation10 + $0x2d8] sm:$0xff]
        %v2490 = vld [vmem:[#allocation10 + $0x2e0] sm:$0xff]
        %v2491 = vld [vmem:[#allocation10 + $0x2e8] sm:$0xff]
        %v2492 = vld [vmem:[#allocation10 + $0x2f0] sm:$0xff]
        %v2493 = vld [vmem:[#allocation10 + $0x2f8] sm:$0xff]
        %v2494 = vld [vmem:[#allocation10 + $0x300] sm:$0xff]
        %v2495 = vld [vmem:[#allocation10 + $0x308] sm:$0xff]
        %v2496 = vld [vmem:[#allocation10 + $0x310] sm:$0xff]
        %v2497 = vld [vmem:[#allocation10 + $0x318] sm:$0xff]
        %v2498 = vld [vmem:[#allocation10 + $0x320] sm:$0xff]
        %v2499 = vld [vmem:[#allocation10 + $0x328] sm:$0xff]
        %v2500 = vld [vmem:[#allocation10 + $0x330] sm:$0xff]
        %v2501 = vld [vmem:[#allocation10 + $0x338] sm:$0xff]
        %v2502 = vld [vmem:[#allocation10 + $0x340] sm:$0xff]
        %v2503 = vld [vmem:[#allocation10 + $0x348] sm:$0xff]
        %v2504 = vld [vmem:[#allocation10 + $0x350] sm:$0xff]
        %v2505 = vld [vmem:[#allocation10 + $0x358] sm:$0xff]
        %v2506 = vld [vmem:[#allocation10 + $0x360] sm:$0xff]
        %v2507 = vld [vmem:[#allocation10 + $0x368] sm:$0xff]
        %v2508 = vld [vmem:[#allocation10 + $0x370] sm:$0xff]
        %v2509 = vld [vmem:[#allocation10 + $0x378] sm:$0xff]
        %v2510 = vld [vmem:[#allocation10 + $0x380] sm:$0xff]
        %v2511 = vld [vmem:[#allocation10 + $0x388] sm:$0xff]
        %v2512 = vld [vmem:[#allocation10 + $0x390] sm:$0xff]
        %v2513 = vld [vmem:[#allocation10 + $0x398] sm:$0xff]
        %v2514 = vld [vmem:[#allocation10 + $0x3a0] sm:$0xff]
        %v2515 = vld [vmem:[#allocation10 + $0x3a8] sm:$0xff]
        %v2516 = vld [vmem:[#allocation10 + $0x3b0] sm:$0xff]
        %v2517 = vld [vmem:[#allocation10 + $0x3b8] sm:$0xff]
        %v2518 = vld [vmem:[#allocation10 + $0x3c0] sm:$0xff]
        %v2519 = vld [vmem:[#allocation10 + $0x3c8] sm:$0xff]
        %v2520 = vld [vmem:[#allocation10 + $0x3d0] sm:$0xff]
        %v2521 = vld [vmem:[#allocation10 + $0x3d8] sm:$0xff]
        %v2522 = vld [vmem:[#allocation10 + $0x3e0] sm:$0xff]
        %v2523 = vld [vmem:[#allocation10 + $0x3e8] sm:$0xff]
        %v2524 = vld [vmem:[#allocation10 + $0x3f0] sm:$0xff]
        %v2525 = vld [vmem:[#allocation10 + $0x3f8] sm:$0xff]
        %v2526 = vld [vmem:[#allocation10 + $0x400] sm:$0xff]
        %v2527 = vld [vmem:[#allocation10 + $0x408] sm:$0xff]
        %v2528 = vld [vmem:[#allocation10 + $0x410] sm:$0xff]
        %v2529 = vld [vmem:[#allocation10 + $0x418] sm:$0xff]
        %v2530 = vld [vmem:[#allocation10 + $0x420] sm:$0xff]
        %v2531 = vld [vmem:[#allocation10 + $0x428] sm:$0xff]
        %v2532 = vld [vmem:[#allocation10 + $0x430] sm:$0xff]
        %v2533 = vld [vmem:[#allocation10 + $0x438] sm:$0xff]
        %v2534 = vld [vmem:[#allocation10 + $0x440] sm:$0xff]
        %v2535 = vld [vmem:[#allocation10 + $0x448] sm:$0xff]
        %v2536 = vld [vmem:[#allocation10 + $0x450] sm:$0xff]
        %v2537 = vld [vmem:[#allocation10 + $0x458] sm:$0xff]
        %v2538 = vld [vmem:[#allocation10 + $0x460] sm:$0xff]
        %v2539 = vld [vmem:[#allocation10 + $0x468] sm:$0xff]
        %v2540 = vld [vmem:[#allocation10 + $0x470] sm:$0xff]
        %v2541 = vld [vmem:[#allocation10 + $0x478] sm:$0xff]
        %v2542 = vld [vmem:[#allocation10 + $0x480] sm:$0xff]
        %v2543 = vld [vmem:[#allocation10 + $0x488] sm:$0xff]
        %v2544 = vld [vmem:[#allocation10 + $0x490] sm:$0xff]
        %v2545 = vld [vmem:[#allocation10 + $0x498] sm:$0xff]
        %v2546 = vld [vmem:[#allocation10 + $0x4a0] sm:$0xff]
        %v2547 = vld [vmem:[#allocation10 + $0x4a8] sm:$0xff]
        %v2548 = vld [vmem:[#allocation10 + $0x4b0] sm:$0xff]
        %v2549 = vld [vmem:[#allocation10 + $0x4b8] sm:$0xff]
        %v2550 = vld [vmem:[#allocation10 + $0x4c0] sm:$0xff]
        %v2551 = vld [vmem:[#allocation10 + $0x4c8] sm:$0xff]
        %v2552 = vld [vmem:[#allocation10 + $0x4d0] sm:$0xff]
        %v2553 = vld [vmem:[#allocation10 + $0x4d8] sm:$0xff]
        %v2554 = vld [vmem:[#allocation10 + $0x4e0] sm:$0xff]
        %v2555 = vld [vmem:[#allocation10 + $0x4e8] sm:$0xff]
        %v2556 = vld [vmem:[#allocation10 + $0x4f0] sm:$0xff]
        %v2557 = vld [vmem:[#allocation10 + $0x4f8] sm:$0xff]
        %v2558 = vld [vmem:[#allocation10 + $0x500] sm:$0xff]
        %v2559 = vld [vmem:[#allocation10 + $0x508] sm:$0xff]
        %v2560 = vld [vmem:[#allocation10 + $0x510] sm:$0xff]
        %v2561 = vld [vmem:[#allocation10 + $0x518] sm:$0xff]
        %v2562 = vld [vmem:[#allocation10 + $0x520] sm:$0xff]
        %v2563 = vld [vmem:[#allocation10 + $0x528] sm:$0xff]
        %v2564 = vld [vmem:[#allocation10 + $0x530] sm:$0xff]
        %v2565 = vld [vmem:[#allocation10 + $0x538] sm:$0xff]
        %v2566 = vld [vmem:[#allocation10 + $0x540] sm:$0xff]
        %v2567 = vld [vmem:[#allocation10 + $0x548] sm:$0xff]
        %v2568 = vld [vmem:[#allocation10 + $0x550] sm:$0xff]
        %v2569 = vld [vmem:[#allocation10 + $0x558] sm:$0xff]
        %v2570 = vld [vmem:[#allocation10 + $0x560] sm:$0xff]
        %v2571 = vld [vmem:[#allocation10 + $0x568] sm:$0xff]
        %v2572 = vld [vmem:[#allocation10 + $0x570] sm:$0xff]
        %v2573 = vld [vmem:[#allocation10 + $0x578] sm:$0xff]
        %v2574 = vld [vmem:[#allocation10 + $0x580] sm:$0xff]
        %v2575 = vld [vmem:[#allocation10 + $0x588] sm:$0xff]
        %v2576 = vld [vmem:[#allocation10 + $0x590] sm:$0xff]
        %v2577 = vld [vmem:[#allocation10 + $0x598] sm:$0xff]
        %v2578 = vld [vmem:[#allocation10 + $0x5a0] sm:$0xff]
        %v2579 = vld [vmem:[#allocation10 + $0x5a8] sm:$0xff]
        %v2580 = vld [vmem:[#allocation10 + $0x5b0] sm:$0xff]
        %v2581 = vld [vmem:[#allocation10 + $0x5b8] sm:$0xff]
        %v2582 = vld [vmem:[#allocation10 + $0x5c0] sm:$0xff]
        %v2583 = vld [vmem:[#allocation10 + $0x5c8] sm:$0xff]
        %v2584 = vld [vmem:[#allocation10 + $0x5d0] sm:$0xff]
        %v2585 = vld [vmem:[#allocation10 + $0x5d8] sm:$0xff]
        %v2586 = vld [vmem:[#allocation10 + $0x5e0] sm:$0xff]
        %v2587 = vld [vmem:[#allocation10 + $0x5e8] sm:$0xff]
        %v2588 = vld [vmem:[#allocation10 + $0x5f0] sm:$0xff]
        %v2589 = vld [vmem:[#allocation10 + $0x5f8] sm:$0xff]
        %v2590 = vld [vmem:[#allocation10 + $0x600] sm:$0xff]
        %v2591 = vld [vmem:[#allocation10 + $0x608] sm:$0xff]
        %v2592 = vld [vmem:[#allocation10 + $0x610] sm:$0xff]
        %v2593 = vld [vmem:[#allocation10 + $0x618] sm:$0xff]
        %v2594 = vld [vmem:[#allocation10 + $0x620] sm:$0xff]
        %v2595 = vld [vmem:[#allocation10 + $0x628] sm:$0xff]
        %v2596 = vld [vmem:[#allocation10 + $0x630] sm:$0xff]
        %v2597 = vld [vmem:[#allocation10 + $0x638] sm:$0xff]
        %v2598 = vld [vmem:[#allocation10 + $0x640] sm:$0xff]
        %v2599 = vld [vmem:[#allocation10 + $0x648] sm:$0xff]
        %v2600 = vld [vmem:[#allocation10 + $0x650] sm:$0xff]
        %v2601 = vld [vmem:[#allocation10 + $0x658] sm:$0xff]
        %v2602 = vld [vmem:[#allocation10 + $0x660] sm:$0xff]
        %v2603 = vld [vmem:[#allocation10 + $0x668] sm:$0xff]
        %v2604 = vld [vmem:[#allocation10 + $0x670] sm:$0xff]
        %v2605 = vld [vmem:[#allocation10 + $0x678] sm:$0xff]
        %v2606 = vld [vmem:[#allocation10 + $0x680] sm:$0xff]
        %v2607 = vld [vmem:[#allocation10 + $0x688] sm:$0xff]
        %v2608 = vld [vmem:[#allocation10 + $0x690] sm:$0xff]
        %v2609 = vld [vmem:[#allocation10 + $0x698] sm:$0xff]
        %v2610 = vld [vmem:[#allocation10 + $0x6a0] sm:$0xff]
        %v2611 = vld [vmem:[#allocation10 + $0x6a8] sm:$0xff]
        %v2612 = vld [vmem:[#allocation10 + $0x6b0] sm:$0xff]
        %v2613 = vld [vmem:[#allocation10 + $0x6b8] sm:$0xff]
        %v2614 = vld [vmem:[#allocation10 + $0x6c0] sm:$0xff]
        %v2615 = vld [vmem:[#allocation10 + $0x6c8] sm:$0xff]
        %v2616 = vld [vmem:[#allocation10 + $0x6d0] sm:$0xff]
        %v2617 = vld [vmem:[#allocation10 + $0x6d8] sm:$0xff]
        %v2618 = vld [vmem:[#allocation10 + $0x6e0] sm:$0xff]
        %v2619 = vld [vmem:[#allocation10 + $0x6e8] sm:$0xff]
        %v2620 = vld [vmem:[#allocation10 + $0x6f0] sm:$0xff]
        %v2621 = vld [vmem:[#allocation10 + $0x6f8] sm:$0xff]
        %v2622 = vld [vmem:[#allocation10 + $0x700] sm:$0xff]
        %v2623 = vld [vmem:[#allocation10 + $0x708] sm:$0xff]
        %v2624 = vld [vmem:[#allocation10 + $0x710] sm:$0xff]
        %v2625 = vld [vmem:[#allocation10 + $0x718] sm:$0xff]
        %v2626 = vld [vmem:[#allocation10 + $0x720] sm:$0xff]
        %v2627 = vld [vmem:[#allocation10 + $0x728] sm:$0xff]
        %v2628 = vld [vmem:[#allocation10 + $0x730] sm:$0xff]
        %v2629 = vld [vmem:[#allocation10 + $0x738] sm:$0xff]
        %v2630 = vld [vmem:[#allocation10 + $0x740] sm:$0xff]
        %v2631 = vld [vmem:[#allocation10 + $0x748] sm:$0xff]
        %v2632 = vld [vmem:[#allocation10 + $0x750] sm:$0xff]
        %v2633 = vld [vmem:[#allocation10 + $0x758] sm:$0xff]
        %v2634 = vld [vmem:[#allocation10 + $0x760] sm:$0xff]
        %v2635 = vld [vmem:[#allocation10 + $0x768] sm:$0xff]
        %v2636 = vld [vmem:[#allocation10 + $0x770] sm:$0xff]
        %v2637 = vld [vmem:[#allocation10 + $0x778] sm:$0xff]
        %v2638 = vld [vmem:[#allocation10 + $0x780] sm:$0xff]
        %v2639 = vld [vmem:[#allocation10 + $0x788] sm:$0xff]
        %v2640 = vld [vmem:[#allocation10 + $0x790] sm:$0xff]
        %v2641 = vld [vmem:[#allocation10 + $0x798] sm:$0xff]
        %v2642 = vld [vmem:[#allocation10 + $0x7a0] sm:$0xff]
        %v2643 = vld [vmem:[#allocation10 + $0x7a8] sm:$0xff]
        %v2644 = vld [vmem:[#allocation10 + $0x7b0] sm:$0xff]
        %v2645 = vld [vmem:[#allocation10 + $0x7b8] sm:$0xff]
        %v2646 = vld [vmem:[#allocation10 + $0x7c0] sm:$0xff]
        %v2647 = vld [vmem:[#allocation10 + $0x7c8] sm:$0xff]
        %v2648 = vld [vmem:[#allocation10 + $0x7d0] sm:$0xff]
        %v2649 = vld [vmem:[#allocation10 + $0x7d8] sm:$0xff]
        %v2650 = vld [vmem:[#allocation10 + $0x7e0] sm:$0xff]
        %v2651 = vld [vmem:[#allocation10 + $0x7e8] sm:$0xff]
        %v2652 = vld [vmem:[#allocation10 + $0x7f0] sm:$0xff]
        %v2653 = vld [vmem:[#allocation10 + $0x7f8] sm:$0xff]
        %v2654 = vld [vmem:[%s5] sm:$0xff]
        %v2655 = vld [vmem:[%s5 + $0x8] sm:$0xff]
        %v2658 = vlaneseq
        %v2659 = vshrl.u32 %v2658, 7
        %v2660 = vsub.s32 0, %v2659
        %v2661 = vrot.slane %v2654, %v2660
        %v2662 = vlaneseq
        %v2663 = vshrl.u32 %v2662, 7
        %v2664 = vsub.s32 1, %v2663
        %v2665 = vrot.slane %v2654, %v2664
        %v2666 = vlaneseq
        %v2667 = vshrl.u32 %v2666, 7
        %v2668 = vsub.s32 2, %v2667
        %v2669 = vrot.slane %v2654, %v2668
        %v2670 = vlaneseq
        %v2671 = vshrl.u32 %v2670, 7
        %v2672 = vsub.s32 3, %v2671
        %v2673 = vrot.slane %v2654, %v2672
        %v2674 = vlaneseq
        %v2675 = vshrl.u32 %v2674, 7
        %v2676 = vsub.s32 4, %v2675
        %v2677 = vrot.slane %v2654, %v2676
        %v2678 = vlaneseq
        %v2679 = vshrl.u32 %v2678, 7
        %v2680 = vsub.s32 5, %v2679
        %v2681 = vrot.slane %v2654, %v2680
        %v2682 = vlaneseq
        %v2683 = vshrl.u32 %v2682, 7
        %v2684 = vsub.s32 6, %v2683
        %v2685 = vrot.slane %v2654, %v2684
        %v2686 = vlaneseq
        %v2687 = vshrl.u32 %v2686, 7
        %v2688 = vsub.s32 7, %v2687
        %v2689 = vrot.slane %v2654, %v2688
        %v2690 = vlaneseq
        %v2691 = vshrl.u32 %v2690, 7
        %v2692 = vsub.s32 0, %v2691
        %v2693 = vrot.slane %v2655, %v2692
        %v2694 = vlaneseq
        %v2695 = vshrl.u32 %v2694, 7
        %v2696 = vsub.s32 1, %v2695
        %v2697 = vrot.slane %v2655, %v2696
        %v2698 = vlaneseq
        %v2699 = vshrl.u32 %v2698, 7
        %v2700 = vsub.s32 2, %v2699
        %v2701 = vrot.slane %v2655, %v2700
        %v2702 = vlaneseq
        %v2703 = vshrl.u32 %v2702, 7
        %v2704 = vsub.s32 3, %v2703
        %v2705 = vrot.slane %v2655, %v2704
        %v2706 = vlaneseq
        %v2707 = vshrl.u32 %v2706, 7
        %v2708 = vsub.s32 4, %v2707
        %v2709 = vrot.slane %v2655, %v2708
        %v2710 = vlaneseq
        %v2711 = vshrl.u32 %v2710, 7
        %v2712 = vsub.s32 5, %v2711
        %v2713 = vrot.slane %v2655, %v2712
        %v2714 = vlaneseq
        %v2715 = vshrl.u32 %v2714, 7
        %v2716 = vsub.s32 6, %v2715
        %v2717 = vrot.slane %v2655, %v2716
        %v2718 = vlaneseq
        %v2719 = vshrl.u32 %v2718, 7
        %v2720 = vsub.s32 7, %v2719
        %v2721 = vrot.slane %v2655, %v2720
        %2738 = vmatprep.subr.mxu0 %v2399
        %2739 = vmatpush1.msra.mxu0 %v2398
        %2740 = vmatprep.subr.mxu0 %v2415
        %2741 = vmatpush1.msra.mxu0 %v2414
        %2742 = vmatprep.subr.mxu0 %v2431
        %2743 = vmatpush1.msra.mxu0 %v2430
        %2744 = vmatprep.subr.mxu0 %v2447
        %2745 = vmatpush1.msra.mxu0 %v2446
        %2746 = vmatprep.subr.mxu0 %v2463
        %2747 = vmatpush1.msra.mxu0 %v2462
        %2748 = vmatprep.subr.mxu0 %v2479
        %2749 = vmatpush1.msra.mxu0 %v2478
        %2750 = vmatprep.subr.mxu0 %v2495
        %2751 = vmatpush1.msra.mxu0 %v2494
        %2752 = vmatprep.subr.mxu0 %v2511
        %2753 = vmatpush1.msra.mxu0 %v2510
        %2754 = vmatprep.subr.mxu0 %v2527
        %2755 = vmatpush1.msra.mxu0 %v2526
        %2756 = vmatprep.subr.mxu0 %v2543
        %2757 = vmatpush1.msra.mxu0 %v2542
        %2758 = vmatprep.subr.mxu0 %v2559
        %2759 = vmatpush1.msra.mxu0 %v2558
        %2760 = vmatprep.subr.mxu0 %v2575
        %2761 = vmatpush1.msra.mxu0 %v2574
        %2762 = vmatprep.subr.mxu0 %v2591
        %2763 = vmatpush1.msra.mxu0 %v2590
        %2764 = vmatprep.subr.mxu0 %v2607
        %2765 = vmatpush1.msra.mxu0 %v2606
        %2766 = vmatprep.subr.mxu0 %v2623
        %2767 = vmatpush1.msra.mxu0 %v2622
        %2768 = vmatprep.subr.mxu0 %v2639
        %2769 = vmatpush1.msra.mxu0 %v2638
        %2770 = vmatprep.subr.mxu0 0.0
        %2771 = vmatpush1.msra.mxu0 0.0
        %2772 = vmatprep.subr.mxu0 0.0
        %2773 = vmatpush1.msra.mxu0 0.0
        %2774 = vmatprep.subr.mxu0 0.0
        %2775 = vmatpush1.msra.mxu0 0.0
        %2776 = vmatprep.subr.mxu0 0.0
        %2777 = vmatpush1.msra.mxu0 0.0
        %2778 = vmatprep.subr.mxu0 0.0
        %2779 = vmatpush1.msra.mxu0 0.0
        %2780 = vmatprep.subr.mxu0 0.0
        %2781 = vmatpush1.msra.mxu0 0.0
        %2782 = vmatprep.subr.mxu0 0.0
        %2783 = vmatpush1.msra.mxu0 0.0
        %2784 = vmatprep.subr.mxu0 0.0
        %2785 = vmatpush1.msra.mxu0 0.0
        %2786 = vmatprep.subr.mxu0 0.0
        %2787 = vmatpush1.msra.mxu0 0.0
        %2788 = vmatprep.subr.mxu0 0.0
        %2789 = vmatpush1.msra.mxu0 0.0
        %2790 = vmatprep.subr.mxu0 0.0
        %2791 = vmatpush1.msra.mxu0 0.0
        %2792 = vmatprep.subr.mxu0 0.0
        %2793 = vmatpush1.msra.mxu0 0.0
        %2794 = vmatprep.subr.mxu0 0.0
        %2795 = vmatpush1.msra.mxu0 0.0
        %2796 = vmatprep.subr.mxu0 0.0
        %2797 = vmatpush1.msra.mxu0 0.0
        %2798 = vmatprep.subr.mxu0 0.0
        %2799 = vmatpush1.msra.mxu0 0.0
        %2800 = vmatprep.subr.mxu0 0.0
        %2801 = vmatpush1.msra.mxu0 0.0
        %2802 = vmatprep.mubr.f32.mxu0 0.0
        %2803 = vmatmul.mubr.f32.gmra.mrb[0].mxu0 %v2397
        %v2804 = vpop.f32.mrb[0].mxu0
        %v2805 = vadd.f32 %v2661, %v2804
        %v2806 = vpop.f32.mrb[0].mxu0
        %v2807 = vadd.f32 %v2665, %v2806
        %2808 = vdwg.mxu0
        %2809 = vmatprep.subr.mxu0 %v2401
        %2810 = vmatpush1.msra.mxu0 %v2400
        %2811 = vmatprep.subr.mxu0 %v2417
        %2812 = vmatpush1.msra.mxu0 %v2416
        %2813 = vmatprep.subr.mxu0 %v2433
        %2814 = vmatpush1.msra.mxu0 %v2432
        %2815 = vmatprep.subr.mxu0 %v2449
        %2816 = vmatpush1.msra.mxu0 %v2448
        %2817 = vmatprep.subr.mxu0 %v2465
        %2818 = vmatpush1.msra.mxu0 %v2464
        %2819 = vmatprep.subr.mxu0 %v2481
        %2820 = vmatpush1.msra.mxu0 %v2480
        %2821 = vmatprep.subr.mxu0 %v2497
        %2822 = vmatpush1.msra.mxu0 %v2496
        %2823 = vmatprep.subr.mxu0 %v2513
        %2824 = vmatpush1.msra.mxu0 %v2512
        %2825 = vmatprep.subr.mxu0 %v2529
        %2826 = vmatpush1.msra.mxu0 %v2528
        %2827 = vmatprep.subr.mxu0 %v2545
        %2828 = vmatpush1.msra.mxu0 %v2544
        %2829 = vmatprep.subr.mxu0 %v2561
        %2830 = vmatpush1.msra.mxu0 %v2560
        %2831 = vmatprep.subr.mxu0 %v2577
        %2832 = vmatpush1.msra.mxu0 %v2576
        %2833 = vmatprep.subr.mxu0 %v2593
        %2834 = vmatpush1.msra.mxu0 %v2592
        %2835 = vmatprep.subr.mxu0 %v2609
        %2836 = vmatpush1.msra.mxu0 %v2608
        %2837 = vmatprep.subr.mxu0 %v2625
        %2838 = vmatpush1.msra.mxu0 %v2624
        %2839 = vmatprep.subr.mxu0 %v2641
        %2840 = vmatpush1.msra.mxu0 %v2640
        %2841 = vmatprep.subr.mxu0 0.0
        %2842 = vmatpush1.msra.mxu0 0.0
        %2843 = vmatprep.subr.mxu0 0.0
        %2844 = vmatpush1.msra.mxu0 0.0
        %2845 = vmatprep.subr.mxu0 0.0
        %2846 = vmatpush1.msra.mxu0 0.0
        %2847 = vmatprep.subr.mxu0 0.0
        %2848 = vmatpush1.msra.mxu0 0.0
        %2849 = vmatprep.subr.mxu0 0.0
        %2850 = vmatpush1.msra.mxu0 0.0
        %2851 = vmatprep.subr.mxu0 0.0
        %2852 = vmatpush1.msra.mxu0 0.0
        %2853 = vmatprep.subr.mxu0 0.0
        %2854 = vmatpush1.msra.mxu0 0.0
        %2855 = vmatprep.subr.mxu0 0.0
        %2856 = vmatpush1.msra.mxu0 0.0
        %2857 = vmatprep.subr.mxu0 0.0
        %2858 = vmatpush1.msra.mxu0 0.0
        %2859 = vmatprep.subr.mxu0 0.0
        %2860 = vmatpush1.msra.mxu0 0.0
        %2861 = vmatprep.subr.mxu0 0.0
        %2862 = vmatpush1.msra.mxu0 0.0
        %2863 = vmatprep.subr.mxu0 0.0
        %2864 = vmatpush1.msra.mxu0 0.0
        %2865 = vmatprep.subr.mxu0 0.0
        %2866 = vmatpush1.msra.mxu0 0.0
        %2867 = vmatprep.subr.mxu0 0.0
        %2868 = vmatpush1.msra.mxu0 0.0
        %2869 = vmatprep.subr.mxu0 0.0
        %2870 = vmatpush1.msra.mxu0 0.0
        %2871 = vmatprep.subr.mxu0 0.0
        %2872 = vmatpush1.msra.mxu0 0.0
        %2873 = vmatprep.mubr.f32.mxu0 0.0
        %2874 = vmatmul.mubr.f32.gmra.mrb[0].mxu0 %v2397
        %v2875 = vpop.f32.mrb[0].mxu0
        %v2876 = vadd.f32 %v2669, %v2875
        %v2877 = vpop.f32.mrb[0].mxu0
        %v2878 = vadd.f32 %v2673, %v2877
        %2879 = vdwg.mxu0
        %2880 = vmatprep.subr.mxu0 %v2403
        %2881 = vmatpush1.msra.mxu0 %v2402
        %2882 = vmatprep.subr.mxu0 %v2419
        %2883 = vmatpush1.msra.mxu0 %v2418
        %2884 = vmatprep.subr.mxu0 %v2435
        %2885 = vmatpush1.msra.mxu0 %v2434
        %2886 = vmatprep.subr.mxu0 %v2451
        %2887 = vmatpush1.msra.mxu0 %v2450
        %2888 = vmatprep.subr.mxu0 %v2467
        %2889 = vmatpush1.msra.mxu0 %v2466
        %2890 = vmatprep.subr.mxu0 %v2483
        %2891 = vmatpush1.msra.mxu0 %v2482
        %2892 = vmatprep.subr.mxu0 %v2499
        %2893 = vmatpush1.msra.mxu0 %v2498
        %2894 = vmatprep.subr.mxu0 %v2515
        %2895 = vmatpush1.msra.mxu0 %v2514
        %2896 = vmatprep.subr.mxu0 %v2531
        %2897 = vmatpush1.msra.mxu0 %v2530
        %2898 = vmatprep.subr.mxu0 %v2547
        %2899 = vmatpush1.msra.mxu0 %v2546
        %2900 = vmatprep.subr.mxu0 %v2563
        %2901 = vmatpush1.msra.mxu0 %v2562
        %2902 = vmatprep.subr.mxu0 %v2579
        %2903 = vmatpush1.msra.mxu0 %v2578
        %2904 = vmatprep.subr.mxu0 %v2595
        %2905 = vmatpush1.msra.mxu0 %v2594
        %2906 = vmatprep.subr.mxu0 %v2611
        %2907 = vmatpush1.msra.mxu0 %v2610
        %2908 = vmatprep.subr.mxu0 %v2627
        %2909 = vmatpush1.msra.mxu0 %v2626
        %2910 = vmatprep.subr.mxu0 %v2643
        %2911 = vmatpush1.msra.mxu0 %v2642
        %2912 = vmatprep.subr.mxu0 0.0
        %2913 = vmatpush1.msra.mxu0 0.0
        %2914 = vmatprep.subr.mxu0 0.0
        %2915 = vmatpush1.msra.mxu0 0.0
        %2916 = vmatprep.subr.mxu0 0.0
        %2917 = vmatpush1.msra.mxu0 0.0
        %2918 = vmatprep.subr.mxu0 0.0
        %2919 = vmatpush1.msra.mxu0 0.0
        %2920 = vmatprep.subr.mxu0 0.0
        %2921 = vmatpush1.msra.mxu0 0.0
        %2922 = vmatprep.subr.mxu0 0.0
        %2923 = vmatpush1.msra.mxu0 0.0
        %2924 = vmatprep.subr.mxu0 0.0
        %2925 = vmatpush1.msra.mxu0 0.0
        %2926 = vmatprep.subr.mxu0 0.0
        %2927 = vmatpush1.msra.mxu0 0.0
        %2928 = vmatprep.subr.mxu0 0.0
        %2929 = vmatpush1.msra.mxu0 0.0
        %2930 = vmatprep.subr.mxu0 0.0
        %2931 = vmatpush1.msra.mxu0 0.0
        %2932 = vmatprep.subr.mxu0 0.0
        %2933 = vmatpush1.msra.mxu0 0.0
        %2934 = vmatprep.subr.mxu0 0.0
        %2935 = vmatpush1.msra.mxu0 0.0
        %2936 = vmatprep.subr.mxu0 0.0
        %2937 = vmatpush1.msra.mxu0 0.0
        %2938 = vmatprep.subr.mxu0 0.0
        %2939 = vmatpush1.msra.mxu0 0.0
        %2940 = vmatprep.subr.mxu0 0.0
        %2941 = vmatpush1.msra.mxu0 0.0
        %2942 = vmatprep.subr.mxu0 0.0
        %2943 = vmatpush1.msra.mxu0 0.0
        %2944 = vmatprep.mubr.f32.mxu0 0.0
        %2945 = vmatmul.mubr.f32.gmra.mrb[0].mxu0 %v2397
        %v2946 = vpop.f32.mrb[0].mxu0
        %v2947 = vadd.f32 %v2677, %v2946
        %v2948 = vpop.f32.mrb[0].mxu0
        %v2949 = vadd.f32 %v2681, %v2948
        %2950 = vdwg.mxu0
        %2951 = vmatprep.subr.mxu0 %v2405
        %2952 = vmatpush1.msra.mxu0 %v2404
        %2953 = vmatprep.subr.mxu0 %v2421
        %2954 = vmatpush1.msra.mxu0 %v2420
        %2955 = vmatprep.subr.mxu0 %v2437
        %2956 = vmatpush1.msra.mxu0 %v2436
        %2957 = vmatprep.subr.mxu0 %v2453
        %2958 = vmatpush1.msra.mxu0 %v2452
        %2959 = vmatprep.subr.mxu0 %v2469
        %2960 = vmatpush1.msra.mxu0 %v2468
        %2961 = vmatprep.subr.mxu0 %v2485
        %2962 = vmatpush1.msra.mxu0 %v2484
        %2963 = vmatprep.subr.mxu0 %v2501
        %2964 = vmatpush1.msra.mxu0 %v2500
        %2965 = vmatprep.subr.mxu0 %v2517
        %2966 = vmatpush1.msra.mxu0 %v2516
        %2967 = vmatprep.subr.mxu0 %v2533
        %2968 = vmatpush1.msra.mxu0 %v2532
        %2969 = vmatprep.subr.mxu0 %v2549
        %2970 = vmatpush1.msra.mxu0 %v2548
        %2971 = vmatprep.subr.mxu0 %v2565
        %2972 = vmatpush1.msra.mxu0 %v2564
        %2973 = vmatprep.subr.mxu0 %v2581
        %2974 = vmatpush1.msra.mxu0 %v2580
        %2975 = vmatprep.subr.mxu0 %v2597
        %2976 = vmatpush1.msra.mxu0 %v2596
        %2977 = vmatprep.subr.mxu0 %v2613
        %2978 = vmatpush1.msra.mxu0 %v2612
        %2979 = vmatprep.subr.mxu0 %v2629
        %2980 = vmatpush1.msra.mxu0 %v2628
        %2981 = vmatprep.subr.mxu0 %v2645
        %2982 = vmatpush1.msra.mxu0 %v2644
        %2983 = vmatprep.subr.mxu0 0.0
        %2984 = vmatpush1.msra.mxu0 0.0
        %2985 = vmatprep.subr.mxu0 0.0
        %2986 = vmatpush1.msra.mxu0 0.0
        %2987 = vmatprep.subr.mxu0 0.0
        %2988 = vmatpush1.msra.mxu0 0.0
        %2989 = vmatprep.subr.mxu0 0.0
        %2990 = vmatpush1.msra.mxu0 0.0
        %2991 = vmatprep.subr.mxu0 0.0
        %2992 = vmatpush1.msra.mxu0 0.0
        %2993 = vmatprep.subr.mxu0 0.0
        %2994 = vmatpush1.msra.mxu0 0.0
        %2995 = vmatprep.subr.mxu0 0.0
        %2996 = vmatpush1.msra.mxu0 0.0
        %2997 = vmatprep.subr.mxu0 0.0
        %2998 = vmatpush1.msra.mxu0 0.0
        %2999 = vmatprep.subr.mxu0 0.0
        %3000 = vmatpush1.msra.mxu0 0.0
        %3001 = vmatprep.subr.mxu0 0.0
        %3002 = vmatpush1.msra.mxu0 0.0
        %3003 = vmatprep.subr.mxu0 0.0
        %3004 = vmatpush1.msra.mxu0 0.0
        %3005 = vmatprep.subr.mxu0 0.0
        %3006 = vmatpush1.msra.mxu0 0.0
        %3007 = vmatprep.subr.mxu0 0.0
        %3008 = vmatpush1.msra.mxu0 0.0
        %3009 = vmatprep.subr.mxu0 0.0
        %3010 = vmatpush1.msra.mxu0 0.0
        %3011 = vmatprep.subr.mxu0 0.0
        %3012 = vmatpush1.msra.mxu0 0.0
        %3013 = vmatprep.subr.mxu0 0.0
        %3014 = vmatpush1.msra.mxu0 0.0
        %3015 = vmatprep.mubr.f32.mxu0 0.0
        %3016 = vmatmul.mubr.f32.gmra.mrb[0].mxu0 %v2397
        %v3017 = vpop.f32.mrb[0].mxu0
        %v3018 = vadd.f32 %v2685, %v3017
        %v3019 = vpop.f32.mrb[0].mxu0
        %v3020 = vadd.f32 %v2689, %v3019
        %3021 = vdwg.mxu0
        %3022 = vmatprep.subr.mxu0 %v2407
        %3023 = vmatpush1.msra.mxu0 %v2406
        %3024 = vmatprep.subr.mxu0 %v2423
        %3025 = vmatpush1.msra.mxu0 %v2422
        %3026 = vmatprep.subr.mxu0 %v2439
        %3027 = vmatpush1.msra.mxu0 %v2438
        %3028 = vmatprep.subr.mxu0 %v2455
        %3029 = vmatpush1.msra.mxu0 %v2454
        %3030 = vmatprep.subr.mxu0 %v2471
        %3031 = vmatpush1.msra.mxu0 %v2470
        %3032 = vmatprep.subr.mxu0 %v2487
        %3033 = vmatpush1.msra.mxu0 %v2486
        %3034 = vmatprep.subr.mxu0 %v2503
        %3035 = vmatpush1.msra.mxu0 %v2502
        %3036 = vmatprep.subr.mxu0 %v2519
        %3037 = vmatpush1.msra.mxu0 %v2518
        %3038 = vmatprep.subr.mxu0 %v2535
        %3039 = vmatpush1.msra.mxu0 %v2534
        %3040 = vmatprep.subr.mxu0 %v2551
        %3041 = vmatpush1.msra.mxu0 %v2550
        %3042 = vmatprep.subr.mxu0 %v2567
        %3043 = vmatpush1.msra.mxu0 %v2566
        %3044 = vmatprep.subr.mxu0 %v2583
        %3045 = vmatpush1.msra.mxu0 %v2582
        %3046 = vmatprep.subr.mxu0 %v2599
        %3047 = vmatpush1.msra.mxu0 %v2598
        %3048 = vmatprep.subr.mxu0 %v2615
        %3049 = vmatpush1.msra.mxu0 %v2614
        %3050 = vmatprep.subr.mxu0 %v2631
        %3051 = vmatpush1.msra.mxu0 %v2630
        %3052 = vmatprep.subr.mxu0 %v2647
        %3053 = vmatpush1.msra.mxu0 %v2646
        %3054 = vmatprep.subr.mxu0 0.0
        %3055 = vmatpush1.msra.mxu0 0.0
        %3056 = vmatprep.subr.mxu0 0.0
        %3057 = vmatpush1.msra.mxu0 0.0
        %3058 = vmatprep.subr.mxu0 0.0
        %3059 = vmatpush1.msra.mxu0 0.0
        %3060 = vmatprep.subr.mxu0 0.0
        %3061 = vmatpush1.msra.mxu0 0.0
        %3062 = vmatprep.subr.mxu0 0.0
        %3063 = vmatpush1.msra.mxu0 0.0
        %3064 = vmatprep.subr.mxu0 0.0
        %3065 = vmatpush1.msra.mxu0 0.0
        %3066 = vmatprep.subr.mxu0 0.0
        %3067 = vmatpush1.msra.mxu0 0.0
        %3068 = vmatprep.subr.mxu0 0.0
        %3069 = vmatpush1.msra.mxu0 0.0
        %3070 = vmatprep.subr.mxu0 0.0
        %3071 = vmatpush1.msra.mxu0 0.0
        %3072 = vmatprep.subr.mxu0 0.0
        %3073 = vmatpush1.msra.mxu0 0.0
        %3074 = vmatprep.subr.mxu0 0.0
        %3075 = vmatpush1.msra.mxu0 0.0
        %3076 = vmatprep.subr.mxu0 0.0
        %3077 = vmatpush1.msra.mxu0 0.0
        %3078 = vmatprep.subr.mxu0 0.0
        %3079 = vmatpush1.msra.mxu0 0.0
        %3080 = vmatprep.subr.mxu0 0.0
        %3081 = vmatpush1.msra.mxu0 0.0
        %3082 = vmatprep.subr.mxu0 0.0
        %3083 = vmatpush1.msra.mxu0 0.0
        %3084 = vmatprep.subr.mxu0 0.0
        %3085 = vmatpush1.msra.mxu0 0.0
        %3086 = vmatprep.mubr.f32.mxu0 0.0
        %3087 = vmatmul.mubr.f32.gmra.mrb[0].mxu0 %v2397
        %v3088 = vpop.f32.mrb[0].mxu0
        %v3089 = vadd.f32 %v2693, %v3088
        %v3090 = vpop.f32.mrb[0].mxu0
        %v3091 = vadd.f32 %v2697, %v3090
        %3092 = vdwg.mxu0
        %3093 = vmatprep.subr.mxu0 %v2409
        %3094 = vmatpush1.msra.mxu0 %v2408
        %3095 = vmatprep.subr.mxu0 %v2425
        %3096 = vmatpush1.msra.mxu0 %v2424
        %3097 = vmatprep.subr.mxu0 %v2441
        %3098 = vmatpush1.msra.mxu0 %v2440
        %3099 = vmatprep.subr.mxu0 %v2457
        %3100 = vmatpush1.msra.mxu0 %v2456
        %3101 = vmatprep.subr.mxu0 %v2473
        %3102 = vmatpush1.msra.mxu0 %v2472
        %3103 = vmatprep.subr.mxu0 %v2489
        %3104 = vmatpush1.msra.mxu0 %v2488
        %3105 = vmatprep.subr.mxu0 %v2505
        %3106 = vmatpush1.msra.mxu0 %v2504
        %3107 = vmatprep.subr.mxu0 %v2521
        %3108 = vmatpush1.msra.mxu0 %v2520
        %3109 = vmatprep.subr.mxu0 %v2537
        %3110 = vmatpush1.msra.mxu0 %v2536
        %3111 = vmatprep.subr.mxu0 %v2553
        %3112 = vmatpush1.msra.mxu0 %v2552
        %3113 = vmatprep.subr.mxu0 %v2569
        %3114 = vmatpush1.msra.mxu0 %v2568
        %3115 = vmatprep.subr.mxu0 %v2585
        %3116 = vmatpush1.msra.mxu0 %v2584
        %3117 = vmatprep.subr.mxu0 %v2601
        %3118 = vmatpush1.msra.mxu0 %v2600
        %3119 = vmatprep.subr.mxu0 %v2617
        %3120 = vmatpush1.msra.mxu0 %v2616
        %3121 = vmatprep.subr.mxu0 %v2633
        %3122 = vmatpush1.msra.mxu0 %v2632
        %3123 = vmatprep.subr.mxu0 %v2649
        %3124 = vmatpush1.msra.mxu0 %v2648
        %3125 = vmatprep.subr.mxu0 0.0
        %3126 = vmatpush1.msra.mxu0 0.0
        %3127 = vmatprep.subr.mxu0 0.0
        %3128 = vmatpush1.msra.mxu0 0.0
        %3129 = vmatprep.subr.mxu0 0.0
        %3130 = vmatpush1.msra.mxu0 0.0
        %3131 = vmatprep.subr.mxu0 0.0
        %3132 = vmatpush1.msra.mxu0 0.0
        %3133 = vmatprep.subr.mxu0 0.0
        %3134 = vmatpush1.msra.mxu0 0.0
        %3135 = vmatprep.subr.mxu0 0.0
        %3136 = vmatpush1.msra.mxu0 0.0
        %3137 = vmatprep.subr.mxu0 0.0
        %3138 = vmatpush1.msra.mxu0 0.0
        %3139 = vmatprep.subr.mxu0 0.0
        %3140 = vmatpush1.msra.mxu0 0.0
        %3141 = vmatprep.subr.mxu0 0.0
        %3142 = vmatpush1.msra.mxu0 0.0
        %3143 = vmatprep.subr.mxu0 0.0
        %3144 = vmatpush1.msra.mxu0 0.0
        %3145 = vmatprep.subr.mxu0 0.0
        %3146 = vmatpush1.msra.mxu0 0.0
        %3147 = vmatprep.subr.mxu0 0.0
        %3148 = vmatpush1.msra.mxu0 0.0
        %3149 = vmatprep.subr.mxu0 0.0
        %3150 = vmatpush1.msra.mxu0 0.0
        %3151 = vmatprep.subr.mxu0 0.0
        %3152 = vmatpush1.msra.mxu0 0.0
        %3153 = vmatprep.subr.mxu0 0.0
        %3154 = vmatpush1.msra.mxu0 0.0
        %3155 = vmatprep.subr.mxu0 0.0
        %3156 = vmatpush1.msra.mxu0 0.0
        %3157 = vmatprep.mubr.f32.mxu0 0.0
        %3158 = vmatmul.mubr.f32.gmra.mrb[0].mxu0 %v2397
        %v3159 = vpop.f32.mrb[0].mxu0
        %v3160 = vadd.f32 %v2701, %v3159
        %v3161 = vpop.f32.mrb[0].mxu0
        %v3162 = vadd.f32 %v2705, %v3161
        %3163 = vdwg.mxu0
        %3164 = vmatprep.subr.mxu0 %v2411
        %3165 = vmatpush1.msra.mxu0 %v2410
        %3166 = vmatprep.subr.mxu0 %v2427
        %3167 = vmatpush1.msra.mxu0 %v2426
        %3168 = vmatprep.subr.mxu0 %v2443
        %3169 = vmatpush1.msra.mxu0 %v2442
        %3170 = vmatprep.subr.mxu0 %v2459
        %3171 = vmatpush1.msra.mxu0 %v2458
        %3172 = vmatprep.subr.mxu0 %v2475
        %3173 = vmatpush1.msra.mxu0 %v2474
        %3174 = vmatprep.subr.mxu0 %v2491
        %3175 = vmatpush1.msra.mxu0 %v2490
        %3176 = vmatprep.subr.mxu0 %v2507
        %3177 = vmatpush1.msra.mxu0 %v2506
        %3178 = vmatprep.subr.mxu0 %v2523
        %3179 = vmatpush1.msra.mxu0 %v2522
        %3180 = vmatprep.subr.mxu0 %v2539
        %3181 = vmatpush1.msra.mxu0 %v2538
        %3182 = vmatprep.subr.mxu0 %v2555
        %3183 = vmatpush1.msra.mxu0 %v2554
        %3184 = vmatprep.subr.mxu0 %v2571
        %3185 = vmatpush1.msra.mxu0 %v2570
        %3186 = vmatprep.subr.mxu0 %v2587
        %3187 = vmatpush1.msra.mxu0 %v2586
        %3188 = vmatprep.subr.mxu0 %v2603
        %3189 = vmatpush1.msra.mxu0 %v2602
        %3190 = vmatprep.subr.mxu0 %v2619
        %3191 = vmatpush1.msra.mxu0 %v2618
        %3192 = vmatprep.subr.mxu0 %v2635
        %3193 = vmatpush1.msra.mxu0 %v2634
        %3194 = vmatprep.subr.mxu0 %v2651
        %3195 = vmatpush1.msra.mxu0 %v2650
        %3196 = vmatprep.subr.mxu0 0.0
        %3197 = vmatpush1.msra.mxu0 0.0
        %3198 = vmatprep.subr.mxu0 0.0
        %3199 = vmatpush1.msra.mxu0 0.0
        %3200 = vmatprep.subr.mxu0 0.0
        %3201 = vmatpush1.msra.mxu0 0.0
        %3202 = vmatprep.subr.mxu0 0.0
        %3203 = vmatpush1.msra.mxu0 0.0
        %3204 = vmatprep.subr.mxu0 0.0
        %3205 = vmatpush1.msra.mxu0 0.0
        %3206 = vmatprep.subr.mxu0 0.0
        %3207 = vmatpush1.msra.mxu0 0.0
        %3208 = vmatprep.subr.mxu0 0.0
        %3209 = vmatpush1.msra.mxu0 0.0
        %3210 = vmatprep.subr.mxu0 0.0
        %3211 = vmatpush1.msra.mxu0 0.0
        %3212 = vmatprep.subr.mxu0 0.0
        %3213 = vmatpush1.msra.mxu0 0.0
        %3214 = vmatprep.subr.mxu0 0.0
        %3215 = vmatpush1.msra.mxu0 0.0
        %3216 = vmatprep.subr.mxu0 0.0
        %3217 = vmatpush1.msra.mxu0 0.0
        %3218 = vmatprep.subr.mxu0 0.0
        %3219 = vmatpush1.msra.mxu0 0.0
        %3220 = vmatprep.subr.mxu0 0.0
        %3221 = vmatpush1.msra.mxu0 0.0
        %3222 = vmatprep.subr.mxu0 0.0
        %3223 = vmatpush1.msra.mxu0 0.0
        %3224 = vmatprep.subr.mxu0 0.0
        %3225 = vmatpush1.msra.mxu0 0.0
        %3226 = vmatprep.subr.mxu0 0.0
        %3227 = vmatpush1.msra.mxu0 0.0
        %3228 = vmatprep.mubr.f32.mxu0 0.0
        %3229 = vmatmul.mubr.f32.gmra.mrb[0].mxu0 %v2397
        %v3230 = vpop.f32.mrb[0].mxu0
        %v3231 = vadd.f32 %v2709, %v3230
        %v3232 = vpop.f32.mrb[0].mxu0
        %v3233 = vadd.f32 %v2713, %v3232
        %3234 = vdwg.mxu0
        %3235 = vmatprep.subr.mxu0 %v2413
        %3236 = vmatpush1.msra.mxu0 %v2412
        %3237 = vmatprep.subr.mxu0 %v2429
        %3238 = vmatpush1.msra.mxu0 %v2428
        %3239 = vmatprep.subr.mxu0 %v2445
        %3240 = vmatpush1.msra.mxu0 %v2444
        %3241 = vmatprep.subr.mxu0 %v2461
        %3242 = vmatpush1.msra.mxu0 %v2460
        %3243 = vmatprep.subr.mxu0 %v2477
        %3244 = vmatpush1.msra.mxu0 %v2476
        %3245 = vmatprep.subr.mxu0 %v2493
        %3246 = vmatpush1.msra.mxu0 %v2492
        %3247 = vmatprep.subr.mxu0 %v2509
        %3248 = vmatpush1.msra.mxu0 %v2508
        %3249 = vmatprep.subr.mxu0 %v2525
        %3250 = vmatpush1.msra.mxu0 %v2524
        %3251 = vmatprep.subr.mxu0 %v2541
        %3252 = vmatpush1.msra.mxu0 %v2540
        %3253 = vmatprep.subr.mxu0 %v2557
        %3254 = vmatpush1.msra.mxu0 %v2556
        %3255 = vmatprep.subr.mxu0 %v2573
        %3256 = vmatpush1.msra.mxu0 %v2572
        %3257 = vmatprep.subr.mxu0 %v2589
        %3258 = vmatpush1.msra.mxu0 %v2588
        %3259 = vmatprep.subr.mxu0 %v2605
        %3260 = vmatpush1.msra.mxu0 %v2604
        %3261 = vmatprep.subr.mxu0 %v2621
        %3262 = vmatpush1.msra.mxu0 %v2620
        %3263 = vmatprep.subr.mxu0 %v2637
        %3264 = vmatpush1.msra.mxu0 %v2636
        %3265 = vmatprep.subr.mxu0 %v2653
        %3266 = vmatpush1.msra.mxu0 %v2652
        %3267 = vmatprep.subr.mxu0 0.0
        %3268 = vmatpush1.msra.mxu0 0.0
        %3269 = vmatprep.subr.mxu0 0.0
        %3270 = vmatpush1.msra.mxu0 0.0
        %3271 = vmatprep.subr.mxu0 0.0
        %3272 = vmatpush1.msra.mxu0 0.0
        %3273 = vmatprep.subr.mxu0 0.0
        %3274 = vmatpush1.msra.mxu0 0.0
        %3275 = vmatprep.subr.mxu0 0.0
        %3276 = vmatpush1.msra.mxu0 0.0
        %3277 = vmatprep.subr.mxu0 0.0
        %3278 = vmatpush1.msra.mxu0 0.0
        %3279 = vmatprep.subr.mxu0 0.0
        %3280 = vmatpush1.msra.mxu0 0.0
        %3281 = vmatprep.subr.mxu0 0.0
        %3282 = vmatpush1.msra.mxu0 0.0
        %3283 = vmatprep.subr.mxu0 0.0
        %3284 = vmatpush1.msra.mxu0 0.0
        %3285 = vmatprep.subr.mxu0 0.0
        %3286 = vmatpush1.msra.mxu0 0.0
        %3287 = vmatprep.subr.mxu0 0.0
        %3288 = vmatpush1.msra.mxu0 0.0
        %3289 = vmatprep.subr.mxu0 0.0
        %3290 = vmatpush1.msra.mxu0 0.0
        %3291 = vmatprep.subr.mxu0 0.0
        %3292 = vmatpush1.msra.mxu0 0.0
        %3293 = vmatprep.subr.mxu0 0.0
        %3294 = vmatpush1.msra.mxu0 0.0
        %3295 = vmatprep.subr.mxu0 0.0
        %3296 = vmatpush1.msra.mxu0 0.0
        %3297 = vmatprep.subr.mxu0 0.0
        %3298 = vmatpush1.msra.mxu0 0.0
        %3299 = vmatprep.mubr.f32.mxu0 0.0
        %3300 = vmatmul.mubr.f32.gmra.mrb[0].mxu0 %v2397
        %v3301 = vpop.f32.mrb[0].mxu0
        %v3302 = vadd.f32 %v2717, %v3301
        %v3303 = vpop.f32.mrb[0].mxu0
        %v3304 = vadd.f32 %v2721, %v3303
        %3305 = vdwg.mxu0
        %v3306 = vmax.f32 %v2805, 0.0
        %v3307 = vmax.f32 %v2807, 0.0
        %v3308 = vmax.f32 %v2876, 0.0
        %v3309 = vmax.f32 %v2878, 0.0
        %v3310 = vmax.f32 %v2947, 0.0
        %v3311 = vmax.f32 %v2949, 0.0
        %v3312 = vmax.f32 %v3018, 0.0
        %v3313 = vmax.f32 %v3020, 0.0
        %v3314 = vmax.f32 %v3089, 0.0
        %v3315 = vmax.f32 %v3091, 0.0
        %v3316 = vmax.f32 %v3160, 0.0
        %v3317 = vmax.f32 %v3162, 0.0
        %v3318 = vmax.f32 %v3231, 0.0
        %v3319 = vmax.f32 %v3233, 0.0
        %v3320 = vmax.f32 %v3302, 0.0
        %v3321 = vmax.f32 %v3304, 0.0
        %v3322 = vld [vmem:[#allocation11] sm:$0xff]
        %v3323 = vld [vmem:[#allocation11 + $0x8] sm:$0xff]
        %v3324 = vld [vmem:[#allocation11 + $0x10] sm:$0xff]
        %v3325 = vld [vmem:[#allocation11 + $0x18] sm:$0xff]
        %v3326 = vld [vmem:[#allocation11 + $0x20] sm:$0xff]
        %v3327 = vld [vmem:[#allocation11 + $0x28] sm:$0xff]
        %v3328 = vld [vmem:[#allocation11 + $0x30] sm:$0xff]
        %v3329 = vld [vmem:[#allocation11 + $0x38] sm:$0xff]
        %v3330 = vld [vmem:[#allocation11 + $0x40] sm:$0xff]
        %v3331 = vld [vmem:[#allocation11 + $0x48] sm:$0xff]
        %v3332 = vld [vmem:[#allocation11 + $0x50] sm:$0xff]
        %v3333 = vld [vmem:[#allocation11 + $0x58] sm:$0xff]
        %v3334 = vld [vmem:[#allocation11 + $0x60] sm:$0xff]
        %v3335 = vld [vmem:[#allocation11 + $0x68] sm:$0xff]
        %v3336 = vld [vmem:[#allocation11 + $0x70] sm:$0xff]
        %v3337 = vld [vmem:[#allocation11 + $0x78] sm:$0xff]
        %v3338 = vld [vmem:[#allocation11 + $0x80] sm:$0xff]
        %v3339 = vld [vmem:[#allocation11 + $0x88] sm:$0xff]
        %v3340 = vld [vmem:[#allocation11 + $0x90] sm:$0xff]
        %v3341 = vld [vmem:[#allocation11 + $0x98] sm:$0xff]
        %v3342 = vld [vmem:[#allocation11 + $0xa0] sm:$0xff]
        %v3343 = vld [vmem:[#allocation11 + $0xa8] sm:$0xff]
        %v3344 = vld [vmem:[#allocation11 + $0xb0] sm:$0xff]
        %v3345 = vld [vmem:[#allocation11 + $0xb8] sm:$0xff]
        %v3346 = vld [vmem:[#allocation11 + $0xc0] sm:$0xff]
        %v3347 = vld [vmem:[#allocation11 + $0xc8] sm:$0xff]
        %v3348 = vld [vmem:[#allocation11 + $0xd0] sm:$0xff]
        %v3349 = vld [vmem:[#allocation11 + $0xd8] sm:$0xff]
        %v3350 = vld [vmem:[#allocation11 + $0xe0] sm:$0xff]
        %v3351 = vld [vmem:[#allocation11 + $0xe8] sm:$0xff]
        %v3352 = vld [vmem:[#allocation11 + $0xf0] sm:$0xff]
        %v3353 = vld [vmem:[#allocation11 + $0xf8] sm:$0xff]
        %v3354 = vld [vmem:[#allocation11 + $0x100] sm:$0xff]
        %v3355 = vld [vmem:[#allocation11 + $0x108] sm:$0xff]
        %v3356 = vld [vmem:[#allocation11 + $0x110] sm:$0xff]
        %v3357 = vld [vmem:[#allocation11 + $0x118] sm:$0xff]
        %v3358 = vld [vmem:[#allocation11 + $0x120] sm:$0xff]
        %v3359 = vld [vmem:[#allocation11 + $0x128] sm:$0xff]
        %v3360 = vld [vmem:[#allocation11 + $0x130] sm:$0xff]
        %v3361 = vld [vmem:[#allocation11 + $0x138] sm:$0xff]
        %v3362 = vld [vmem:[#allocation11 + $0x140] sm:$0xff]
        %v3363 = vld [vmem:[#allocation11 + $0x148] sm:$0xff]
        %v3364 = vld [vmem:[#allocation11 + $0x150] sm:$0xff]
        %v3365 = vld [vmem:[#allocation11 + $0x158] sm:$0xff]
        %v3366 = vld [vmem:[#allocation11 + $0x160] sm:$0xff]
        %v3367 = vld [vmem:[#allocation11 + $0x168] sm:$0xff]
        %v3368 = vld [vmem:[#allocation11 + $0x170] sm:$0xff]
        %v3369 = vld [vmem:[#allocation11 + $0x178] sm:$0xff]
        %v3370 = vld [vmem:[#allocation11 + $0x180] sm:$0xff]
        %v3371 = vld [vmem:[#allocation11 + $0x188] sm:$0xff]
        %v3372 = vld [vmem:[#allocation11 + $0x190] sm:$0xff]
        %v3373 = vld [vmem:[#allocation11 + $0x198] sm:$0xff]
        %v3374 = vld [vmem:[#allocation11 + $0x1a0] sm:$0xff]
        %v3375 = vld [vmem:[#allocation11 + $0x1a8] sm:$0xff]
        %v3376 = vld [vmem:[#allocation11 + $0x1b0] sm:$0xff]
        %v3377 = vld [vmem:[#allocation11 + $0x1b8] sm:$0xff]
        %v3378 = vld [vmem:[#allocation11 + $0x1c0] sm:$0xff]
        %v3379 = vld [vmem:[#allocation11 + $0x1c8] sm:$0xff]
        %v3380 = vld [vmem:[#allocation11 + $0x1d0] sm:$0xff]
        %v3381 = vld [vmem:[#allocation11 + $0x1d8] sm:$0xff]
        %v3382 = vld [vmem:[#allocation11 + $0x1e0] sm:$0xff]
        %v3383 = vld [vmem:[#allocation11 + $0x1e8] sm:$0xff]
        %v3384 = vld [vmem:[#allocation11 + $0x1f0] sm:$0xff]
        %v3385 = vld [vmem:[#allocation11 + $0x1f8] sm:$0xff]
        %v3386 = vld [vmem:[#allocation11 + $0x200] sm:$0xff]
        %v3387 = vld [vmem:[#allocation11 + $0x208] sm:$0xff]
        %v3388 = vld [vmem:[#allocation11 + $0x210] sm:$0xff]
        %v3389 = vld [vmem:[#allocation11 + $0x218] sm:$0xff]
        %v3390 = vld [vmem:[#allocation11 + $0x220] sm:$0xff]
        %v3391 = vld [vmem:[#allocation11 + $0x228] sm:$0xff]
        %v3392 = vld [vmem:[#allocation11 + $0x230] sm:$0xff]
        %v3393 = vld [vmem:[#allocation11 + $0x238] sm:$0xff]
        %v3394 = vld [vmem:[#allocation11 + $0x240] sm:$0xff]
        %v3395 = vld [vmem:[#allocation11 + $0x248] sm:$0xff]
        %v3396 = vld [vmem:[#allocation11 + $0x250] sm:$0xff]
        %v3397 = vld [vmem:[#allocation11 + $0x258] sm:$0xff]
        %v3398 = vld [vmem:[#allocation11 + $0x260] sm:$0xff]
        %v3399 = vld [vmem:[#allocation11 + $0x268] sm:$0xff]
        %v3400 = vld [vmem:[#allocation11 + $0x270] sm:$0xff]
        %v3401 = vld [vmem:[#allocation11 + $0x278] sm:$0xff]
        %v3402 = vld [vmem:[#allocation11 + $0x280] sm:$0xff]
        %v3403 = vld [vmem:[#allocation11 + $0x288] sm:$0xff]
        %v3404 = vld [vmem:[#allocation11 + $0x290] sm:$0xff]
        %v3405 = vld [vmem:[#allocation11 + $0x298] sm:$0xff]
        %v3406 = vld [vmem:[#allocation11 + $0x2a0] sm:$0xff]
        %v3407 = vld [vmem:[#allocation11 + $0x2a8] sm:$0xff]
        %v3408 = vld [vmem:[#allocation11 + $0x2b0] sm:$0xff]
        %v3409 = vld [vmem:[#allocation11 + $0x2b8] sm:$0xff]
        %v3410 = vld [vmem:[#allocation11 + $0x2c0] sm:$0xff]
        %v3411 = vld [vmem:[#allocation11 + $0x2c8] sm:$0xff]
        %v3412 = vld [vmem:[#allocation11 + $0x2d0] sm:$0xff]
        %v3413 = vld [vmem:[#allocation11 + $0x2d8] sm:$0xff]
        %v3414 = vld [vmem:[#allocation11 + $0x2e0] sm:$0xff]
        %v3415 = vld [vmem:[#allocation11 + $0x2e8] sm:$0xff]
        %v3416 = vld [vmem:[#allocation11 + $0x2f0] sm:$0xff]
        %v3417 = vld [vmem:[#allocation11 + $0x2f8] sm:$0xff]
        %v3418 = vld [vmem:[#allocation11 + $0x300] sm:$0xff]
        %v3419 = vld [vmem:[#allocation11 + $0x308] sm:$0xff]
        %v3420 = vld [vmem:[#allocation11 + $0x310] sm:$0xff]
        %v3421 = vld [vmem:[#allocation11 + $0x318] sm:$0xff]
        %v3422 = vld [vmem:[#allocation11 + $0x320] sm:$0xff]
        %v3423 = vld [vmem:[#allocation11 + $0x328] sm:$0xff]
        %v3424 = vld [vmem:[#allocation11 + $0x330] sm:$0xff]
        %v3425 = vld [vmem:[#allocation11 + $0x338] sm:$0xff]
        %v3426 = vld [vmem:[#allocation11 + $0x340] sm:$0xff]
        %v3427 = vld [vmem:[#allocation11 + $0x348] sm:$0xff]
        %v3428 = vld [vmem:[#allocation11 + $0x350] sm:$0xff]
        %v3429 = vld [vmem:[#allocation11 + $0x358] sm:$0xff]
        %v3430 = vld [vmem:[#allocation11 + $0x360] sm:$0xff]
        %v3431 = vld [vmem:[#allocation11 + $0x368] sm:$0xff]
        %v3432 = vld [vmem:[#allocation11 + $0x370] sm:$0xff]
        %v3433 = vld [vmem:[#allocation11 + $0x378] sm:$0xff]
        %v3434 = vld [vmem:[#allocation11 + $0x380] sm:$0xff]
        %v3435 = vld [vmem:[#allocation11 + $0x388] sm:$0xff]
        %v3436 = vld [vmem:[#allocation11 + $0x390] sm:$0xff]
        %v3437 = vld [vmem:[#allocation11 + $0x398] sm:$0xff]
        %v3438 = vld [vmem:[#allocation11 + $0x3a0] sm:$0xff]
        %v3439 = vld [vmem:[#allocation11 + $0x3a8] sm:$0xff]
        %v3440 = vld [vmem:[#allocation11 + $0x3b0] sm:$0xff]
        %v3441 = vld [vmem:[#allocation11 + $0x3b8] sm:$0xff]
        %v3442 = vld [vmem:[#allocation11 + $0x3c0] sm:$0xff]
        %v3443 = vld [vmem:[#allocation11 + $0x3c8] sm:$0xff]
        %v3444 = vld [vmem:[#allocation11 + $0x3d0] sm:$0xff]
        %v3445 = vld [vmem:[#allocation11 + $0x3d8] sm:$0xff]
        %v3446 = vld [vmem:[#allocation11 + $0x3e0] sm:$0xff]
        %v3447 = vld [vmem:[#allocation11 + $0x3e8] sm:$0xff]
        %v3448 = vld [vmem:[#allocation11 + $0x3f0] sm:$0xff]
        %v3449 = vld [vmem:[#allocation11 + $0x3f8] sm:$0xff]
        %v3450 = vld [vmem:[#allocation11 + $0x400] sm:$0xff]
        %v3451 = vld [vmem:[#allocation11 + $0x408] sm:$0xff]
        %v3452 = vld [vmem:[#allocation11 + $0x410] sm:$0xff]
        %v3453 = vld [vmem:[#allocation11 + $0x418] sm:$0xff]
        %v3454 = vld [vmem:[#allocation11 + $0x420] sm:$0xff]
        %v3455 = vld [vmem:[#allocation11 + $0x428] sm:$0xff]
        %v3456 = vld [vmem:[#allocation11 + $0x430] sm:$0xff]
        %v3457 = vld [vmem:[#allocation11 + $0x438] sm:$0xff]
        %v3458 = vld [vmem:[#allocation11 + $0x440] sm:$0xff]
        %v3459 = vld [vmem:[#allocation11 + $0x448] sm:$0xff]
        %v3460 = vld [vmem:[#allocation11 + $0x450] sm:$0xff]
        %v3461 = vld [vmem:[#allocation11 + $0x458] sm:$0xff]
        %v3462 = vld [vmem:[#allocation11 + $0x460] sm:$0xff]
        %v3463 = vld [vmem:[#allocation11 + $0x468] sm:$0xff]
        %v3464 = vld [vmem:[#allocation11 + $0x470] sm:$0xff]
        %v3465 = vld [vmem:[#allocation11 + $0x478] sm:$0xff]
        %v3466 = vld [vmem:[#allocation11 + $0x480] sm:$0xff]
        %v3467 = vld [vmem:[#allocation11 + $0x488] sm:$0xff]
        %v3468 = vld [vmem:[#allocation11 + $0x490] sm:$0xff]
        %v3469 = vld [vmem:[#allocation11 + $0x498] sm:$0xff]
        %v3470 = vld [vmem:[#allocation11 + $0x4a0] sm:$0xff]
        %v3471 = vld [vmem:[#allocation11 + $0x4a8] sm:$0xff]
        %v3472 = vld [vmem:[#allocation11 + $0x4b0] sm:$0xff]
        %v3473 = vld [vmem:[#allocation11 + $0x4b8] sm:$0xff]
        %v3474 = vld [vmem:[#allocation11 + $0x4c0] sm:$0xff]
        %v3475 = vld [vmem:[#allocation11 + $0x4c8] sm:$0xff]
        %v3476 = vld [vmem:[#allocation11 + $0x4d0] sm:$0xff]
        %v3477 = vld [vmem:[#allocation11 + $0x4d8] sm:$0xff]
        %v3478 = vld [vmem:[#allocation11 + $0x4e0] sm:$0xff]
        %v3479 = vld [vmem:[#allocation11 + $0x4e8] sm:$0xff]
        %v3480 = vld [vmem:[#allocation11 + $0x4f0] sm:$0xff]
        %v3481 = vld [vmem:[#allocation11 + $0x4f8] sm:$0xff]
        %v3482 = vld [vmem:[#allocation11 + $0x500] sm:$0xff]
        %v3483 = vld [vmem:[#allocation11 + $0x508] sm:$0xff]
        %v3484 = vld [vmem:[#allocation11 + $0x510] sm:$0xff]
        %v3485 = vld [vmem:[#allocation11 + $0x518] sm:$0xff]
        %v3486 = vld [vmem:[#allocation11 + $0x520] sm:$0xff]
        %v3487 = vld [vmem:[#allocation11 + $0x528] sm:$0xff]
        %v3488 = vld [vmem:[#allocation11 + $0x530] sm:$0xff]
        %v3489 = vld [vmem:[#allocation11 + $0x538] sm:$0xff]
        %v3490 = vld [vmem:[#allocation11 + $0x540] sm:$0xff]
        %v3491 = vld [vmem:[#allocation11 + $0x548] sm:$0xff]
        %v3492 = vld [vmem:[#allocation11 + $0x550] sm:$0xff]
        %v3493 = vld [vmem:[#allocation11 + $0x558] sm:$0xff]
        %v3494 = vld [vmem:[#allocation11 + $0x560] sm:$0xff]
        %v3495 = vld [vmem:[#allocation11 + $0x568] sm:$0xff]
        %v3496 = vld [vmem:[#allocation11 + $0x570] sm:$0xff]
        %v3497 = vld [vmem:[#allocation11 + $0x578] sm:$0xff]
        %v3498 = vld [vmem:[#allocation11 + $0x580] sm:$0xff]
        %v3499 = vld [vmem:[#allocation11 + $0x588] sm:$0xff]
        %v3500 = vld [vmem:[#allocation11 + $0x590] sm:$0xff]
        %v3501 = vld [vmem:[#allocation11 + $0x598] sm:$0xff]
        %v3502 = vld [vmem:[#allocation11 + $0x5a0] sm:$0xff]
        %v3503 = vld [vmem:[#allocation11 + $0x5a8] sm:$0xff]
        %v3504 = vld [vmem:[#allocation11 + $0x5b0] sm:$0xff]
        %v3505 = vld [vmem:[#allocation11 + $0x5b8] sm:$0xff]
        %v3506 = vld [vmem:[#allocation11 + $0x5c0] sm:$0xff]
        %v3507 = vld [vmem:[#allocation11 + $0x5c8] sm:$0xff]
        %v3508 = vld [vmem:[#allocation11 + $0x5d0] sm:$0xff]
        %v3509 = vld [vmem:[#allocation11 + $0x5d8] sm:$0xff]
        %v3510 = vld [vmem:[#allocation11 + $0x5e0] sm:$0xff]
        %v3511 = vld [vmem:[#allocation11 + $0x5e8] sm:$0xff]
        %v3512 = vld [vmem:[#allocation11 + $0x5f0] sm:$0xff]
        %v3513 = vld [vmem:[#allocation11 + $0x5f8] sm:$0xff]
        %v3514 = vld [vmem:[#allocation11 + $0x600] sm:$0xff]
        %v3515 = vld [vmem:[#allocation11 + $0x608] sm:$0xff]
        %v3516 = vld [vmem:[#allocation11 + $0x610] sm:$0xff]
        %v3517 = vld [vmem:[#allocation11 + $0x618] sm:$0xff]
        %v3518 = vld [vmem:[#allocation11 + $0x620] sm:$0xff]
        %v3519 = vld [vmem:[#allocation11 + $0x628] sm:$0xff]
        %v3520 = vld [vmem:[#allocation11 + $0x630] sm:$0xff]
        %v3521 = vld [vmem:[#allocation11 + $0x638] sm:$0xff]
        %v3522 = vld [vmem:[#allocation11 + $0x640] sm:$0xff]
        %v3523 = vld [vmem:[#allocation11 + $0x648] sm:$0xff]
        %v3524 = vld [vmem:[#allocation11 + $0x650] sm:$0xff]
        %v3525 = vld [vmem:[#allocation11 + $0x658] sm:$0xff]
        %v3526 = vld [vmem:[#allocation11 + $0x660] sm:$0xff]
        %v3527 = vld [vmem:[#allocation11 + $0x668] sm:$0xff]
        %v3528 = vld [vmem:[#allocation11 + $0x670] sm:$0xff]
        %v3529 = vld [vmem:[#allocation11 + $0x678] sm:$0xff]
        %v3530 = vld [vmem:[#allocation11 + $0x680] sm:$0xff]
        %v3531 = vld [vmem:[#allocation11 + $0x688] sm:$0xff]
        %v3532 = vld [vmem:[#allocation11 + $0x690] sm:$0xff]
        %v3533 = vld [vmem:[#allocation11 + $0x698] sm:$0xff]
        %v3534 = vld [vmem:[#allocation11 + $0x6a0] sm:$0xff]
        %v3535 = vld [vmem:[#allocation11 + $0x6a8] sm:$0xff]
        %v3536 = vld [vmem:[#allocation11 + $0x6b0] sm:$0xff]
        %v3537 = vld [vmem:[#allocation11 + $0x6b8] sm:$0xff]
        %v3538 = vld [vmem:[#allocation11 + $0x6c0] sm:$0xff]
        %v3539 = vld [vmem:[#allocation11 + $0x6c8] sm:$0xff]
        %v3540 = vld [vmem:[#allocation11 + $0x6d0] sm:$0xff]
        %v3541 = vld [vmem:[#allocation11 + $0x6d8] sm:$0xff]
        %v3542 = vld [vmem:[#allocation11 + $0x6e0] sm:$0xff]
        %v3543 = vld [vmem:[#allocation11 + $0x6e8] sm:$0xff]
        %v3544 = vld [vmem:[#allocation11 + $0x6f0] sm:$0xff]
        %v3545 = vld [vmem:[#allocation11 + $0x6f8] sm:$0xff]
        %v3546 = vld [vmem:[#allocation11 + $0x700] sm:$0xff]
        %v3547 = vld [vmem:[#allocation11 + $0x708] sm:$0xff]
        %v3548 = vld [vmem:[#allocation11 + $0x710] sm:$0xff]
        %v3549 = vld [vmem:[#allocation11 + $0x718] sm:$0xff]
        %v3550 = vld [vmem:[#allocation11 + $0x720] sm:$0xff]
        %v3551 = vld [vmem:[#allocation11 + $0x728] sm:$0xff]
        %v3552 = vld [vmem:[#allocation11 + $0x730] sm:$0xff]
        %v3553 = vld [vmem:[#allocation11 + $0x738] sm:$0xff]
        %v3554 = vld [vmem:[#allocation11 + $0x740] sm:$0xff]
        %v3555 = vld [vmem:[#allocation11 + $0x748] sm:$0xff]
        %v3556 = vld [vmem:[#allocation11 + $0x750] sm:$0xff]
        %v3557 = vld [vmem:[#allocation11 + $0x758] sm:$0xff]
        %v3558 = vld [vmem:[#allocation11 + $0x760] sm:$0xff]
        %v3559 = vld [vmem:[#allocation11 + $0x768] sm:$0xff]
        %v3560 = vld [vmem:[#allocation11 + $0x770] sm:$0xff]
        %v3561 = vld [vmem:[#allocation11 + $0x778] sm:$0xff]
        %v3562 = vld [vmem:[#allocation11 + $0x780] sm:$0xff]
        %v3563 = vld [vmem:[#allocation11 + $0x788] sm:$0xff]
        %v3564 = vld [vmem:[#allocation11 + $0x790] sm:$0xff]
        %v3565 = vld [vmem:[#allocation11 + $0x798] sm:$0xff]
        %v3566 = vld [vmem:[#allocation11 + $0x7a0] sm:$0xff]
        %v3567 = vld [vmem:[#allocation11 + $0x7a8] sm:$0xff]
        %v3568 = vld [vmem:[#allocation11 + $0x7b0] sm:$0xff]
        %v3569 = vld [vmem:[#allocation11 + $0x7b8] sm:$0xff]
        %v3570 = vld [vmem:[#allocation11 + $0x7c0] sm:$0xff]
        %v3571 = vld [vmem:[#allocation11 + $0x7c8] sm:$0xff]
        %v3572 = vld [vmem:[#allocation11 + $0x7d0] sm:$0xff]
        %v3573 = vld [vmem:[#allocation11 + $0x7d8] sm:$0xff]
        %v3574 = vld [vmem:[#allocation11 + $0x7e0] sm:$0xff]
        %v3575 = vld [vmem:[#allocation11 + $0x7e8] sm:$0xff]
        %v3576 = vld [vmem:[#allocation11 + $0x7f0] sm:$0xff]
        %v3577 = vld [vmem:[#allocation11 + $0x7f8] sm:$0xff]
        %v3578 = vlaneseq
        %v3579 = vshrl.u32 %v3578, 7
        %v3580 = vsub.s32 1, %v3579
        %v3581 = vrot.slane %v432, %v3580
        %3582 = vmatprep.subr.mxu0 0.0
        %3583 = vmatpush1.msra.mxu0 %v3322
        %3584 = vmatprep.subr.mxu0 0.0
        %3585 = vmatpush1.msra.mxu0 %v3323
        %3586 = vmatprep.subr.mxu0 0.0
        %3587 = vmatpush1.msra.mxu0 %v3324
        %3588 = vmatprep.subr.mxu0 0.0
        %3589 = vmatpush1.msra.mxu0 %v3325
        %3590 = vmatprep.subr.mxu0 0.0
        %3591 = vmatpush1.msra.mxu0 %v3326
        %3592 = vmatprep.subr.mxu0 0.0
        %3593 = vmatpush1.msra.mxu0 %v3327
        %3594 = vmatprep.subr.mxu0 0.0
        %3595 = vmatpush1.msra.mxu0 %v3328
        %3596 = vmatprep.subr.mxu0 0.0
        %3597 = vmatpush1.msra.mxu0 %v3329
        %3598 = vmatprep.subr.mxu0 0.0
        %3599 = vmatpush1.msra.mxu0 %v3330
        %3600 = vmatprep.subr.mxu0 0.0
        %3601 = vmatpush1.msra.mxu0 %v3331
        %3602 = vmatprep.subr.mxu0 0.0
        %3603 = vmatpush1.msra.mxu0 %v3332
        %3604 = vmatprep.subr.mxu0 0.0
        %3605 = vmatpush1.msra.mxu0 %v3333
        %3606 = vmatprep.subr.mxu0 0.0
        %3607 = vmatpush1.msra.mxu0 %v3334
        %3608 = vmatprep.subr.mxu0 0.0
        %3609 = vmatpush1.msra.mxu0 %v3335
        %3610 = vmatprep.subr.mxu0 0.0
        %3611 = vmatpush1.msra.mxu0 %v3336
        %3612 = vmatprep.subr.mxu0 0.0
        %3613 = vmatpush1.msra.mxu0 %v3337
        %3614 = vmatprep.subr.mxu0 0.0
        %3615 = vmatpush1.msra.mxu0 %v3338
        %3616 = vmatprep.subr.mxu0 0.0
        %3617 = vmatpush1.msra.mxu0 %v3339
        %3618 = vmatprep.subr.mxu0 0.0
        %3619 = vmatpush1.msra.mxu0 %v3340
        %3620 = vmatprep.subr.mxu0 0.0
        %3621 = vmatpush1.msra.mxu0 %v3341
        %3622 = vmatprep.subr.mxu0 0.0
        %3623 = vmatpush1.msra.mxu0 %v3342
        %3624 = vmatprep.subr.mxu0 0.0
        %3625 = vmatpush1.msra.mxu0 %v3343
        %3626 = vmatprep.subr.mxu0 0.0
        %3627 = vmatpush1.msra.mxu0 %v3344
        %3628 = vmatprep.subr.mxu0 0.0
        %3629 = vmatpush1.msra.mxu0 %v3345
        %3630 = vmatprep.subr.mxu0 0.0
        %3631 = vmatpush1.msra.mxu0 %v3346
        %3632 = vmatprep.subr.mxu0 0.0
        %3633 = vmatpush1.msra.mxu0 %v3347
        %3634 = vmatprep.subr.mxu0 0.0
        %3635 = vmatpush1.msra.mxu0 %v3348
        %3636 = vmatprep.subr.mxu0 0.0
        %3637 = vmatpush1.msra.mxu0 %v3349
        %3638 = vmatprep.subr.mxu0 0.0
        %3639 = vmatpush1.msra.mxu0 %v3350
        %3640 = vmatprep.subr.mxu0 0.0
        %3641 = vmatpush1.msra.mxu0 %v3351
        %3642 = vmatprep.subr.mxu0 0.0
        %3643 = vmatpush1.msra.mxu0 %v3352
        %3644 = vmatprep.subr.mxu0 0.0
        %3645 = vmatpush1.msra.mxu0 %v3353
        %3646 = vmatprep.mubr.f32.mxu0 %v3307
        %3647 = vmatmul.mubr.f32.gmra.mrb[0].mxu0 %v3306
        %v3648 = vpop.f32.mrb[0].mxu0
        %v3649 = vadd.f32 %v3581, %v3648
        %v3650 = vpop.f32.mrb[0].mxu0
        %3651 = vdwg.mxu0
        %3652 = vmatprep.subr.mxu0 0.0
        %3653 = vmatpush1.msra.mxu0 %v3354
        %3654 = vmatprep.subr.mxu0 0.0
        %3655 = vmatpush1.msra.mxu0 %v3355
        %3656 = vmatprep.subr.mxu0 0.0
        %3657 = vmatpush1.msra.mxu0 %v3356
        %3658 = vmatprep.subr.mxu0 0.0
        %3659 = vmatpush1.msra.mxu0 %v3357
        %3660 = vmatprep.subr.mxu0 0.0
        %3661 = vmatpush1.msra.mxu0 %v3358
        %3662 = vmatprep.subr.mxu0 0.0
        %3663 = vmatpush1.msra.mxu0 %v3359
        %3664 = vmatprep.subr.mxu0 0.0
        %3665 = vmatpush1.msra.mxu0 %v3360
        %3666 = vmatprep.subr.mxu0 0.0
        %3667 = vmatpush1.msra.mxu0 %v3361
        %3668 = vmatprep.subr.mxu0 0.0
        %3669 = vmatpush1.msra.mxu0 %v3362
        %3670 = vmatprep.subr.mxu0 0.0
        %3671 = vmatpush1.msra.mxu0 %v3363
        %3672 = vmatprep.subr.mxu0 0.0
        %3673 = vmatpush1.msra.mxu0 %v3364
        %3674 = vmatprep.subr.mxu0 0.0
        %3675 = vmatpush1.msra.mxu0 %v3365
        %3676 = vmatprep.subr.mxu0 0.0
        %3677 = vmatpush1.msra.mxu0 %v3366
        %3678 = vmatprep.subr.mxu0 0.0
        %3679 = vmatpush1.msra.mxu0 %v3367
        %3680 = vmatprep.subr.mxu0 0.0
        %3681 = vmatpush1.msra.mxu0 %v3368
        %3682 = vmatprep.subr.mxu0 0.0
        %3683 = vmatpush1.msra.mxu0 %v3369
        %3684 = vmatprep.subr.mxu0 0.0
        %3685 = vmatpush1.msra.mxu0 %v3370
        %3686 = vmatprep.subr.mxu0 0.0
        %3687 = vmatpush1.msra.mxu0 %v3371
        %3688 = vmatprep.subr.mxu0 0.0
        %3689 = vmatpush1.msra.mxu0 %v3372
        %3690 = vmatprep.subr.mxu0 0.0
        %3691 = vmatpush1.msra.mxu0 %v3373
        %3692 = vmatprep.subr.mxu0 0.0
        %3693 = vmatpush1.msra.mxu0 %v3374
        %3694 = vmatprep.subr.mxu0 0.0
        %3695 = vmatpush1.msra.mxu0 %v3375
        %3696 = vmatprep.subr.mxu0 0.0
        %3697 = vmatpush1.msra.mxu0 %v3376
        %3698 = vmatprep.subr.mxu0 0.0
        %3699 = vmatpush1.msra.mxu0 %v3377
        %3700 = vmatprep.subr.mxu0 0.0
        %3701 = vmatpush1.msra.mxu0 %v3378
        %3702 = vmatprep.subr.mxu0 0.0
        %3703 = vmatpush1.msra.mxu0 %v3379
        %3704 = vmatprep.subr.mxu0 0.0
        %3705 = vmatpush1.msra.mxu0 %v3380
        %3706 = vmatprep.subr.mxu0 0.0
        %3707 = vmatpush1.msra.mxu0 %v3381
        %3708 = vmatprep.subr.mxu0 0.0
        %3709 = vmatpush1.msra.mxu0 %v3382
        %3710 = vmatprep.subr.mxu0 0.0
        %3711 = vmatpush1.msra.mxu0 %v3383
        %3712 = vmatprep.subr.mxu0 0.0
        %3713 = vmatpush1.msra.mxu0 %v3384
        %3714 = vmatprep.subr.mxu0 0.0
        %3715 = vmatpush1.msra.mxu0 %v3385
        %3716 = vmatprep.mubr.f32.mxu0 %v3309
        %3717 = vmatmul.mubr.f32.gmra.mrb[0].mxu0 %v3308
        %v3718 = vpop.f32.mrb[0].mxu0
        %v3719 = vadd.f32 %v3649, %v3718
        %v3720 = vpop.f32.mrb[0].mxu0
        %3721 = vdwg.mxu0
        %3722 = vmatprep.subr.mxu0 0.0
        %3723 = vmatpush1.msra.mxu0 %v3386
        %3724 = vmatprep.subr.mxu0 0.0
        %3725 = vmatpush1.msra.mxu0 %v3387
        %3726 = vmatprep.subr.mxu0 0.0
        %3727 = vmatpush1.msra.mxu0 %v3388
        %3728 = vmatprep.subr.mxu0 0.0
        %3729 = vmatpush1.msra.mxu0 %v3389
        %3730 = vmatprep.subr.mxu0 0.0
        %3731 = vmatpush1.msra.mxu0 %v3390
        %3732 = vmatprep.subr.mxu0 0.0
        %3733 = vmatpush1.msra.mxu0 %v3391
        %3734 = vmatprep.subr.mxu0 0.0
        %3735 = vmatpush1.msra.mxu0 %v3392
        %3736 = vmatprep.subr.mxu0 0.0
        %3737 = vmatpush1.msra.mxu0 %v3393
        %3738 = vmatprep.subr.mxu0 0.0
        %3739 = vmatpush1.msra.mxu0 %v3394
        %3740 = vmatprep.subr.mxu0 0.0
        %3741 = vmatpush1.msra.mxu0 %v3395
        %3742 = vmatprep.subr.mxu0 0.0
        %3743 = vmatpush1.msra.mxu0 %v3396
        %3744 = vmatprep.subr.mxu0 0.0
        %3745 = vmatpush1.msra.mxu0 %v3397
        %3746 = vmatprep.subr.mxu0 0.0
        %3747 = vmatpush1.msra.mxu0 %v3398
        %3748 = vmatprep.subr.mxu0 0.0
        %3749 = vmatpush1.msra.mxu0 %v3399
        %3750 = vmatprep.subr.mxu0 0.0
        %3751 = vmatpush1.msra.mxu0 %v3400
        %3752 = vmatprep.subr.mxu0 0.0
        %3753 = vmatpush1.msra.mxu0 %v3401
        %3754 = vmatprep.subr.mxu0 0.0
        %3755 = vmatpush1.msra.mxu0 %v3402
        %3756 = vmatprep.subr.mxu0 0.0
        %3757 = vmatpush1.msra.mxu0 %v3403
        %3758 = vmatprep.subr.mxu0 0.0
        %3759 = vmatpush1.msra.mxu0 %v3404
        %3760 = vmatprep.subr.mxu0 0.0
        %3761 = vmatpush1.msra.mxu0 %v3405
        %3762 = vmatprep.subr.mxu0 0.0
        %3763 = vmatpush1.msra.mxu0 %v3406
        %3764 = vmatprep.subr.mxu0 0.0
        %3765 = vmatpush1.msra.mxu0 %v3407
        %3766 = vmatprep.subr.mxu0 0.0
        %3767 = vmatpush1.msra.mxu0 %v3408
        %3768 = vmatprep.subr.mxu0 0.0
        %3769 = vmatpush1.msra.mxu0 %v3409
        %3770 = vmatprep.subr.mxu0 0.0
        %3771 = vmatpush1.msra.mxu0 %v3410
        %3772 = vmatprep.subr.mxu0 0.0
        %3773 = vmatpush1.msra.mxu0 %v3411
        %3774 = vmatprep.subr.mxu0 0.0
        %3775 = vmatpush1.msra.mxu0 %v3412
        %3776 = vmatprep.subr.mxu0 0.0
        %3777 = vmatpush1.msra.mxu0 %v3413
        %3778 = vmatprep.subr.mxu0 0.0
        %3779 = vmatpush1.msra.mxu0 %v3414
        %3780 = vmatprep.subr.mxu0 0.0
        %3781 = vmatpush1.msra.mxu0 %v3415
        %3782 = vmatprep.subr.mxu0 0.0
        %3783 = vmatpush1.msra.mxu0 %v3416
        %3784 = vmatprep.subr.mxu0 0.0
        %3785 = vmatpush1.msra.mxu0 %v3417
        %3786 = vmatprep.mubr.f32.mxu0 %v3311
        %3787 = vmatmul.mubr.f32.gmra.mrb[0].mxu0 %v3310
        %v3788 = vpop.f32.mrb[0].mxu0
        %v3789 = vadd.f32 %v3719, %v3788
        %v3790 = vpop.f32.mrb[0].mxu0
        %3791 = vdwg.mxu0
        %3792 = vmatprep.subr.mxu0 0.0
        %3793 = vmatpush1.msra.mxu0 %v3418
        %3794 = vmatprep.subr.mxu0 0.0
        %3795 = vmatpush1.msra.mxu0 %v3419
        %3796 = vmatprep.subr.mxu0 0.0
        %3797 = vmatpush1.msra.mxu0 %v3420
        %3798 = vmatprep.subr.mxu0 0.0
        %3799 = vmatpush1.msra.mxu0 %v3421
        %3800 = vmatprep.subr.mxu0 0.0
        %3801 = vmatpush1.msra.mxu0 %v3422
        %3802 = vmatprep.subr.mxu0 0.0
        %3803 = vmatpush1.msra.mxu0 %v3423
        %3804 = vmatprep.subr.mxu0 0.0
        %3805 = vmatpush1.msra.mxu0 %v3424
        %3806 = vmatprep.subr.mxu0 0.0
        %3807 = vmatpush1.msra.mxu0 %v3425
        %3808 = vmatprep.subr.mxu0 0.0
        %3809 = vmatpush1.msra.mxu0 %v3426
        %3810 = vmatprep.subr.mxu0 0.0
        %3811 = vmatpush1.msra.mxu0 %v3427
        %3812 = vmatprep.subr.mxu0 0.0
        %3813 = vmatpush1.msra.mxu0 %v3428
        %3814 = vmatprep.subr.mxu0 0.0
        %3815 = vmatpush1.msra.mxu0 %v3429
        %3816 = vmatprep.subr.mxu0 0.0
        %3817 = vmatpush1.msra.mxu0 %v3430
        %3818 = vmatprep.subr.mxu0 0.0
        %3819 = vmatpush1.msra.mxu0 %v3431
        %3820 = vmatprep.subr.mxu0 0.0
        %3821 = vmatpush1.msra.mxu0 %v3432
        %3822 = vmatprep.subr.mxu0 0.0
        %3823 = vmatpush1.msra.mxu0 %v3433
        %3824 = vmatprep.subr.mxu0 0.0
        %3825 = vmatpush1.msra.mxu0 %v3434
        %3826 = vmatprep.subr.mxu0 0.0
        %3827 = vmatpush1.msra.mxu0 %v3435
        %3828 = vmatprep.subr.mxu0 0.0
        %3829 = vmatpush1.msra.mxu0 %v3436
        %3830 = vmatprep.subr.mxu0 0.0
        %3831 = vmatpush1.msra.mxu0 %v3437
        %3832 = vmatprep.subr.mxu0 0.0
        %3833 = vmatpush1.msra.mxu0 %v3438
        %3834 = vmatprep.subr.mxu0 0.0
        %3835 = vmatpush1.msra.mxu0 %v3439
        %3836 = vmatprep.subr.mxu0 0.0
        %3837 = vmatpush1.msra.mxu0 %v3440
        %3838 = vmatprep.subr.mxu0 0.0
        %3839 = vmatpush1.msra.mxu0 %v3441
        %3840 = vmatprep.subr.mxu0 0.0
        %3841 = vmatpush1.msra.mxu0 %v3442
        %3842 = vmatprep.subr.mxu0 0.0
        %3843 = vmatpush1.msra.mxu0 %v3443
        %3844 = vmatprep.subr.mxu0 0.0
        %3845 = vmatpush1.msra.mxu0 %v3444
        %3846 = vmatprep.subr.mxu0 0.0
        %3847 = vmatpush1.msra.mxu0 %v3445
        %3848 = vmatprep.subr.mxu0 0.0
        %3849 = vmatpush1.msra.mxu0 %v3446
        %3850 = vmatprep.subr.mxu0 0.0
        %3851 = vmatpush1.msra.mxu0 %v3447
        %3852 = vmatprep.subr.mxu0 0.0
        %3853 = vmatpush1.msra.mxu0 %v3448
        %3854 = vmatprep.subr.mxu0 0.0
        %3855 = vmatpush1.msra.mxu0 %v3449
        %3856 = vmatprep.mubr.f32.mxu0 %v3313
        %3857 = vmatmul.mubr.f32.gmra.mrb[0].mxu0 %v3312
        %v3858 = vpop.f32.mrb[0].mxu0
        %v3859 = vadd.f32 %v3789, %v3858
        %v3860 = vpop.f32.mrb[0].mxu0
        %3861 = vdwg.mxu0
        %3862 = vmatprep.subr.mxu0 0.0
        %3863 = vmatpush1.msra.mxu0 %v3450
        %3864 = vmatprep.subr.mxu0 0.0
        %3865 = vmatpush1.msra.mxu0 %v3451
        %3866 = vmatprep.subr.mxu0 0.0
        %3867 = vmatpush1.msra.mxu0 %v3452
        %3868 = vmatprep.subr.mxu0 0.0
        %3869 = vmatpush1.msra.mxu0 %v3453
        %3870 = vmatprep.subr.mxu0 0.0
        %3871 = vmatpush1.msra.mxu0 %v3454
        %3872 = vmatprep.subr.mxu0 0.0
        %3873 = vmatpush1.msra.mxu0 %v3455
        %3874 = vmatprep.subr.mxu0 0.0
        %3875 = vmatpush1.msra.mxu0 %v3456
        %3876 = vmatprep.subr.mxu0 0.0
        %3877 = vmatpush1.msra.mxu0 %v3457
        %3878 = vmatprep.subr.mxu0 0.0
        %3879 = vmatpush1.msra.mxu0 %v3458
        %3880 = vmatprep.subr.mxu0 0.0
        %3881 = vmatpush1.msra.mxu0 %v3459
        %3882 = vmatprep.subr.mxu0 0.0
        %3883 = vmatpush1.msra.mxu0 %v3460
        %3884 = vmatprep.subr.mxu0 0.0
        %3885 = vmatpush1.msra.mxu0 %v3461
        %3886 = vmatprep.subr.mxu0 0.0
        %3887 = vmatpush1.msra.mxu0 %v3462
        %3888 = vmatprep.subr.mxu0 0.0
        %3889 = vmatpush1.msra.mxu0 %v3463
        %3890 = vmatprep.subr.mxu0 0.0
        %3891 = vmatpush1.msra.mxu0 %v3464
        %3892 = vmatprep.subr.mxu0 0.0
        %3893 = vmatpush1.msra.mxu0 %v3465
        %3894 = vmatprep.subr.mxu0 0.0
        %3895 = vmatpush1.msra.mxu0 %v3466
        %3896 = vmatprep.subr.mxu0 0.0
        %3897 = vmatpush1.msra.mxu0 %v3467
        %3898 = vmatprep.subr.mxu0 0.0
        %3899 = vmatpush1.msra.mxu0 %v3468
        %3900 = vmatprep.subr.mxu0 0.0
        %3901 = vmatpush1.msra.mxu0 %v3469
        %3902 = vmatprep.subr.mxu0 0.0
        %3903 = vmatpush1.msra.mxu0 %v3470
        %3904 = vmatprep.subr.mxu0 0.0
        %3905 = vmatpush1.msra.mxu0 %v3471
        %3906 = vmatprep.subr.mxu0 0.0
        %3907 = vmatpush1.msra.mxu0 %v3472
        %3908 = vmatprep.subr.mxu0 0.0
        %3909 = vmatpush1.msra.mxu0 %v3473
        %3910 = vmatprep.subr.mxu0 0.0
        %3911 = vmatpush1.msra.mxu0 %v3474
        %3912 = vmatprep.subr.mxu0 0.0
        %3913 = vmatpush1.msra.mxu0 %v3475
        %3914 = vmatprep.subr.mxu0 0.0
        %3915 = vmatpush1.msra.mxu0 %v3476
        %3916 = vmatprep.subr.mxu0 0.0
        %3917 = vmatpush1.msra.mxu0 %v3477
        %3918 = vmatprep.subr.mxu0 0.0
        %3919 = vmatpush1.msra.mxu0 %v3478
        %3920 = vmatprep.subr.mxu0 0.0
        %3921 = vmatpush1.msra.mxu0 %v3479
        %3922 = vmatprep.subr.mxu0 0.0
        %3923 = vmatpush1.msra.mxu0 %v3480
        %3924 = vmatprep.subr.mxu0 0.0
        %3925 = vmatpush1.msra.mxu0 %v3481
        %3926 = vmatprep.mubr.f32.mxu0 %v3315
        %3927 = vmatmul.mubr.f32.gmra.mrb[0].mxu0 %v3314
        %v3928 = vpop.f32.mrb[0].mxu0
        %v3929 = vadd.f32 %v3859, %v3928
        %v3930 = vpop.f32.mrb[0].mxu0
        %3931 = vdwg.mxu0
        %3932 = vmatprep.subr.mxu0 0.0
        %3933 = vmatpush1.msra.mxu0 %v3482
        %3934 = vmatprep.subr.mxu0 0.0
        %3935 = vmatpush1.msra.mxu0 %v3483
        %3936 = vmatprep.subr.mxu0 0.0
        %3937 = vmatpush1.msra.mxu0 %v3484
        %3938 = vmatprep.subr.mxu0 0.0
        %3939 = vmatpush1.msra.mxu0 %v3485
        %3940 = vmatprep.subr.mxu0 0.0
        %3941 = vmatpush1.msra.mxu0 %v3486
        %3942 = vmatprep.subr.mxu0 0.0
        %3943 = vmatpush1.msra.mxu0 %v3487
        %3944 = vmatprep.subr.mxu0 0.0
        %3945 = vmatpush1.msra.mxu0 %v3488
        %3946 = vmatprep.subr.mxu0 0.0
        %3947 = vmatpush1.msra.mxu0 %v3489
        %3948 = vmatprep.subr.mxu0 0.0
        %3949 = vmatpush1.msra.mxu0 %v3490
        %3950 = vmatprep.subr.mxu0 0.0
        %3951 = vmatpush1.msra.mxu0 %v3491
        %3952 = vmatprep.subr.mxu0 0.0
        %3953 = vmatpush1.msra.mxu0 %v3492
        %3954 = vmatprep.subr.mxu0 0.0
        %3955 = vmatpush1.msra.mxu0 %v3493
        %3956 = vmatprep.subr.mxu0 0.0
        %3957 = vmatpush1.msra.mxu0 %v3494
        %3958 = vmatprep.subr.mxu0 0.0
        %3959 = vmatpush1.msra.mxu0 %v3495
        %3960 = vmatprep.subr.mxu0 0.0
        %3961 = vmatpush1.msra.mxu0 %v3496
        %3962 = vmatprep.subr.mxu0 0.0
        %3963 = vmatpush1.msra.mxu0 %v3497
        %3964 = vmatprep.subr.mxu0 0.0
        %3965 = vmatpush1.msra.mxu0 %v3498
        %3966 = vmatprep.subr.mxu0 0.0
        %3967 = vmatpush1.msra.mxu0 %v3499
        %3968 = vmatprep.subr.mxu0 0.0
        %3969 = vmatpush1.msra.mxu0 %v3500
        %3970 = vmatprep.subr.mxu0 0.0
        %3971 = vmatpush1.msra.mxu0 %v3501
        %3972 = vmatprep.subr.mxu0 0.0
        %3973 = vmatpush1.msra.mxu0 %v3502
        %3974 = vmatprep.subr.mxu0 0.0
        %3975 = vmatpush1.msra.mxu0 %v3503
        %3976 = vmatprep.subr.mxu0 0.0
        %3977 = vmatpush1.msra.mxu0 %v3504
        %3978 = vmatprep.subr.mxu0 0.0
        %3979 = vmatpush1.msra.mxu0 %v3505
        %3980 = vmatprep.subr.mxu0 0.0
        %3981 = vmatpush1.msra.mxu0 %v3506
        %3982 = vmatprep.subr.mxu0 0.0
        %3983 = vmatpush1.msra.mxu0 %v3507
        %3984 = vmatprep.subr.mxu0 0.0
        %3985 = vmatpush1.msra.mxu0 %v3508
        %3986 = vmatprep.subr.mxu0 0.0
        %3987 = vmatpush1.msra.mxu0 %v3509
        %3988 = vmatprep.subr.mxu0 0.0
        %3989 = vmatpush1.msra.mxu0 %v3510
        %3990 = vmatprep.subr.mxu0 0.0
        %3991 = vmatpush1.msra.mxu0 %v3511
        %3992 = vmatprep.subr.mxu0 0.0
        %3993 = vmatpush1.msra.mxu0 %v3512
        %3994 = vmatprep.subr.mxu0 0.0
        %3995 = vmatpush1.msra.mxu0 %v3513
        %3996 = vmatprep.mubr.f32.mxu0 %v3317
        %3997 = vmatmul.mubr.f32.gmra.mrb[0].mxu0 %v3316
        %v3998 = vpop.f32.mrb[0].mxu0
        %v3999 = vadd.f32 %v3929, %v3998
        %v4000 = vpop.f32.mrb[0].mxu0
        %4001 = vdwg.mxu0
        %4002 = vmatprep.subr.mxu0 0.0
        %4003 = vmatpush1.msra.mxu0 %v3514
        %4004 = vmatprep.subr.mxu0 0.0
        %4005 = vmatpush1.msra.mxu0 %v3515
        %4006 = vmatprep.subr.mxu0 0.0
        %4007 = vmatpush1.msra.mxu0 %v3516
        %4008 = vmatprep.subr.mxu0 0.0
        %4009 = vmatpush1.msra.mxu0 %v3517
        %4010 = vmatprep.subr.mxu0 0.0
        %4011 = vmatpush1.msra.mxu0 %v3518
        %4012 = vmatprep.subr.mxu0 0.0
        %4013 = vmatpush1.msra.mxu0 %v3519
        %4014 = vmatprep.subr.mxu0 0.0
        %4015 = vmatpush1.msra.mxu0 %v3520
        %4016 = vmatprep.subr.mxu0 0.0
        %4017 = vmatpush1.msra.mxu0 %v3521
        %4018 = vmatprep.subr.mxu0 0.0
        %4019 = vmatpush1.msra.mxu0 %v3522
        %4020 = vmatprep.subr.mxu0 0.0
        %4021 = vmatpush1.msra.mxu0 %v3523
        %4022 = vmatprep.subr.mxu0 0.0
        %4023 = vmatpush1.msra.mxu0 %v3524
        %4024 = vmatprep.subr.mxu0 0.0
        %4025 = vmatpush1.msra.mxu0 %v3525
        %4026 = vmatprep.subr.mxu0 0.0
        %4027 = vmatpush1.msra.mxu0 %v3526
        %4028 = vmatprep.subr.mxu0 0.0
        %4029 = vmatpush1.msra.mxu0 %v3527
        %4030 = vmatprep.subr.mxu0 0.0
        %4031 = vmatpush1.msra.mxu0 %v3528
        %4032 = vmatprep.subr.mxu0 0.0
        %4033 = vmatpush1.msra.mxu0 %v3529
        %4034 = vmatprep.subr.mxu0 0.0
        %4035 = vmatpush1.msra.mxu0 %v3530
        %4036 = vmatprep.subr.mxu0 0.0
        %4037 = vmatpush1.msra.mxu0 %v3531
        %4038 = vmatprep.subr.mxu0 0.0
        %4039 = vmatpush1.msra.mxu0 %v3532
        %4040 = vmatprep.subr.mxu0 0.0
        %4041 = vmatpush1.msra.mxu0 %v3533
        %4042 = vmatprep.subr.mxu0 0.0
        %4043 = vmatpush1.msra.mxu0 %v3534
        %4044 = vmatprep.subr.mxu0 0.0
        %4045 = vmatpush1.msra.mxu0 %v3535
        %4046 = vmatprep.subr.mxu0 0.0
        %4047 = vmatpush1.msra.mxu0 %v3536
        %4048 = vmatprep.subr.mxu0 0.0
        %4049 = vmatpush1.msra.mxu0 %v3537
        %4050 = vmatprep.subr.mxu0 0.0
        %4051 = vmatpush1.msra.mxu0 %v3538
        %4052 = vmatprep.subr.mxu0 0.0
        %4053 = vmatpush1.msra.mxu0 %v3539
        %4054 = vmatprep.subr.mxu0 0.0
        %4055 = vmatpush1.msra.mxu0 %v3540
        %4056 = vmatprep.subr.mxu0 0.0
        %4057 = vmatpush1.msra.mxu0 %v3541
        %4058 = vmatprep.subr.mxu0 0.0
        %4059 = vmatpush1.msra.mxu0 %v3542
        %4060 = vmatprep.subr.mxu0 0.0
        %4061 = vmatpush1.msra.mxu0 %v3543
        %4062 = vmatprep.subr.mxu0 0.0
        %4063 = vmatpush1.msra.mxu0 %v3544
        %4064 = vmatprep.subr.mxu0 0.0
        %4065 = vmatpush1.msra.mxu0 %v3545
        %4066 = vmatprep.mubr.f32.mxu0 %v3319
        %4067 = vmatmul.mubr.f32.gmra.mrb[0].mxu0 %v3318
        %v4068 = vpop.f32.mrb[0].mxu0
        %v4069 = vadd.f32 %v3999, %v4068
        %v4070 = vpop.f32.mrb[0].mxu0
        %4071 = vdwg.mxu0
        %4072 = vmatprep.subr.mxu0 0.0
        %4073 = vmatpush1.msra.mxu0 %v3546
        %4074 = vmatprep.subr.mxu0 0.0
        %4075 = vmatpush1.msra.mxu0 %v3547
        %4076 = vmatprep.subr.mxu0 0.0
        %4077 = vmatpush1.msra.mxu0 %v3548
        %4078 = vmatprep.subr.mxu0 0.0
        %4079 = vmatpush1.msra.mxu0 %v3549
        %4080 = vmatprep.subr.mxu0 0.0
        %4081 = vmatpush1.msra.mxu0 %v3550
        %4082 = vmatprep.subr.mxu0 0.0
        %4083 = vmatpush1.msra.mxu0 %v3551
        %4084 = vmatprep.subr.mxu0 0.0
        %4085 = vmatpush1.msra.mxu0 %v3552
        %4086 = vmatprep.subr.mxu0 0.0
        %4087 = vmatpush1.msra.mxu0 %v3553
        %4088 = vmatprep.subr.mxu0 0.0
        %4089 = vmatpush1.msra.mxu0 %v3554
        %4090 = vmatprep.subr.mxu0 0.0
        %4091 = vmatpush1.msra.mxu0 %v3555
        %4092 = vmatprep.subr.mxu0 0.0
        %4093 = vmatpush1.msra.mxu0 %v3556
        %4094 = vmatprep.subr.mxu0 0.0
        %4095 = vmatpush1.msra.mxu0 %v3557
        %4096 = vmatprep.subr.mxu0 0.0
        %4097 = vmatpush1.msra.mxu0 %v3558
        %4098 = vmatprep.subr.mxu0 0.0
        %4099 = vmatpush1.msra.mxu0 %v3559
        %4100 = vmatprep.subr.mxu0 0.0
        %4101 = vmatpush1.msra.mxu0 %v3560
        %4102 = vmatprep.subr.mxu0 0.0
        %4103 = vmatpush1.msra.mxu0 %v3561
        %4104 = vmatprep.subr.mxu0 0.0
        %4105 = vmatpush1.msra.mxu0 %v3562
        %4106 = vmatprep.subr.mxu0 0.0
        %4107 = vmatpush1.msra.mxu0 %v3563
        %4108 = vmatprep.subr.mxu0 0.0
        %4109 = vmatpush1.msra.mxu0 %v3564
        %4110 = vmatprep.subr.mxu0 0.0
        %4111 = vmatpush1.msra.mxu0 %v3565
        %4112 = vmatprep.subr.mxu0 0.0
        %4113 = vmatpush1.msra.mxu0 %v3566
        %4114 = vmatprep.subr.mxu0 0.0
        %4115 = vmatpush1.msra.mxu0 %v3567
        %4116 = vmatprep.subr.mxu0 0.0
        %4117 = vmatpush1.msra.mxu0 %v3568
        %4118 = vmatprep.subr.mxu0 0.0
        %4119 = vmatpush1.msra.mxu0 %v3569
        %4120 = vmatprep.subr.mxu0 0.0
        %4121 = vmatpush1.msra.mxu0 %v3570
        %4122 = vmatprep.subr.mxu0 0.0
        %4123 = vmatpush1.msra.mxu0 %v3571
        %4124 = vmatprep.subr.mxu0 0.0
        %4125 = vmatpush1.msra.mxu0 %v3572
        %4126 = vmatprep.subr.mxu0 0.0
        %4127 = vmatpush1.msra.mxu0 %v3573
        %4128 = vmatprep.subr.mxu0 0.0
        %4129 = vmatpush1.msra.mxu0 %v3574
        %4130 = vmatprep.subr.mxu0 0.0
        %4131 = vmatpush1.msra.mxu0 %v3575
        %4132 = vmatprep.subr.mxu0 0.0
        %4133 = vmatpush1.msra.mxu0 %v3576
        %4134 = vmatprep.subr.mxu0 0.0
        %4135 = vmatpush1.msra.mxu0 %v3577
        %4136 = vmatprep.mubr.f32.mxu0 %v3321
        %4137 = vmatmul.mubr.f32.gmra.mrb[0].mxu0 %v3320
        %v4138 = vpop.f32.mrb[0].mxu0
        %v4139 = vadd.f32 %v4069, %v4138
        %v4140 = vpop.f32.mrb[0].mxu0
        %4141 = vdwg.mxu0
        %v4142 = vadd.f32 %v2397, %v4139
        %4143 = vadd.xlane.f32.xlu0 %v4142
        %v4144 = vpop.xlane.xlu0 %4143
        %v4145 = vmul.f32 %v4144, 0.02
        %v4146 = vsub.f32 %v4142, %v4145
        %v4147 = vmul.f32 %v4146, %v437
        %v4148 = vmul.f32 %v4147, %v4147
        %4149 = vadd.xlane.f32.xlu0 %v4148
        %v4150 = vpop.xlane.xlu0 %4149
        %v4151 = vmul.f32 %v4150, 0.02
        %v4152 = vadd.f32 %v4151, 1e-05
        %v4153 = vrsqrt.pop %v4152
        %v4154 = vmul.f32 %v4147, %v4153
        %v4155 = vlaneseq
        %v4156 = vshrl.u32 %v4155, 7
        %v4157 = vsub.s32 4, %v4156
        %v4158 = vrot.slane %v432, %v4157
        %v4159 = vmul.f32 %v4154, %v4158
        %v4160 = vlaneseq
        %v4161 = vshrl.u32 %v4160, 7
        %v4162 = vsub.s32 5, %v4161
        %v4163 = vrot.slane %v432, %v4162
        %v4164 = vadd.f32 %v4159, %v4163
        %4165 = vst [vmem:[%s430] sm:$0xff] %v4164
        %s4166 = sand.u32 %s231, 1
        %s4167 = scalar_lea.sflag [#allocation4], %s4166
        %s4168 = sand.u32 %s231, 1
        %s4169 = smul.addr %s4168, 8
        %s4170 = scalar_lea.vmem [#allocation14], %s4169
        // Predicated region
        $region85: #{tpu_custom_call.1} parent=55 // pred_check
          %p4171 = pneg %p241
        $region86: #{tpu_custom_call.1} parent=55 // pred_check_branch
          %4173 = sbr.rel (%p4171) target = $region88
        $region87: #{tpu_custom_call.1} parent=55 // pred_region
          %s4175 = ssub.s32 128, 128
          %4176 = vsyncadd %s4167, %s4175
          %s4177 = smul.addr %s29, 128
          %s4178 = scalar_lea.hbm %s9, %s4177
          %s4180 = sshll.u32 %s4170, 4
          %s4181 = int_to_ptr.vmem [resolvable:$true] %s4180
          %4183 = dma.vmem_to_hbm [thread:$0]  %s4181, 128, %s4178, %s4167
        $region88: #{tpu_custom_call.1} parent=55 // pred_fallthru
          _
      $region56: #{tpu_custom_call.1} parent=5 // pred_fallthru
        _
      %p4184 = scmp.le.s32.totalorder 2, %s24
      // Predicated region
      $region89: #{tpu_custom_call.1} parent=5 // pred_check
        %p4185 = pneg %p4184
      $region90: #{tpu_custom_call.1} parent=5 // pred_check_branch
        %4187 = sbr.rel (%p4185) target = $region92
      $region91: #{tpu_custom_call.1} parent=5 // pred_region
        %s4188 = ssub.s32 %s24, 2
        // Predicated region
        $region93: #{tpu_custom_call.1} parent=91 // pred_check
          %p4189 = pneg %p247
        $region94: #{tpu_custom_call.1} parent=91 // pred_check_branch
          %4191 = sbr.rel (%p4189) target = $region96
        $region95: #{tpu_custom_call.1} parent=91 // pred_region
          %s4192 = sand.u32 %s232, 1
          %s4193 = scalar_lea.sflag [#allocation4], %s4192
          %s4194 = sand.u32 %s232, 1
          %s4195 = smul.addr %s4194, 8
          %s4196 = scalar_lea.vmem [#allocation14], %s4195
          %4197 = dma.done %s4193, 128
        $region96: #{tpu_custom_call.1} parent=91 // pred_fallthru
          _
      $region92: #{tpu_custom_call.1} parent=5 // pred_fallthru
        _
    $region6: #{tpu_custom_call.1} parent=1 // loop_footer
      %s28 = sadd.s32 1, %s24
    $region7: #{tpu_custom_call.1} parent=1 // loop_footer_branch
      %23 = sbr.rel target = $region3
    $region8: #{tpu_custom_call.1} parent=1 // loop_exit
      _
    %4198 = vsyncpa [#allocation3], 1
    %s4199 = scalar_lea.sflag [#allocation3], 1
    %4200 = vsyncpa %s4199, 1
    %4201 = vsyncpa [#allocation6], 1
    %4202 = vsyncpa [#allocation9], 1
    %4203 = vsyncpa [#allocation12], 1
    %4204 = vsyncpa [#allocation4], 1
    %s4205 = scalar_lea.sflag [#allocation4], 1
    %4206 = vsyncpa %s4205, 1

</llo_original>
